<compile_context>
chip_gen: v7x
topology: tpu7x:2x2x1
jax: 0.10.0
libtpu: 0.0.40
codegen_flags: <defaults>
</compile_context>

<pallas_src>
import functools

import jax
import jax.numpy as jnp
from jax import lax
from jax.experimental import pallas as pl
from jax.experimental.pallas import tpu as pltpu


def _round_up(x, m):
    return ((x + m - 1) // m) * m


# ------------------------------ fused kernel --------------------------------

def _fused_invres_kernel(*refs, stride, H, W, Hout, Wout, expand, use_shortcut,
                         matmul_dtype):
    if expand:
        (x_ref, we_ref, se_ref, be_ref,
         wd_ref, sd_ref, bd_ref, wp_ref, sp_ref, bp_ref, o_ref) = refs
    else:
        (x_ref, wd_ref, sd_ref, bd_ref, wp_ref, sp_ref, bp_ref, o_ref) = refs

    xp = x_ref[0]                       # (Hp, Wpp, Cin), spatially zero-padded
    Hp, Wpp, Cin = xp.shape

    # ---- 1x1 expand conv + BN + ReLU6 (MXU). Hidden stays in VMEM. ----------
    if expand:
        x2 = xp.reshape(Hp * Wpp, Cin)                        # leading-dim merge
        h = jnp.dot(x2.astype(matmul_dtype), we_ref[...].astype(matmul_dtype),
                    preferred_element_type=jnp.float32)       # (Hp*Wpp, Ch)
        h = jnp.clip(h * se_ref[...] + be_ref[...], 0.0, 6.0)
        Ch = h.shape[-1]
        h3 = h.reshape(Hp, Wpp, Ch)
        # The padding ring went through BN (bias) -> re-zero it so the
        # depthwise conv sees proper zero padding (matches PyTorch padding=1).
        row = lax.broadcasted_iota(jnp.int32, (Hp, Wpp, Ch), 0)
        col = lax.broadcasted_iota(jnp.int32, (Hp, Wpp, Ch), 1)
        interior = (row >= 1) & (row <= H) & (col >= 1) & (col <= W)
        h3 = jnp.where(interior, h3, 0.0)
    else:
        Ch = Cin
        h3 = xp.astype(jnp.float32)     # padding ring is already zero

    # ---- 3x3 depthwise conv (9 unrolled taps, VPU) + BN + ReLU6 -------------
    wd = wd_ref[...].astype(jnp.float32)               # (3, 3, Ch), loaded once
    acc = jnp.zeros((Hout, Wout, Ch), jnp.float32)
    for kh in range(3):
        for kw in range(3):
            patch = lax.slice(
                h3, (kh, kw, 0),
                (kh + (Hout - 1) * stride + 1,
                 kw + (Wout - 1) * stride + 1, Ch),
                (stride, stride, 1))
            acc = acc + patch * wd[kh, kw, :]
    hd = acc.reshape(Hout * Wout, Ch)
    hd = jnp.clip(hd * sd_ref[...] + bd_ref[...], 0.0, 6.0)

    # ---- 1x1 projection conv + BN (+ fused residual) (MXU) ------------------
    y = jnp.dot(hd.astype(matmul_dtype), wp_ref[...].astype(matmul_dtype),
                preferred_element_type=jnp.float32)    # (Hout*Wout, Cout)
    y = y * sp_ref[...] + bp_ref[...]
    if use_shortcut:
        x_in = lax.slice(xp, (1, 1, 0), (H + 1, W + 1, Cin))   # unpadded input
        y = y + x_in.reshape(H * W, Cin).astype(jnp.float32)
    o_ref[0] = y.reshape(Hout, Wout, y.shape[-1]).astype(o_ref.dtype)


# -------------------------------- wrapper ------------------------------------

def invert_residual_forward(x_nchw, params, *, inchannel, outchannel, stride,
                            expand_ratio, matmul_dtype=jnp.float32,
                            vmem_limit_bytes=32 * 1024 * 1024):
    B, C, H, W = x_nchw.shape
    assert C == inchannel
    hidden = inchannel * expand_ratio
    use_shortcut = (stride == 1 and inchannel == outchannel)
    Hout = (H - 1) // stride + 1
    Wout = (W - 1) // stride + 1

    Hp = H + 2
    Wpp = _round_up(W + 2, 8)           # keep the sublane (W) dim 8-aligned
    pad_r = Wpp - W - 1

    # One XLA copy of the (small) block input: NCHW -> NHWC fused with the
    # 1-pixel spatial zero pad.  The (big) hidden tensor is never padded or
    # written to HBM.
    # TODO(synk): in an end-to-end NHWC network these boundary transposes go away.
    x = jnp.transpose(x_nchw, (0, 2, 3, 1)).astype(jnp.float32)
    xpad = jnp.pad(x, ((0, 0), (1, 1), (1, pad_r), (0, 0)))

    def const_spec(shape):
        return pl.BlockSpec(shape, lambda b: (0,) * len(shape))

    in_specs = [pl.BlockSpec((1, Hp, Wpp, inchannel), lambda b: (b, 0, 0, 0))]
    args = [xpad]
    if expand_ratio != 1:
        in_specs += [const_spec((inchannel, hidden)),
                     const_spec((1, hidden)), const_spec((1, hidden))]
        args += [params["w_expand"],
                 params["scale_expand"].reshape(1, hidden),
                 params["bias_expand"].reshape(1, hidden)]
    in_specs += [const_spec((3, 3, hidden)),
                 const_spec((1, hidden)), const_spec((1, hidden)),
                 const_spec((hidden, outchannel)),
                 const_spec((1, outchannel)), const_spec((1, outchannel))]
    args += [params["w_dw"],
             params["scale_dw"].reshape(1, hidden),
             params["bias_dw"].reshape(1, hidden),
             params["w_proj"],
             params["scale_proj"].reshape(1, outchannel),
             params["bias_proj"].reshape(1, outchannel)]

    kernel = functools.partial(
        _fused_invres_kernel, stride=stride, H=H, W=W, Hout=Hout, Wout=Wout,
        expand=(expand_ratio != 1), use_shortcut=use_shortcut,
        matmul_dtype=matmul_dtype)

    out = pl.pallas_call(
        kernel,
        out_shape=jax.ShapeDtypeStruct((B, Hout, Wout, outchannel), x.dtype),
        grid=(B,),
        in_specs=in_specs,
        out_specs=pl.BlockSpec((1, Hout, Wout, outchannel),
                               lambda b: (b, 0, 0, 0)),
        compiler_params=pltpu.CompilerParams(
            dimension_semantics=("parallel",),       # shard batches across TCs
            vmem_limit_bytes=vmem_limit_bytes),
    )(*args)

    return jnp.transpose(out, (0, 3, 1, 2))          # NHWC -> NCHW


# --------------------------- parameter construction --------------------------

def _bn_fold(key, c, eps=1e-5):
    k1, k2, k3, k4 = jax.random.split(key, 4)
    gamma = 1.0 + 0.1 * jax.random.normal(k1, (c,))
    beta = 0.1 * jax.random.normal(k2, (c,))
    mean = 0.1 * jax.random.normal(k3, (c,))
    var = jnp.abs(1.0 + 0.1 * jax.random.normal(k4, (c,)))
    scale = gamma / jnp.sqrt(var + eps)
    bias = beta - mean * scale
    return scale.astype(jnp.float32), bias.astype(jnp.float32)


def init_params(key, inchannel, outchannel, expand_ratio):
    hidden = inchannel * expand_ratio
    keys = jax.random.split(key, 6)
    p = {}
    if expand_ratio != 1:
        # PyTorch Conv2d weight (hidden, in, 1, 1) -> matmul matrix (in, hidden)
        p["w_expand"] = (0.1 * jax.random.normal(keys[0], (inchannel, hidden))
                         ).astype(jnp.float32)
        p["scale_expand"], p["bias_expand"] = _bn_fold(keys[1], hidden)
    # depthwise weight (hidden, 1, 3, 3) -> (3, 3, hidden)
    p["w_dw"] = (0.1 * jax.random.normal(keys[2], (3, 3, hidden))
                 ).astype(jnp.float32)
    p["scale_dw"], p["bias_dw"] = _bn_fold(keys[3], hidden)
    # projection weight (out, hidden, 1, 1) -> (hidden, out)
    p["w_proj"] = (0.1 * jax.random.normal(keys[4], (hidden, outchannel))
                   ).astype(jnp.float32)
    p["scale_proj"], p["bias_proj"] = _bn_fold(keys[5], outchannel)
    return p


# -------------------------------- reference ----------------------------------

def _ref_forward(x_nchw, p, *, inchannel, outchannel, stride, expand_ratio):
    use_shortcut = (stride == 1 and inchannel == outchannel)
    x = jnp.transpose(x_nchw, (0, 2, 3, 1)).astype(jnp.float32)
    h = x
    hidden = inchannel * expand_ratio
    if expand_ratio != 1:
        h = jnp.einsum("bhwc,cd->bhwd", h, p["w_expand"])
        h = jnp.clip(h * p["scale_expand"] + p["bias_expand"], 0.0, 6.0)
    w_dw = p["w_dw"].reshape(3, 3, 1, hidden)
    h = lax.conv_general_dilated(
        h, w_dw, window_strides=(stride, stride), padding=((1, 1), (1, 1)),
        dimension_numbers=("NHWC", "HWIO", "NHWC"), feature_group_count=hidden)
    h = jnp.clip(h * p["scale_dw"] + p["bias_dw"], 0.0, 6.0)
    h = jnp.einsum("bhwc,cd->bhwd", h, p["w_proj"])
    h = h * p["scale_proj"] + p["bias_proj"]
    if use_shortcut:
        h = h + x
    return jnp.transpose(h, (0, 3, 1, 2))


# ---------------------------------- main --------------------------------------

if __name__ == "__main__":
    key = jax.random.PRNGKey(0)
    configs = [
        # (B, Cin, H, W, Cout, stride, expand_ratio)
        dict(B=2, Cin=4, H=16, W=16, Cout=4, stride=1, expand_ratio=2),  # shortcut
        dict(B=2, Cin=4, H=16, W=16, Cout=8, stride=2, expand_ratio=1),  # no expand
    ]
    for idx, cfg in enumerate(configs):
        key, kx, kp = jax.random.split(key, 3)
        x = jax.random.normal(
            kx, (cfg["B"], cfg["Cin"], cfg["H"], cfg["W"]), dtype=jnp.float32)
        params = init_params(kp, cfg["Cin"], cfg["Cout"], cfg["expand_ratio"])

        out = invert_residual_forward(
            x, params, inchannel=cfg["Cin"], outchannel=cfg["Cout"],
            stride=cfg["stride"], expand_ratio=cfg["expand_ratio"])
        out = jax.block_until_ready(out)

        ref = _ref_forward(
            x, params, inchannel=cfg["Cin"], outchannel=cfg["Cout"],
            stride=cfg["stride"], expand_ratio=cfg["expand_ratio"])
        Hout = (cfg["H"] - 1) // cfg["stride"] + 1
        Wout = (cfg["W"] - 1) // cfg["stride"] + 1
        assert out.shape == (cfg["B"], cfg["Cout"], Hout, Wout)
        assert jnp.allclose(out, ref, atol=1e-4, rtol=1e-4), (
            f"mismatch vs reference in config {idx}")

    print("KERNEL_OK")
</pallas_src>

<mosaic_0001>
module attributes {stable_mosaic.version = 11 : i64} {
  func.func @_fused_invres_kernel(%arg0: i32, %arg1: memref<1x18x24x4xf32, #tpu.memory_space<vmem>>, %arg2: memref<4x8xf32, #tpu.memory_space<vmem>>, %arg3: memref<1x8xf32, #tpu.memory_space<vmem>>, %arg4: memref<1x8xf32, #tpu.memory_space<vmem>>, %arg5: memref<3x3x8xf32, #tpu.memory_space<vmem>>, %arg6: memref<1x8xf32, #tpu.memory_space<vmem>>, %arg7: memref<1x8xf32, #tpu.memory_space<vmem>>, %arg8: memref<8x4xf32, #tpu.memory_space<vmem>>, %arg9: memref<1x4xf32, #tpu.memory_space<vmem>>, %arg10: memref<1x4xf32, #tpu.memory_space<vmem>>, %arg11: memref<1x16x16x4xf32, #tpu.memory_space<vmem>>) attributes {dimension_semantics = [#tpu.dimension_semantics<parallel>], iteration_bounds = array<i64: 2>, scalar_prefetch = 0 : i64, scratch_operands = 0 : i64, tpu.core_type = #tpu.core_type<tc>, window_params = [{transform_indices = @transform_0, window_bounds = array<i64: 1, 18, 24, 4>}, {pipeline_mode = #tpu.pipeline_mode<synchronous>, transform_indices = @transform_1, window_bounds = array<i64: 4, 8>}, {pipeline_mode = #tpu.pipeline_mode<synchronous>, transform_indices = @transform_2, window_bounds = array<i64: 1, 8>}, {pipeline_mode = #tpu.pipeline_mode<synchronous>, transform_indices = @transform_3, window_bounds = array<i64: 1, 8>}, {pipeline_mode = #tpu.pipeline_mode<synchronous>, transform_indices = @transform_4, window_bounds = array<i64: 3, 3, 8>}, {pipeline_mode = #tpu.pipeline_mode<synchronous>, transform_indices = @transform_5, window_bounds = array<i64: 1, 8>}, {pipeline_mode = #tpu.pipeline_mode<synchronous>, transform_indices = @transform_6, window_bounds = array<i64: 1, 8>}, {pipeline_mode = #tpu.pipeline_mode<synchronous>, transform_indices = @transform_7, window_bounds = array<i64: 8, 4>}, {pipeline_mode = #tpu.pipeline_mode<synchronous>, transform_indices = @transform_8, window_bounds = array<i64: 1, 4>}, {pipeline_mode = #tpu.pipeline_mode<synchronous>, transform_indices = @transform_9, window_bounds = array<i64: 1, 4>}, {transform_indices = @transform_10, window_bounds = array<i64: 1, 16, 16, 4>}]} {
    %c0 = arith.constant 0 : index
    %c0_0 = arith.constant 0 : index
    %c0_1 = arith.constant 0 : index
    %c0_2 = arith.constant 0 : index
    %0 = vector.load %arg1[%c0, %c0_0, %c0_1, %c0_2] : memref<1x18x24x4xf32, #tpu.memory_space<vmem>>, vector<1x18x24x4xf32>
    %1 = vector.shape_cast %0 : vector<1x18x24x4xf32> to vector<18x24x4xf32>
    %2 = vector.shape_cast %1 : vector<18x24x4xf32> to vector<432x4xf32>
    %c0_3 = arith.constant 0 : index
    %c0_4 = arith.constant 0 : index
    %3 = vector.load %arg2[%c0_3, %c0_4] : memref<4x8xf32, #tpu.memory_space<vmem>>, vector<4x8xf32>
    %cst = arith.constant dense<0.000000e+00> : vector<432x8xf32>
    %4 = tpu.matmul %2, %3, %cst {dimension_numbers = #tpu.dot_dimension_numbers<[1], [0], [0], [1], [0, 0, 1, 1], [], []>} : vector<432x4xf32>, vector<4x8xf32>, vector<432x8xf32> -> vector<432x8xf32>
    %c0_5 = arith.constant 0 : index
    %c0_6 = arith.constant 0 : index
    %5 = vector.load %arg3[%c0_5, %c0_6] : memref<1x8xf32, #tpu.memory_space<vmem>>, vector<1x8xf32>
    %6 = vector.broadcast %5 : vector<1x8xf32> to vector<432x8xf32>
    %7 = arith.mulf %4, %6 : vector<432x8xf32>
    %c0_7 = arith.constant 0 : index
    %c0_8 = arith.constant 0 : index
    %8 = vector.load %arg4[%c0_7, %c0_8] : memref<1x8xf32, #tpu.memory_space<vmem>>, vector<1x8xf32>
    %9 = vector.broadcast %8 : vector<1x8xf32> to vector<432x8xf32>
    %10 = arith.addf %7, %9 : vector<432x8xf32>
    %cst_9 = arith.constant 0.000000e+00 : f32
    %cst_10 = arith.constant 6.000000e+00 : f32
    %11 = vector.broadcast %cst_9 : f32 to vector<432x8xf32>
    %12 = arith.maximumf %11, %10 : vector<432x8xf32>
    %13 = vector.broadcast %cst_10 : f32 to vector<432x8xf32>
    %14 = arith.minimumf %13, %12 : vector<432x8xf32>
    %15 = vector.shape_cast %14 : vector<432x8xf32> to vector<18x24x8xf32>
    %16 = tpu.iota {dimensions = array<i32: 0>} : vector<18x24x8xi32>
    %17 = tpu.iota {dimensions = array<i32: 1>} : vector<18x24x8xi32>
    %c1_i32 = arith.constant 1 : i32
    %18 = vector.broadcast %c1_i32 : i32 to vector<18x24x8xi32>
    %19 = arith.cmpi sge, %16, %18 : vector<18x24x8xi32>
    %c16_i32 = arith.constant 16 : i32
    %20 = vector.broadcast %c16_i32 : i32 to vector<18x24x8xi32>
    %21 = arith.cmpi sle, %16, %20 : vector<18x24x8xi32>
    %22 = arith.andi %19, %21 : vector<18x24x8xi1>
    %c1_i32_11 = arith.constant 1 : i32
    %23 = vector.broadcast %c1_i32_11 : i32 to vector<18x24x8xi32>
    %24 = arith.cmpi sge, %17, %23 : vector<18x24x8xi32>
    %25 = arith.andi %22, %24 : vector<18x24x8xi1>
    %c16_i32_12 = arith.constant 16 : i32
    %26 = vector.broadcast %c16_i32_12 : i32 to vector<18x24x8xi32>
    %27 = arith.cmpi sle, %17, %26 : vector<18x24x8xi32>
    %28 = arith.andi %25, %27 : vector<18x24x8xi1>
    %cst_13 = arith.constant 0.000000e+00 : f32
    %29 = vector.broadcast %cst_13 : f32 to vector<18x24x8xf32>
    %30 = arith.select %28, %15, %29 : vector<18x24x8xi1>, vector<18x24x8xf32>
    %c0_14 = arith.constant 0 : index
    %c0_15 = arith.constant 0 : index
    %c0_16 = arith.constant 0 : index
    %31 = vector.load %arg5[%c0_14, %c0_15, %c0_16] : memref<3x3x8xf32, #tpu.memory_space<vmem>>, vector<3x3x8xf32>
    %cst_17 = arith.constant 0.000000e+00 : f32
    %32 = vector.broadcast %cst_17 : f32 to vector<16x16x8xf32>
    %33 = vector.extract_strided_slice %30 {offsets = [0, 0, 0], sizes = [16, 16, 8], strides = [1, 1, 1]} : vector<18x24x8xf32> to vector<16x16x8xf32>
    %34 = vector.extract_strided_slice %31 {offsets = [0, 0, 0], sizes = [1, 1, 8], strides = [1, 1, 1]} : vector<3x3x8xf32> to vector<1x1x8xf32>
    %35 = vector.shape_cast %34 : vector<1x1x8xf32> to vector<8xf32>
    %36 = vector.shape_cast %35 : vector<8xf32> to vector<1x1x8xf32>
    %37 = vector.broadcast %36 : vector<1x1x8xf32> to vector<16x16x8xf32>
    %38 = arith.mulf %33, %37 : vector<16x16x8xf32>
    %39 = arith.addf %32, %38 : vector<16x16x8xf32>
    %40 = vector.extract_strided_slice %30 {offsets = [0, 1, 0], sizes = [16, 16, 8], strides = [1, 1, 1]} : vector<18x24x8xf32> to vector<16x16x8xf32>
    %41 = vector.extract_strided_slice %31 {offsets = [0, 1, 0], sizes = [1, 1, 8], strides = [1, 1, 1]} : vector<3x3x8xf32> to vector<1x1x8xf32>
    %42 = vector.shape_cast %41 : vector<1x1x8xf32> to vector<8xf32>
    %43 = vector.shape_cast %42 : vector<8xf32> to vector<1x1x8xf32>
    %44 = vector.broadcast %43 : vector<1x1x8xf32> to vector<16x16x8xf32>
    %45 = arith.mulf %40, %44 : vector<16x16x8xf32>
    %46 = arith.addf %39, %45 : vector<16x16x8xf32>
    %47 = vector.extract_strided_slice %30 {offsets = [0, 2, 0], sizes = [16, 16, 8], strides = [1, 1, 1]} : vector<18x24x8xf32> to vector<16x16x8xf32>
    %48 = vector.extract_strided_slice %31 {offsets = [0, 2, 0], sizes = [1, 1, 8], strides = [1, 1, 1]} : vector<3x3x8xf32> to vector<1x1x8xf32>
    %49 = vector.shape_cast %48 : vector<1x1x8xf32> to vector<8xf32>
    %50 = vector.shape_cast %49 : vector<8xf32> to vector<1x1x8xf32>
    %51 = vector.broadcast %50 : vector<1x1x8xf32> to vector<16x16x8xf32>
    %52 = arith.mulf %47, %51 : vector<16x16x8xf32>
    %53 = arith.addf %46, %52 : vector<16x16x8xf32>
    %54 = vector.extract_strided_slice %30 {offsets = [1, 0, 0], sizes = [16, 16, 8], strides = [1, 1, 1]} : vector<18x24x8xf32> to vector<16x16x8xf32>
    %55 = vector.extract_strided_slice %31 {offsets = [1, 0, 0], sizes = [1, 1, 8], strides = [1, 1, 1]} : vector<3x3x8xf32> to vector<1x1x8xf32>
    %56 = vector.shape_cast %55 : vector<1x1x8xf32> to vector<8xf32>
    %57 = vector.shape_cast %56 : vector<8xf32> to vector<1x1x8xf32>
    %58 = vector.broadcast %57 : vector<1x1x8xf32> to vector<16x16x8xf32>
    %59 = arith.mulf %54, %58 : vector<16x16x8xf32>
    %60 = arith.addf %53, %59 : vector<16x16x8xf32>
    %61 = vector.extract_strided_slice %30 {offsets = [1, 1, 0], sizes = [16, 16, 8], strides = [1, 1, 1]} : vector<18x24x8xf32> to vector<16x16x8xf32>
    %62 = vector.extract_strided_slice %31 {offsets = [1, 1, 0], sizes = [1, 1, 8], strides = [1, 1, 1]} : vector<3x3x8xf32> to vector<1x1x8xf32>
    %63 = vector.shape_cast %62 : vector<1x1x8xf32> to vector<8xf32>
    %64 = vector.shape_cast %63 : vector<8xf32> to vector<1x1x8xf32>
    %65 = vector.broadcast %64 : vector<1x1x8xf32> to vector<16x16x8xf32>
    %66 = arith.mulf %61, %65 : vector<16x16x8xf32>
    %67 = arith.addf %60, %66 : vector<16x16x8xf32>
    %68 = vector.extract_strided_slice %30 {offsets = [1, 2, 0], sizes = [16, 16, 8], strides = [1, 1, 1]} : vector<18x24x8xf32> to vector<16x16x8xf32>
    %69 = vector.extract_strided_slice %31 {offsets = [1, 2, 0], sizes = [1, 1, 8], strides = [1, 1, 1]} : vector<3x3x8xf32> to vector<1x1x8xf32>
    %70 = vector.shape_cast %69 : vector<1x1x8xf32> to vector<8xf32>
    %71 = vector.shape_cast %70 : vector<8xf32> to vector<1x1x8xf32>
    %72 = vector.broadcast %71 : vector<1x1x8xf32> to vector<16x16x8xf32>
    %73 = arith.mulf %68, %72 : vector<16x16x8xf32>
    %74 = arith.addf %67, %73 : vector<16x16x8xf32>
    %75 = vector.extract_strided_slice %30 {offsets = [2, 0, 0], sizes = [16, 16, 8], strides = [1, 1, 1]} : vector<18x24x8xf32> to vector<16x16x8xf32>
    %76 = vector.extract_strided_slice %31 {offsets = [2, 0, 0], sizes = [1, 1, 8], strides = [1, 1, 1]} : vector<3x3x8xf32> to vector<1x1x8xf32>
    %77 = vector.shape_cast %76 : vector<1x1x8xf32> to vector<8xf32>
    %78 = vector.shape_cast %77 : vector<8xf32> to vector<1x1x8xf32>
    %79 = vector.broadcast %78 : vector<1x1x8xf32> to vector<16x16x8xf32>
    %80 = arith.mulf %75, %79 : vector<16x16x8xf32>
    %81 = arith.addf %74, %80 : vector<16x16x8xf32>
    %82 = vector.extract_strided_slice %30 {offsets = [2, 1, 0], sizes = [16, 16, 8], strides = [1, 1, 1]} : vector<18x24x8xf32> to vector<16x16x8xf32>
    %83 = vector.extract_strided_slice %31 {offsets = [2, 1, 0], sizes = [1, 1, 8], strides = [1, 1, 1]} : vector<3x3x8xf32> to vector<1x1x8xf32>
    %84 = vector.shape_cast %83 : vector<1x1x8xf32> to vector<8xf32>
    %85 = vector.shape_cast %84 : vector<8xf32> to vector<1x1x8xf32>
    %86 = vector.broadcast %85 : vector<1x1x8xf32> to vector<16x16x8xf32>
    %87 = arith.mulf %82, %86 : vector<16x16x8xf32>
    %88 = arith.addf %81, %87 : vector<16x16x8xf32>
    %89 = vector.extract_strided_slice %30 {offsets = [2, 2, 0], sizes = [16, 16, 8], strides = [1, 1, 1]} : vector<18x24x8xf32> to vector<16x16x8xf32>
    %90 = vector.extract_strided_slice %31 {offsets = [2, 2, 0], sizes = [1, 1, 8], strides = [1, 1, 1]} : vector<3x3x8xf32> to vector<1x1x8xf32>
    %91 = vector.shape_cast %90 : vector<1x1x8xf32> to vector<8xf32>
    %92 = vector.shape_cast %91 : vector<8xf32> to vector<1x1x8xf32>
    %93 = vector.broadcast %92 : vector<1x1x8xf32> to vector<16x16x8xf32>
    %94 = arith.mulf %89, %93 : vector<16x16x8xf32>
    %95 = arith.addf %88, %94 : vector<16x16x8xf32>
    %96 = vector.shape_cast %95 : vector<16x16x8xf32> to vector<256x8xf32>
    %c0_18 = arith.constant 0 : index
    %c0_19 = arith.constant 0 : index
    %97 = vector.load %arg6[%c0_18, %c0_19] : memref<1x8xf32, #tpu.memory_space<vmem>>, vector<1x8xf32>
    %98 = vector.broadcast %97 : vector<1x8xf32> to vector<256x8xf32>
    %99 = arith.mulf %96, %98 : vector<256x8xf32>
    %c0_20 = arith.constant 0 : index
    %c0_21 = arith.constant 0 : index
    %100 = vector.load %arg7[%c0_20, %c0_21] : memref<1x8xf32, #tpu.memory_space<vmem>>, vector<1x8xf32>
    %101 = vector.broadcast %100 : vector<1x8xf32> to vector<256x8xf32>
    %102 = arith.addf %99, %101 : vector<256x8xf32>
    %cst_22 = arith.constant 0.000000e+00 : f32
    %cst_23 = arith.constant 6.000000e+00 : f32
    %103 = vector.broadcast %cst_22 : f32 to vector<256x8xf32>
    %104 = arith.maximumf %103, %102 : vector<256x8xf32>
    %105 = vector.broadcast %cst_23 : f32 to vector<256x8xf32>
    %106 = arith.minimumf %105, %104 : vector<256x8xf32>
    %c0_24 = arith.constant 0 : index
    %c0_25 = arith.constant 0 : index
    %107 = vector.load %arg8[%c0_24, %c0_25] : memref<8x4xf32, #tpu.memory_space<vmem>>, vector<8x4xf32>
    %cst_26 = arith.constant dense<0.000000e+00> : vector<256x4xf32>
    %108 = tpu.matmul %106, %107, %cst_26 {dimension_numbers = #tpu.dot_dimension_numbers<[1], [0], [0], [1], [0, 0, 1, 1], [], []>} : vector<256x8xf32>, vector<8x4xf32>, vector<256x4xf32> -> vector<256x4xf32>
    %c0_27 = arith.constant 0 : index
    %c0_28 = arith.constant 0 : index
    %109 = vector.load %arg9[%c0_27, %c0_28] : memref<1x4xf32, #tpu.memory_space<vmem>>, vector<1x4xf32>
    %110 = vector.broadcast %109 : vector<1x4xf32> to vector<256x4xf32>
    %111 = arith.mulf %108, %110 : vector<256x4xf32>
    %c0_29 = arith.constant 0 : index
    %c0_30 = arith.constant 0 : index
    %112 = vector.load %arg10[%c0_29, %c0_30] : memref<1x4xf32, #tpu.memory_space<vmem>>, vector<1x4xf32>
    %113 = vector.broadcast %112 : vector<1x4xf32> to vector<256x4xf32>
    %114 = arith.addf %111, %113 : vector<256x4xf32>
    %115 = vector.extract_strided_slice %1 {offsets = [1, 1, 0], sizes = [16, 16, 4], strides = [1, 1, 1]} : vector<18x24x4xf32> to vector<16x16x4xf32>
    %116 = vector.shape_cast %115 : vector<16x16x4xf32> to vector<256x4xf32>
    %117 = arith.addf %114, %116 : vector<256x4xf32>
    %118 = vector.shape_cast %117 : vector<256x4xf32> to vector<16x16x4xf32>
    %c0_31 = arith.constant 0 : index
    %c0_32 = arith.constant 0 : index
    %c0_33 = arith.constant 0 : index
    %c0_34 = arith.constant 0 : index
    %119 = vector.load %arg11[%c0_31, %c0_32, %c0_33, %c0_34] : memref<1x16x16x4xf32, #tpu.memory_space<vmem>>, vector<1x16x16x4xf32>
    %120 = vector.shape_cast %119 : vector<1x16x16x4xf32> to vector<16x16x4xf32>
    %121 = vector.shape_cast %118 : vector<16x16x4xf32> to vector<1x16x16x4xf32>
    tpu.vector_store %arg11[%c0_31, %c0_32, %c0_33, %c0_34], %121 {strides = array<i32>} : memref<1x16x16x4xf32, #tpu.memory_space<vmem>>, vector<1x16x16x4xf32>,
    return
  }
  func.func @transform_0(%arg0: i32) -> (i32, i32, i32, i32) {
    %c0_i32 = arith.constant 0 : i32
    %c0_i32_0 = arith.constant 0 : i32
    %c0_i32_1 = arith.constant 0 : i32
    %c0_i32_2 = arith.constant 0 : i32
    return %arg0, %c0_i32, %c0_i32_0, %c0_i32_1 : i32, i32, i32, i32
  }
  func.func @transform_1(%arg0: i32) -> (i32, i32) {
    %c0_i32 = arith.constant 0 : i32
    %c0_i32_0 = arith.constant 0 : i32
    %c0_i32_1 = arith.constant 0 : i32
    return %c0_i32, %c0_i32_0 : i32, i32
  }
  func.func @transform_2(%arg0: i32) -> (i32, i32) {
    %c0_i32 = arith.constant 0 : i32
    %c0_i32_0 = arith.constant 0 : i32
    %c0_i32_1 = arith.constant 0 : i32
    return %c0_i32, %c0_i32_0 : i32, i32
  }
  func.func @transform_3(%arg0: i32) -> (i32, i32) {
    %c0_i32 = arith.constant 0 : i32
    %c0_i32_0 = arith.constant 0 : i32
    %c0_i32_1 = arith.constant 0 : i32
    return %c0_i32, %c0_i32_0 : i32, i32
  }
  func.func @transform_4(%arg0: i32) -> (i32, i32, i32) {
    %c0_i32 = arith.constant 0 : i32
    %c0_i32_0 = arith.constant 0 : i32
    %c0_i32_1 = arith.constant 0 : i32
    %c0_i32_2 = arith.constant 0 : i32
    return %c0_i32, %c0_i32_0, %c0_i32_1 : i32, i32, i32
  }
  func.func @transform_5(%arg0: i32) -> (i32, i32) {
    %c0_i32 = arith.constant 0 : i32
    %c0_i32_0 = arith.constant 0 : i32
    %c0_i32_1 = arith.constant 0 : i32
    return %c0_i32, %c0_i32_0 : i32, i32
  }
  func.func @transform_6(%arg0: i32) -> (i32, i32) {
    %c0_i32 = arith.constant 0 : i32
    %c0_i32_0 = arith.constant 0 : i32
    %c0_i32_1 = arith.constant 0 : i32
    return %c0_i32, %c0_i32_0 : i32, i32
  }
  func.func @transform_7(%arg0: i32) -> (i32, i32) {
    %c0_i32 = arith.constant 0 : i32
    %c0_i32_0 = arith.constant 0 : i32
    %c0_i32_1 = arith.constant 0 : i32
    return %c0_i32, %c0_i32_0 : i32, i32
  }
  func.func @transform_8(%arg0: i32) -> (i32, i32) {
    %c0_i32 = arith.constant 0 : i32
    %c0_i32_0 = arith.constant 0 : i32
    %c0_i32_1 = arith.constant 0 : i32
    return %c0_i32, %c0_i32_0 : i32, i32
  }
  func.func @transform_9(%arg0: i32) -> (i32, i32) {
    %c0_i32 = arith.constant 0 : i32
    %c0_i32_0 = arith.constant 0 : i32
    %c0_i32_1 = arith.constant 0 : i32
    return %c0_i32, %c0_i32_0 : i32, i32
  }
  func.func @transform_10(%arg0: i32) -> (i32, i32, i32, i32) {
    %c0_i32 = arith.constant 0 : i32
    %c0_i32_0 = arith.constant 0 : i32
    %c0_i32_1 = arith.constant 0 : i32
    %c0_i32_2 = arith.constant 0 : i32
    return %arg0, %c0_i32, %c0_i32_0, %c0_i32_1 : i32, i32, i32, i32
  }
}

</mosaic_0001>

<llo_original>
// kernel: tpu_custom_call.1
$region0: #{tpu_custom_call.1}
  #allocation0 [shape = 'u32[]', space=smem, size = 0x4, offset = 0x4, fixed_abs, tag = 'smem constant byte address 0x4 - core index']
  #allocation1 [shape = 'u32[144,128]{1,0:T(1,128)}', space=vmem, size = 0x12000, scoped, tag = 'internal scratch']
  %s0 = inlined_call_operand.vmem [shape: f32[2,18,24,4], index: 0, kind: input, shape index: {}]
  %s1 = inlined_call_operand.vmem [shape: f32[4,8], index: 1, kind: input, shape index: {}]
  %s2 = inlined_call_operand.vmem [shape: f32[1,8], index: 2, kind: input, shape index: {}]
  %s3 = inlined_call_operand.vmem [shape: f32[1,8], index: 3, kind: input, shape index: {}]
  %s4 = inlined_call_operand.vmem [shape: f32[3,3,8], index: 4, kind: input, shape index: {}]
  %s5 = inlined_call_operand.vmem [shape: f32[1,8], index: 5, kind: input, shape index: {}]
  %s6 = inlined_call_operand.vmem [shape: f32[1,8], index: 6, kind: input, shape index: {}]
  %s7 = inlined_call_operand.vmem [shape: f32[8,4], index: 7, kind: input, shape index: {}]
  %s8 = inlined_call_operand.vmem [shape: f32[1,4], index: 8, kind: input, shape index: {}]
  %s9 = inlined_call_operand.vmem [shape: f32[1,4], index: 9, kind: input, shape index: {}]
  %s10 = inlined_call_operand.vmem [shape: f32[2,16,16,4], index: 10, kind: output, shape index: {}]
  %s11 = sld [smem:[#allocation0]]
  $region73: #{tpu_custom_call.1} parent=0
    _
  %s13 = ssub.s32 1, %s11
  %s14 = scalar_select 0, %s13, %s11
  loop: start=0, step=1, limit=4
  $region2: #{tpu_custom_call.1} parent=0 // loop_pre_header
    _
  $region3: #{tpu_custom_call.1} parent=0 // loop_header
    %s16 = sphi 0, %s20
    %p17 = scmp.ge.s32.totalorder %s16, 4
    %s26 = sphi 0, %s28
    %s29 = sphi 0, %s26
    %s30 = sphi 0, %s29
    %s46 = sphi 0, %s30
    %s50 = sphi 0, %s50
    %s52 = sphi 0, %s50
    %s53 = sphi 0, %s52
    %s67 = sphi 0, %s53
    %s71 = sphi 0, %s71
    %s73 = sphi 0, %s71
    %s74 = sphi 0, %s73
    %s88 = sphi 0, %s74
    %s92 = sphi 0, %s92
    %s94 = sphi 0, %s92
    %s95 = sphi 0, %s94
    %s109 = sphi 0, %s95
    %s113 = sphi 0, %s113
    %s115 = sphi 0, %s113
    %s116 = sphi 0, %s115
    %s130 = sphi 0, %s116
    %s134 = sphi 0, %s134
    %s136 = sphi 0, %s134
    %s137 = sphi 0, %s136
    %s151 = sphi 0, %s137
    %s155 = sphi 0, %s155
    %s157 = sphi 0, %s155
    %s158 = sphi 0, %s157
    %s172 = sphi 0, %s158
    %s176 = sphi 0, %s176
    %s178 = sphi 0, %s176
    %s179 = sphi 0, %s178
    %s193 = sphi 0, %s179
    %s197 = sphi 0, %s197
    %s199 = sphi 0, %s197
    %s200 = sphi 0, %s199
    %s214 = sphi 0, %s200
    %s218 = sphi 0, %s218
    %s220 = sphi 0, %s218
    %s221 = sphi 0, %s220
    %s235 = sphi 0, %s221
    %s241 = sphi 0, %s243
    %s244 = sphi 0, %s241
    %s245 = sphi 0, %s244
    %s261 = sphi 0, %s245
  $region4: #{tpu_custom_call.1} parent=0 // loop_header_branch
    %19 = sbr.rel (%p17) target = $region8
  $region5: #{tpu_custom_call.1} parent=0 // loop_body
    %s21 = ssub.s32 %s16, 1
    %s22 = ssub.s32 %s16, 2
    %s23 = sadd.s32 %s16, 1
    %s24 = ssub.s32 %s16, %s23
    %p25 = scmp.eq.s32.totalorder %s24, 0
    %s27 = sadd.s32 %s26, 1
    %s28 = scalar_select %p25, %s26, %s27
    %p31 = pneg %p25
    %p32 = scmp.eq.s32.totalorder %s16, 1
    %p33 = por %p31, %p32
    %p34 = scmp.ne.s32.totalorder %s26, %s29
    %p35 = scmp.eq.s32.totalorder %s16, 0
    %p36 = por %p34, %p35
    %p37 = scmp.ne.s32.totalorder %s26, %s29
    %p38 = scmp.eq.s32.totalorder %s21, 1
    %p39 = por %p37, %p38
    %p40 = scmp.ne.s32.totalorder %s29, %s30
    %p41 = scmp.eq.s32.totalorder %s21, 0
    %p42 = por %p40, %p41
    %p43 = scmp.ne.s32.totalorder %s29, %s30
    %p44 = scmp.eq.s32.totalorder %s22, 1
    %p45 = por %p43, %p44
    %p47 = scmp.ne.s32.totalorder %s30, %s46
    %p48 = scmp.eq.s32.totalorder %s22, 0
    %p49 = por %p47, %p48
    %s51 = sadd.s32 %s50, 1
    %p54 = scmp.eq.s32.totalorder %s16, 1
    %p55 = scmp.ne.s32.totalorder %s50, %s52
    %p56 = scmp.eq.s32.totalorder %s16, 0
    %p57 = por %p55, %p56
    %p58 = scmp.ne.s32.totalorder %s50, %s52
    %p59 = scmp.eq.s32.totalorder %s21, 1
    %p60 = por %p58, %p59
    %p61 = scmp.ne.s32.totalorder %s52, %s53
    %p62 = scmp.eq.s32.totalorder %s21, 0
    %p63 = por %p61, %p62
    %p64 = scmp.ne.s32.totalorder %s52, %s53
    %p65 = scmp.eq.s32.totalorder %s22, 1
    %p66 = por %p64, %p65
    %p68 = scmp.ne.s32.totalorder %s53, %s67
    %p69 = scmp.eq.s32.totalorder %s22, 0
    %p70 = por %p68, %p69
    %s72 = sadd.s32 %s71, 1
    %p75 = scmp.eq.s32.totalorder %s16, 1
    %p76 = scmp.ne.s32.totalorder %s71, %s73
    %p77 = scmp.eq.s32.totalorder %s16, 0
    %p78 = por %p76, %p77
    %p79 = scmp.ne.s32.totalorder %s71, %s73
    %p80 = scmp.eq.s32.totalorder %s21, 1
    %p81 = por %p79, %p80
    %p82 = scmp.ne.s32.totalorder %s73, %s74
    %p83 = scmp.eq.s32.totalorder %s21, 0
    %p84 = por %p82, %p83
    %p85 = scmp.ne.s32.totalorder %s73, %s74
    %p86 = scmp.eq.s32.totalorder %s22, 1
    %p87 = por %p85, %p86
    %p89 = scmp.ne.s32.totalorder %s74, %s88
    %p90 = scmp.eq.s32.totalorder %s22, 0
    %p91 = por %p89, %p90
    %s93 = sadd.s32 %s92, 1
    %p96 = scmp.eq.s32.totalorder %s16, 1
    %p97 = scmp.ne.s32.totalorder %s92, %s94
    %p98 = scmp.eq.s32.totalorder %s16, 0
    %p99 = por %p97, %p98
    %p100 = scmp.ne.s32.totalorder %s92, %s94
    %p101 = scmp.eq.s32.totalorder %s21, 1
    %p102 = por %p100, %p101
    %p103 = scmp.ne.s32.totalorder %s94, %s95
    %p104 = scmp.eq.s32.totalorder %s21, 0
    %p105 = por %p103, %p104
    %p106 = scmp.ne.s32.totalorder %s94, %s95
    %p107 = scmp.eq.s32.totalorder %s22, 1
    %p108 = por %p106, %p107
    %p110 = scmp.ne.s32.totalorder %s95, %s109
    %p111 = scmp.eq.s32.totalorder %s22, 0
    %p112 = por %p110, %p111
    %s114 = sadd.s32 %s113, 1
    %p117 = scmp.eq.s32.totalorder %s16, 1
    %p118 = scmp.ne.s32.totalorder %s113, %s115
    %p119 = scmp.eq.s32.totalorder %s16, 0
    %p120 = por %p118, %p119
    %p121 = scmp.ne.s32.totalorder %s113, %s115
    %p122 = scmp.eq.s32.totalorder %s21, 1
    %p123 = por %p121, %p122
    %p124 = scmp.ne.s32.totalorder %s115, %s116
    %p125 = scmp.eq.s32.totalorder %s21, 0
    %p126 = por %p124, %p125
    %p127 = scmp.ne.s32.totalorder %s115, %s116
    %p128 = scmp.eq.s32.totalorder %s22, 1
    %p129 = por %p127, %p128
    %p131 = scmp.ne.s32.totalorder %s116, %s130
    %p132 = scmp.eq.s32.totalorder %s22, 0
    %p133 = por %p131, %p132
    %s135 = sadd.s32 %s134, 1
    %p138 = scmp.eq.s32.totalorder %s16, 1
    %p139 = scmp.ne.s32.totalorder %s134, %s136
    %p140 = scmp.eq.s32.totalorder %s16, 0
    %p141 = por %p139, %p140
    %p142 = scmp.ne.s32.totalorder %s134, %s136
    %p143 = scmp.eq.s32.totalorder %s21, 1
    %p144 = por %p142, %p143
    %p145 = scmp.ne.s32.totalorder %s136, %s137
    %p146 = scmp.eq.s32.totalorder %s21, 0
    %p147 = por %p145, %p146
    %p148 = scmp.ne.s32.totalorder %s136, %s137
    %p149 = scmp.eq.s32.totalorder %s22, 1
    %p150 = por %p148, %p149
    %p152 = scmp.ne.s32.totalorder %s137, %s151
    %p153 = scmp.eq.s32.totalorder %s22, 0
    %p154 = por %p152, %p153
    %s156 = sadd.s32 %s155, 1
    %p159 = scmp.eq.s32.totalorder %s16, 1
    %p160 = scmp.ne.s32.totalorder %s155, %s157
    %p161 = scmp.eq.s32.totalorder %s16, 0
    %p162 = por %p160, %p161
    %p163 = scmp.ne.s32.totalorder %s155, %s157
    %p164 = scmp.eq.s32.totalorder %s21, 1
    %p165 = por %p163, %p164
    %p166 = scmp.ne.s32.totalorder %s157, %s158
    %p167 = scmp.eq.s32.totalorder %s21, 0
    %p168 = por %p166, %p167
    %p169 = scmp.ne.s32.totalorder %s157, %s158
    %p170 = scmp.eq.s32.totalorder %s22, 1
    %p171 = por %p169, %p170
    %p173 = scmp.ne.s32.totalorder %s158, %s172
    %p174 = scmp.eq.s32.totalorder %s22, 0
    %p175 = por %p173, %p174
    %s177 = sadd.s32 %s176, 1
    %p180 = scmp.eq.s32.totalorder %s16, 1
    %p181 = scmp.ne.s32.totalorder %s176, %s178
    %p182 = scmp.eq.s32.totalorder %s16, 0
    %p183 = por %p181, %p182
    %p184 = scmp.ne.s32.totalorder %s176, %s178
    %p185 = scmp.eq.s32.totalorder %s21, 1
    %p186 = por %p184, %p185
    %p187 = scmp.ne.s32.totalorder %s178, %s179
    %p188 = scmp.eq.s32.totalorder %s21, 0
    %p189 = por %p187, %p188
    %p190 = scmp.ne.s32.totalorder %s178, %s179
    %p191 = scmp.eq.s32.totalorder %s22, 1
    %p192 = por %p190, %p191
    %p194 = scmp.ne.s32.totalorder %s179, %s193
    %p195 = scmp.eq.s32.totalorder %s22, 0
    %p196 = por %p194, %p195
    %s198 = sadd.s32 %s197, 1
    %p201 = scmp.eq.s32.totalorder %s16, 1
    %p202 = scmp.ne.s32.totalorder %s197, %s199
    %p203 = scmp.eq.s32.totalorder %s16, 0
    %p204 = por %p202, %p203
    %p205 = scmp.ne.s32.totalorder %s197, %s199
    %p206 = scmp.eq.s32.totalorder %s21, 1
    %p207 = por %p205, %p206
    %p208 = scmp.ne.s32.totalorder %s199, %s200
    %p209 = scmp.eq.s32.totalorder %s21, 0
    %p210 = por %p208, %p209
    %p211 = scmp.ne.s32.totalorder %s199, %s200
    %p212 = scmp.eq.s32.totalorder %s22, 1
    %p213 = por %p211, %p212
    %p215 = scmp.ne.s32.totalorder %s200, %s214
    %p216 = scmp.eq.s32.totalorder %s22, 0
    %p217 = por %p215, %p216
    %s219 = sadd.s32 %s218, 1
    %p222 = scmp.eq.s32.totalorder %s16, 1
    %p223 = scmp.ne.s32.totalorder %s218, %s220
    %p224 = scmp.eq.s32.totalorder %s16, 0
    %p225 = por %p223, %p224
    %p226 = scmp.ne.s32.totalorder %s218, %s220
    %p227 = scmp.eq.s32.totalorder %s21, 1
    %p228 = por %p226, %p227
    %p229 = scmp.ne.s32.totalorder %s220, %s221
    %p230 = scmp.eq.s32.totalorder %s21, 0
    %p231 = por %p229, %p230
    %p232 = scmp.ne.s32.totalorder %s220, %s221
    %p233 = scmp.eq.s32.totalorder %s22, 1
    %p234 = por %p232, %p233
    %p236 = scmp.ne.s32.totalorder %s221, %s235
    %p237 = scmp.eq.s32.totalorder %s22, 0
    %p238 = por %p236, %p237
    %s239 = ssub.s32 %s16, %s23
    %p240 = scmp.eq.s32.totalorder %s239, 0
    %s242 = sadd.s32 %s241, 1
    %s243 = scalar_select %p240, %s241, %s242
    %p246 = pneg %p240
    %p247 = scmp.eq.s32.totalorder %s16, 1
    %p248 = por %p246, %p247
    %p249 = scmp.ne.s32.totalorder %s241, %s244
    %p250 = scmp.eq.s32.totalorder %s16, 0
    %p251 = por %p249, %p250
    %p252 = scmp.ne.s32.totalorder %s241, %s244
    %p253 = scmp.eq.s32.totalorder %s21, 1
    %p254 = por %p252, %p253
    %p255 = scmp.ne.s32.totalorder %s244, %s245
    %p256 = scmp.eq.s32.totalorder %s21, 0
    %p257 = por %p255, %p256
    %p258 = scmp.ne.s32.totalorder %s244, %s245
    %p259 = scmp.eq.s32.totalorder %s22, 1
    %p260 = por %p258, %p259
    %p262 = scmp.ne.s32.totalorder %s245, %s261
    %p263 = scmp.eq.s32.totalorder %s22, 0
    %p264 = por %p262, %p263
    %p265 = scmp.le.s32.totalorder 1, %s16
    %p266 = scmp.lt.s32.totalorder %s16, 3
    %p267 = pnand %p265, %p266
    %p268 = pneg %p267
    // Predicated region
    $region9: #{tpu_custom_call.1} parent=5 // pred_check
      _
    $region10: #{tpu_custom_call.1} parent=5 // pred_check_branch
      %270 = sbr.rel (%p267) target = $region12
    $region11: #{tpu_custom_call.1} parent=5 // pred_region
      %s271 = ssub.s32 %s16, 1
      // Predicated region
      $region13: #{tpu_custom_call.1} parent=11 // pred_check
        %p272 = pneg %p63
      $region14: #{tpu_custom_call.1} parent=11 // pred_check_branch
        %274 = sbr.rel (%p272) target = $region16
      $region15: #{tpu_custom_call.1} parent=11 // pred_region
        _
      $region16: #{tpu_custom_call.1} parent=11 // pred_fallthru
        _
      // Predicated region
      $region17: #{tpu_custom_call.1} parent=11 // pred_check
        %p275 = pneg %p84
      $region18: #{tpu_custom_call.1} parent=11 // pred_check_branch
        %277 = sbr.rel (%p275) target = $region20
      $region19: #{tpu_custom_call.1} parent=11 // pred_region
        _
      $region20: #{tpu_custom_call.1} parent=11 // pred_fallthru
        _
      // Predicated region
      $region21: #{tpu_custom_call.1} parent=11 // pred_check
        %p278 = pneg %p105
      $region22: #{tpu_custom_call.1} parent=11 // pred_check_branch
        %280 = sbr.rel (%p278) target = $region24
      $region23: #{tpu_custom_call.1} parent=11 // pred_region
        _
      $region24: #{tpu_custom_call.1} parent=11 // pred_fallthru
        _
      // Predicated region
      $region25: #{tpu_custom_call.1} parent=11 // pred_check
        %p281 = pneg %p126
      $region26: #{tpu_custom_call.1} parent=11 // pred_check_branch
        %283 = sbr.rel (%p281) target = $region28
      $region27: #{tpu_custom_call.1} parent=11 // pred_region
        _
      $region28: #{tpu_custom_call.1} parent=11 // pred_fallthru
        _
      // Predicated region
      $region29: #{tpu_custom_call.1} parent=11 // pred_check
        %p284 = pneg %p147
      $region30: #{tpu_custom_call.1} parent=11 // pred_check_branch
        %286 = sbr.rel (%p284) target = $region32
      $region31: #{tpu_custom_call.1} parent=11 // pred_region
        _
      $region32: #{tpu_custom_call.1} parent=11 // pred_fallthru
        _
      // Predicated region
      $region33: #{tpu_custom_call.1} parent=11 // pred_check
        %p287 = pneg %p168
      $region34: #{tpu_custom_call.1} parent=11 // pred_check_branch
        %289 = sbr.rel (%p287) target = $region36
      $region35: #{tpu_custom_call.1} parent=11 // pred_region
        _
      $region36: #{tpu_custom_call.1} parent=11 // pred_fallthru
        _
      // Predicated region
      $region37: #{tpu_custom_call.1} parent=11 // pred_check
        %p290 = pneg %p189
      $region38: #{tpu_custom_call.1} parent=11 // pred_check_branch
        %292 = sbr.rel (%p290) target = $region40
      $region39: #{tpu_custom_call.1} parent=11 // pred_region
        _
      $region40: #{tpu_custom_call.1} parent=11 // pred_fallthru
        _
      // Predicated region
      $region41: #{tpu_custom_call.1} parent=11 // pred_check
        %p293 = pneg %p210
      $region42: #{tpu_custom_call.1} parent=11 // pred_check_branch
        %295 = sbr.rel (%p293) target = $region44
      $region43: #{tpu_custom_call.1} parent=11 // pred_region
        _
      $region44: #{tpu_custom_call.1} parent=11 // pred_fallthru
        _
      // Predicated region
      $region45: #{tpu_custom_call.1} parent=11 // pred_check
        %p296 = pneg %p231
      $region46: #{tpu_custom_call.1} parent=11 // pred_check_branch
        %298 = sbr.rel (%p296) target = $region48
      $region47: #{tpu_custom_call.1} parent=11 // pred_region
        _
      $region48: #{tpu_custom_call.1} parent=11 // pred_fallthru
        _
    $region12: #{tpu_custom_call.1} parent=5 // pred_fallthru
      _
    %p299 = scmp.lt.s32.totalorder %s16, 2
    // Predicated region
    $region49: #{tpu_custom_call.1} parent=5 // pred_check
      %p300 = pneg %p299
    $region50: #{tpu_custom_call.1} parent=5 // pred_check_branch
      %302 = sbr.rel (%p300) target = $region52
    $region51: #{tpu_custom_call.1} parent=5 // pred_region
      // Predicated region
      $region53: #{tpu_custom_call.1} parent=51 // pred_check
        %p303 = pneg %p36
      $region54: #{tpu_custom_call.1} parent=51 // pred_check_branch
        %305 = sbr.rel (%p303) target = $region56
      $region55: #{tpu_custom_call.1} parent=51 // pred_region
        %p306 = scmp.lt.s32.totalorder %s16, 1
        %s307 = scalar_select %p306, %s16, 1
        %s308 = smul.addr %s307, 54
        %s309 = smul.addr %s308, 8
        %s310 = scalar_lea.vmem %s0, %s309
      $region56: #{tpu_custom_call.1} parent=51 // pred_fallthru
        _
    $region52: #{tpu_custom_call.1} parent=5 // pred_fallthru
      _
    %p311 = scmp.le.s32.totalorder 1, %s16
    %p312 = scmp.lt.s32.totalorder %s16, 3
    %p313 = pnand %p311, %p312
    %p314 = pneg %p313
    // Predicated region
    $region57: #{tpu_custom_call.1} parent=5 // pred_check
      _
    $region58: #{tpu_custom_call.1} parent=5 // pred_check_branch
      %316 = sbr.rel (%p313) target = $region60
    $region59: #{tpu_custom_call.1} parent=5 // pred_region
      %s317 = ssub.s32 %s16, 1
      %p318 = scmp.lt.s32.totalorder %s21, 1
      %s319 = scalar_select %p318, %s21, 1
      %s320 = smul.addr %s319, 54
      %s321 = smul.addr %s320, 8
      %s322 = scalar_lea.vmem %s0, %s321
      %p323 = pneg %p42
      %p324 = pneg %p39
      %p325 = pneg %p63
      %p326 = pneg %p60
      %p327 = pneg %p84
      %p328 = pneg %p81
      %p329 = pneg %p105
      %p330 = pneg %p102
      %p331 = pneg %p126
      %p332 = pneg %p123
      %p333 = pneg %p147
      %p334 = pneg %p144
      %p335 = pneg %p168
      %p336 = pneg %p165
      %p337 = pneg %p189
      %p338 = pneg %p186
      %p339 = pneg %p210
      %p340 = pneg %p207
      %p341 = pneg %p231
      %p342 = pneg %p228
      %p343 = pneg %p257
      %p344 = pneg %p254
      %p345 = scmp.lt.s32.totalorder %s21, 1
      %s346 = scalar_select %p345, %s21, 1
      %s347 = smul.addr %s346, 32
      %s348 = smul.addr %s347, 8
      %s349 = scalar_lea.vmem %s10, %s348
      %p350 = scmp.lt.s32.totalorder %s21, 1
      %s351 = scalar_select %p350, %s21, 1
      %s352 = smul.addr %s351, 54
      %s353 = smul.addr %s352, 8
      %s354 = scalar_lea.vmem %s0, %s353
      %p355 = scmp.lt.s32.totalorder %s21, 1
      %s356 = scalar_select %p355, %s21, 1
      %s357 = smul.addr %s356, 32
      %s358 = smul.addr %s357, 8
      %s359 = scalar_lea.vmem %s10, %s358
      %v360 = vld [vmem:[%s354] sm:$0xff]
      %v361 = vld [vmem:[%s354 + $0x8] sm:$0xff]
      %v362 = vld [vmem:[%s354 + $0x10] sm:$0xff]
      %v363 = vld [vmem:[%s354 + $0x18] sm:$0xff]
      %v364 = vld [vmem:[%s354 + $0x20] sm:$0xff]
      %v365 = vld [vmem:[%s354 + $0x28] sm:$0xff]
      %v366 = vld [vmem:[%s354 + $0x30] sm:$0xff]
      %v367 = vld [vmem:[%s354 + $0x38] sm:$0xff]
      %v368 = vld [vmem:[%s354 + $0x40] sm:$0xff]
      %v369 = vld [vmem:[%s354 + $0x48] sm:$0xff]
      %v370 = vld [vmem:[%s354 + $0x50] sm:$0xff]
      %v371 = vld [vmem:[%s354 + $0x58] sm:$0xff]
      %v372 = vld [vmem:[%s354 + $0x60] sm:$0xff]
      %v373 = vld [vmem:[%s354 + $0x68] sm:$0xff]
      %v374 = vld [vmem:[%s354 + $0x70] sm:$0xff]
      %v375 = vld [vmem:[%s354 + $0x78] sm:$0xff]
      %v376 = vld [vmem:[%s354 + $0x80] sm:$0xff]
      %v377 = vld [vmem:[%s354 + $0x88] sm:$0xff]
      %v378 = vld [vmem:[%s354 + $0x90] sm:$0xff]
      %v379 = vld [vmem:[%s354 + $0x98] sm:$0xff]
      %v380 = vld [vmem:[%s354 + $0xa0] sm:$0xff]
      %v381 = vld [vmem:[%s354 + $0xa8] sm:$0xff]
      %v382 = vld [vmem:[%s354 + $0xb0] sm:$0xff]
      %v383 = vld [vmem:[%s354 + $0xb8] sm:$0xff]
      %v384 = vld [vmem:[%s354 + $0xc0] sm:$0xff]
      %v385 = vld [vmem:[%s354 + $0xc8] sm:$0xff]
      %v386 = vld [vmem:[%s354 + $0xd0] sm:$0xff]
      %v387 = vld [vmem:[%s354 + $0xd8] sm:$0xff]
      %v388 = vld [vmem:[%s354 + $0xe0] sm:$0xff]
      %v389 = vld [vmem:[%s354 + $0xe8] sm:$0xff]
      %v390 = vld [vmem:[%s354 + $0xf0] sm:$0xff]
      %v391 = vld [vmem:[%s354 + $0xf8] sm:$0xff]
      %v392 = vld [vmem:[%s354 + $0x100] sm:$0xff]
      %v393 = vld [vmem:[%s354 + $0x108] sm:$0xff]
      %v394 = vld [vmem:[%s354 + $0x110] sm:$0xff]
      %v395 = vld [vmem:[%s354 + $0x118] sm:$0xff]
      %v396 = vld [vmem:[%s354 + $0x120] sm:$0xff]
      %v397 = vld [vmem:[%s354 + $0x128] sm:$0xff]
      %v398 = vld [vmem:[%s354 + $0x130] sm:$0xff]
      %v399 = vld [vmem:[%s354 + $0x138] sm:$0xff]
      %v400 = vld [vmem:[%s354 + $0x140] sm:$0xff]
      %v401 = vld [vmem:[%s354 + $0x148] sm:$0xff]
      %v402 = vld [vmem:[%s354 + $0x150] sm:$0xff]
      %v403 = vld [vmem:[%s354 + $0x158] sm:$0xff]
      %v404 = vld [vmem:[%s354 + $0x160] sm:$0xff]
      %v405 = vld [vmem:[%s354 + $0x168] sm:$0xff]
      %v406 = vld [vmem:[%s354 + $0x170] sm:$0xff]
      %v407 = vld [vmem:[%s354 + $0x178] sm:$0xff]
      %v408 = vld [vmem:[%s354 + $0x180] sm:$0xff]
      %v409 = vld [vmem:[%s354 + $0x188] sm:$0xff]
      %v410 = vld [vmem:[%s354 + $0x190] sm:$0xff]
      %v411 = vld [vmem:[%s354 + $0x198] sm:$0xff]
      %v412 = vld [vmem:[%s354 + $0x1a0] sm:$0xff]
      %v413 = vld [vmem:[%s354 + $0x1a8] sm:$0xff]
      %v414 = vld [vmem:[%s1] sm:$0xf]
      %vm415 = vcmask 31744
      %v417 = vsel %vm415, %v360, 0
      %v420 = vsel %vm415, %v361, 0
      %v423 = vsel %vm415, %v362, 0
      %v426 = vsel %vm415, %v363, 0
      %v429 = vsel %vm415, %v364, 0
      %v432 = vsel %vm415, %v365, 0
      %v435 = vsel %vm415, %v366, 0
      %v438 = vsel %vm415, %v367, 0
      %v441 = vsel %vm415, %v368, 0
      %v444 = vsel %vm415, %v369, 0
      %v447 = vsel %vm415, %v370, 0
      %v450 = vsel %vm415, %v371, 0
      %v453 = vsel %vm415, %v372, 0
      %v456 = vsel %vm415, %v373, 0
      %v459 = vsel %vm415, %v374, 0
      %v462 = vsel %vm415, %v375, 0
      %v465 = vsel %vm415, %v376, 0
      %v468 = vsel %vm415, %v377, 0
      %v471 = vsel %vm415, %v378, 0
      %v474 = vsel %vm415, %v379, 0
      %v477 = vsel %vm415, %v380, 0
      %v480 = vsel %vm415, %v381, 0
      %v483 = vsel %vm415, %v382, 0
      %v486 = vsel %vm415, %v383, 0
      %v489 = vsel %vm415, %v384, 0
      %v492 = vsel %vm415, %v385, 0
      %v495 = vsel %vm415, %v386, 0
      %v498 = vsel %vm415, %v387, 0
      %v501 = vsel %vm415, %v388, 0
      %v504 = vsel %vm415, %v389, 0
      %v507 = vsel %vm415, %v390, 0
      %v510 = vsel %vm415, %v391, 0
      %v513 = vsel %vm415, %v392, 0
      %v516 = vsel %vm415, %v393, 0
      %v519 = vsel %vm415, %v394, 0
      %v522 = vsel %vm415, %v395, 0
      %v525 = vsel %vm415, %v396, 0
      %v528 = vsel %vm415, %v397, 0
      %v531 = vsel %vm415, %v398, 0
      %v534 = vsel %vm415, %v399, 0
      %v537 = vsel %vm415, %v400, 0
      %v540 = vsel %vm415, %v401, 0
      %v543 = vsel %vm415, %v402, 0
      %v546 = vsel %vm415, %v403, 0
      %v549 = vsel %vm415, %v404, 0
      %v552 = vsel %vm415, %v405, 0
      %v555 = vsel %vm415, %v406, 0
      %v558 = vsel %vm415, %v407, 0
      %v561 = vsel %vm415, %v408, 0
      %v564 = vsel %vm415, %v409, 0
      %v567 = vsel %vm415, %v410, 0
      %v570 = vsel %vm415, %v411, 0
      %v573 = vsel %vm415, %v412, 0
      %v576 = vsel %vm415, %v413, 0
      %vm578 = vcmask 1043456
      %v580 = vsel %vm578, %v414, 0
      %582 = vmatprep.subr.mxu0 0.0
      %583 = vmatpush1.msra.mxu0 %v580
      %584 = vmatprep.subr.mxu0 0.0
      %585 = vmatpush1.msra.mxu0 0.0
      %586 = vmatprep.subr.mxu0 0.0
      %587 = vmatpush1.msra.mxu0 0.0
      %588 = vmatprep.subr.mxu0 0.0
      %589 = vmatpush1.msra.mxu0 0.0
      %590 = vmatprep.subr.mxu0 0.0
      %591 = vmatpush1.msra.mxu0 0.0
      %592 = vmatprep.subr.mxu0 0.0
      %593 = vmatpush1.msra.mxu0 0.0
      %594 = vmatprep.subr.mxu0 0.0
      %595 = vmatpush1.msra.mxu0 0.0
      %596 = vmatprep.subr.mxu0 0.0
      %597 = vmatpush1.msra.mxu0 0.0
      %598 = vmatprep.subr.mxu0 0.0
      %599 = vmatpush1.msra.mxu0 0.0
      %600 = vmatprep.subr.mxu0 0.0
      %601 = vmatpush1.msra.mxu0 0.0
      %602 = vmatprep.subr.mxu0 0.0
      %603 = vmatpush1.msra.mxu0 0.0
      %604 = vmatprep.subr.mxu0 0.0
      %605 = vmatpush1.msra.mxu0 0.0
      %606 = vmatprep.subr.mxu0 0.0
      %607 = vmatpush1.msra.mxu0 0.0
      %608 = vmatprep.subr.mxu0 0.0
      %609 = vmatpush1.msra.mxu0 0.0
      %610 = vmatprep.subr.mxu0 0.0
      %611 = vmatpush1.msra.mxu0 0.0
      %612 = vmatprep.subr.mxu0 0.0
      %613 = vmatpush1.msra.mxu0 0.0
      %614 = vmatprep.subr.mxu0 0.0
      %615 = vmatpush1.msra.mxu0 0.0
      %616 = vmatprep.subr.mxu0 0.0
      %617 = vmatpush1.msra.mxu0 0.0
      %618 = vmatprep.subr.mxu0 0.0
      %619 = vmatpush1.msra.mxu0 0.0
      %620 = vmatprep.subr.mxu0 0.0
      %621 = vmatpush1.msra.mxu0 0.0
      %622 = vmatprep.subr.mxu0 0.0
      %623 = vmatpush1.msra.mxu0 0.0
      %624 = vmatprep.subr.mxu0 0.0
      %625 = vmatpush1.msra.mxu0 0.0
      %626 = vmatprep.subr.mxu0 0.0
      %627 = vmatpush1.msra.mxu0 0.0
      %628 = vmatprep.subr.mxu0 0.0
      %629 = vmatpush1.msra.mxu0 0.0
      %630 = vmatprep.subr.mxu0 0.0
      %631 = vmatpush1.msra.mxu0 0.0
      %632 = vmatprep.subr.mxu0 0.0
      %633 = vmatpush1.msra.mxu0 0.0
      %634 = vmatprep.subr.mxu0 0.0
      %635 = vmatpush1.msra.mxu0 0.0
      %636 = vmatprep.subr.mxu0 0.0
      %637 = vmatpush1.msra.mxu0 0.0
      %638 = vmatprep.subr.mxu0 0.0
      %639 = vmatpush1.msra.mxu0 0.0
      %640 = vmatprep.subr.mxu0 0.0
      %641 = vmatpush1.msra.mxu0 0.0
      %642 = vmatprep.subr.mxu0 0.0
      %643 = vmatpush1.msra.mxu0 0.0
      %644 = vmatprep.subr.mxu0 0.0
      %645 = vmatpush1.msra.mxu0 0.0
      %646 = vmatprep.mubr.f32.mxu0 0.0
      %647 = vmatmul.mubr.f32.gmra.mrb[0].mxu0 %v417
      %v648 = vpop.f32.mrb[0].mxu0
      %v649 = vadd.f32 0.0, %v648
      %v650 = vpop.f32.mrb[0].mxu0
      %651 = vmatprep.mubr.f32.mxu0 0.0
      %652 = vmatmul.mubr.f32.gmra.mrb[0].mxu0 %v420
      %v653 = vpop.f32.mrb[0].mxu0
      %v654 = vadd.f32 0.0, %v653
      %v655 = vpop.f32.mrb[0].mxu0
      %656 = vmatprep.mubr.f32.mxu0 0.0
      %657 = vmatmul.mubr.f32.gmra.mrb[0].mxu0 %v423
      %v658 = vpop.f32.mrb[0].mxu0
      %v659 = vadd.f32 0.0, %v658
      %v660 = vpop.f32.mrb[0].mxu0
      %661 = vmatprep.mubr.f32.mxu0 0.0
      %662 = vmatmul.mubr.f32.gmra.mrb[0].mxu0 %v426
      %v663 = vpop.f32.mrb[0].mxu0
      %v664 = vadd.f32 0.0, %v663
      %v665 = vpop.f32.mrb[0].mxu0
      %666 = vmatprep.mubr.f32.mxu0 0.0
      %667 = vmatmul.mubr.f32.gmra.mrb[0].mxu0 %v429
      %v668 = vpop.f32.mrb[0].mxu0
      %v669 = vadd.f32 0.0, %v668
      %v670 = vpop.f32.mrb[0].mxu0
      %671 = vmatprep.mubr.f32.mxu0 0.0
      %672 = vmatmul.mubr.f32.gmra.mrb[0].mxu0 %v432
      %v673 = vpop.f32.mrb[0].mxu0
      %v674 = vadd.f32 0.0, %v673
      %v675 = vpop.f32.mrb[0].mxu0
      %676 = vmatprep.mubr.f32.mxu0 0.0
      %677 = vmatmul.mubr.f32.gmra.mrb[0].mxu0 %v435
      %v678 = vpop.f32.mrb[0].mxu0
      %v679 = vadd.f32 0.0, %v678
      %v680 = vpop.f32.mrb[0].mxu0
      %681 = vmatprep.mubr.f32.mxu0 0.0
      %682 = vmatmul.mubr.f32.gmra.mrb[0].mxu0 %v438
      %v683 = vpop.f32.mrb[0].mxu0
      %v684 = vadd.f32 0.0, %v683
      %v685 = vpop.f32.mrb[0].mxu0
      %686 = vmatprep.mubr.f32.mxu0 0.0
      %687 = vmatmul.mubr.f32.gmra.mrb[0].mxu0 %v441
      %v688 = vpop.f32.mrb[0].mxu0
      %v689 = vadd.f32 0.0, %v688
      %v690 = vpop.f32.mrb[0].mxu0
      %691 = vmatprep.mubr.f32.mxu0 0.0
      %692 = vmatmul.mubr.f32.gmra.mrb[0].mxu0 %v444
      %v693 = vpop.f32.mrb[0].mxu0
      %v694 = vadd.f32 0.0, %v693
      %v695 = vpop.f32.mrb[0].mxu0
      %696 = vmatprep.mubr.f32.mxu0 0.0
      %697 = vmatmul.mubr.f32.gmra.mrb[0].mxu0 %v447
      %v698 = vpop.f32.mrb[0].mxu0
      %v699 = vadd.f32 0.0, %v698
      %v700 = vpop.f32.mrb[0].mxu0
      %701 = vmatprep.mubr.f32.mxu0 0.0
      %702 = vmatmul.mubr.f32.gmra.mrb[0].mxu0 %v450
      %v703 = vpop.f32.mrb[0].mxu0
      %v704 = vadd.f32 0.0, %v703
      %v705 = vpop.f32.mrb[0].mxu0
      %706 = vmatprep.mubr.f32.mxu0 0.0
      %707 = vmatmul.mubr.f32.gmra.mrb[0].mxu0 %v453
      %v708 = vpop.f32.mrb[0].mxu0
      %v709 = vadd.f32 0.0, %v708
      %v710 = vpop.f32.mrb[0].mxu0
      %711 = vmatprep.mubr.f32.mxu0 0.0
      %712 = vmatmul.mubr.f32.gmra.mrb[0].mxu0 %v456
      %v713 = vpop.f32.mrb[0].mxu0
      %v714 = vadd.f32 0.0, %v713
      %v715 = vpop.f32.mrb[0].mxu0
      %716 = vmatprep.mubr.f32.mxu0 0.0
      %717 = vmatmul.mubr.f32.gmra.mrb[0].mxu0 %v459
      %v718 = vpop.f32.mrb[0].mxu0
      %v719 = vadd.f32 0.0, %v718
      %v720 = vpop.f32.mrb[0].mxu0
      %721 = vmatprep.mubr.f32.mxu0 0.0
      %722 = vmatmul.mubr.f32.gmra.mrb[0].mxu0 %v462
      %v723 = vpop.f32.mrb[0].mxu0
      %v724 = vadd.f32 0.0, %v723
      %v725 = vpop.f32.mrb[0].mxu0
      %726 = vmatprep.mubr.f32.mxu0 0.0
      %727 = vmatmul.mubr.f32.gmra.mrb[0].mxu0 %v465
      %v728 = vpop.f32.mrb[0].mxu0
      %v729 = vadd.f32 0.0, %v728
      %v730 = vpop.f32.mrb[0].mxu0
      %731 = vmatprep.mubr.f32.mxu0 0.0
      %732 = vmatmul.mubr.f32.gmra.mrb[0].mxu0 %v468
      %v733 = vpop.f32.mrb[0].mxu0
      %v734 = vadd.f32 0.0, %v733
      %v735 = vpop.f32.mrb[0].mxu0
      %736 = vmatprep.mubr.f32.mxu0 0.0
      %737 = vmatmul.mubr.f32.gmra.mrb[0].mxu0 %v471
      %v738 = vpop.f32.mrb[0].mxu0
      %v739 = vadd.f32 0.0, %v738
      %v740 = vpop.f32.mrb[0].mxu0
      %741 = vmatprep.mubr.f32.mxu0 0.0
      %742 = vmatmul.mubr.f32.gmra.mrb[0].mxu0 %v474
      %v743 = vpop.f32.mrb[0].mxu0
      %v744 = vadd.f32 0.0, %v743
      %v745 = vpop.f32.mrb[0].mxu0
      %746 = vmatprep.mubr.f32.mxu0 0.0
      %747 = vmatmul.mubr.f32.gmra.mrb[0].mxu0 %v477
      %v748 = vpop.f32.mrb[0].mxu0
      %v749 = vadd.f32 0.0, %v748
      %v750 = vpop.f32.mrb[0].mxu0
      %751 = vmatprep.mubr.f32.mxu0 0.0
      %752 = vmatmul.mubr.f32.gmra.mrb[0].mxu0 %v480
      %v753 = vpop.f32.mrb[0].mxu0
      %v754 = vadd.f32 0.0, %v753
      %v755 = vpop.f32.mrb[0].mxu0
      %756 = vmatprep.mubr.f32.mxu0 0.0
      %757 = vmatmul.mubr.f32.gmra.mrb[0].mxu0 %v483
      %v758 = vpop.f32.mrb[0].mxu0
      %v759 = vadd.f32 0.0, %v758
      %v760 = vpop.f32.mrb[0].mxu0
      %761 = vmatprep.mubr.f32.mxu0 0.0
      %762 = vmatmul.mubr.f32.gmra.mrb[0].mxu0 %v486
      %v763 = vpop.f32.mrb[0].mxu0
      %v764 = vadd.f32 0.0, %v763
      %v765 = vpop.f32.mrb[0].mxu0
      %766 = vmatprep.mubr.f32.mxu0 0.0
      %767 = vmatmul.mubr.f32.gmra.mrb[0].mxu0 %v489
      %v768 = vpop.f32.mrb[0].mxu0
      %v769 = vadd.f32 0.0, %v768
      %v770 = vpop.f32.mrb[0].mxu0
      %771 = vmatprep.mubr.f32.mxu0 0.0
      %772 = vmatmul.mubr.f32.gmra.mrb[0].mxu0 %v492
      %v773 = vpop.f32.mrb[0].mxu0
      %v774 = vadd.f32 0.0, %v773
      %v775 = vpop.f32.mrb[0].mxu0
      %776 = vmatprep.mubr.f32.mxu0 0.0
      %777 = vmatmul.mubr.f32.gmra.mrb[0].mxu0 %v495
      %v778 = vpop.f32.mrb[0].mxu0
      %v779 = vadd.f32 0.0, %v778
      %v780 = vpop.f32.mrb[0].mxu0
      %781 = vmatprep.mubr.f32.mxu0 0.0
      %782 = vmatmul.mubr.f32.gmra.mrb[0].mxu0 %v498
      %v783 = vpop.f32.mrb[0].mxu0
      %v784 = vadd.f32 0.0, %v783
      %v785 = vpop.f32.mrb[0].mxu0
      %786 = vmatprep.mubr.f32.mxu0 0.0
      %787 = vmatmul.mubr.f32.gmra.mrb[0].mxu0 %v501
      %v788 = vpop.f32.mrb[0].mxu0
      %v789 = vadd.f32 0.0, %v788
      %v790 = vpop.f32.mrb[0].mxu0
      %791 = vmatprep.mubr.f32.mxu0 0.0
      %792 = vmatmul.mubr.f32.gmra.mrb[0].mxu0 %v504
      %v793 = vpop.f32.mrb[0].mxu0
      %v794 = vadd.f32 0.0, %v793
      %v795 = vpop.f32.mrb[0].mxu0
      %796 = vmatprep.mubr.f32.mxu0 0.0
      %797 = vmatmul.mubr.f32.gmra.mrb[0].mxu0 %v507
      %v798 = vpop.f32.mrb[0].mxu0
      %v799 = vadd.f32 0.0, %v798
      %v800 = vpop.f32.mrb[0].mxu0
      %801 = vmatprep.mubr.f32.mxu0 0.0
      %802 = vmatmul.mubr.f32.gmra.mrb[0].mxu0 %v510
      %v803 = vpop.f32.mrb[0].mxu0
      %v804 = vadd.f32 0.0, %v803
      %v805 = vpop.f32.mrb[0].mxu0
      %806 = vmatprep.mubr.f32.mxu0 0.0
      %807 = vmatmul.mubr.f32.gmra.mrb[0].mxu0 %v513
      %v808 = vpop.f32.mrb[0].mxu0
      %v809 = vadd.f32 0.0, %v808
      %v810 = vpop.f32.mrb[0].mxu0
      %811 = vmatprep.mubr.f32.mxu0 0.0
      %812 = vmatmul.mubr.f32.gmra.mrb[0].mxu0 %v516
      %v813 = vpop.f32.mrb[0].mxu0
      %v814 = vadd.f32 0.0, %v813
      %v815 = vpop.f32.mrb[0].mxu0
      %816 = vmatprep.mubr.f32.mxu0 0.0
      %817 = vmatmul.mubr.f32.gmra.mrb[0].mxu0 %v519
      %v818 = vpop.f32.mrb[0].mxu0
      %v819 = vadd.f32 0.0, %v818
      %v820 = vpop.f32.mrb[0].mxu0
      %821 = vmatprep.mubr.f32.mxu0 0.0
      %822 = vmatmul.mubr.f32.gmra.mrb[0].mxu0 %v522
      %v823 = vpop.f32.mrb[0].mxu0
      %v824 = vadd.f32 0.0, %v823
      %v825 = vpop.f32.mrb[0].mxu0
      %826 = vmatprep.mubr.f32.mxu0 0.0
      %827 = vmatmul.mubr.f32.gmra.mrb[0].mxu0 %v525
      %v828 = vpop.f32.mrb[0].mxu0
      %v829 = vadd.f32 0.0, %v828
      %v830 = vpop.f32.mrb[0].mxu0
      %831 = vmatprep.mubr.f32.mxu0 0.0
      %832 = vmatmul.mubr.f32.gmra.mrb[0].mxu0 %v528
      %v833 = vpop.f32.mrb[0].mxu0
      %v834 = vadd.f32 0.0, %v833
      %v835 = vpop.f32.mrb[0].mxu0
      %836 = vmatprep.mubr.f32.mxu0 0.0
      %837 = vmatmul.mubr.f32.gmra.mrb[0].mxu0 %v531
      %v838 = vpop.f32.mrb[0].mxu0
      %v839 = vadd.f32 0.0, %v838
      %v840 = vpop.f32.mrb[0].mxu0
      %841 = vmatprep.mubr.f32.mxu0 0.0
      %842 = vmatmul.mubr.f32.gmra.mrb[0].mxu0 %v534
      %v843 = vpop.f32.mrb[0].mxu0
      %v844 = vadd.f32 0.0, %v843
      %v845 = vpop.f32.mrb[0].mxu0
      %846 = vmatprep.mubr.f32.mxu0 0.0
      %847 = vmatmul.mubr.f32.gmra.mrb[0].mxu0 %v537
      %v848 = vpop.f32.mrb[0].mxu0
      %v849 = vadd.f32 0.0, %v848
      %v850 = vpop.f32.mrb[0].mxu0
      %851 = vmatprep.mubr.f32.mxu0 0.0
      %852 = vmatmul.mubr.f32.gmra.mrb[0].mxu0 %v540
      %v853 = vpop.f32.mrb[0].mxu0
      %v854 = vadd.f32 0.0, %v853
      %v855 = vpop.f32.mrb[0].mxu0
      %856 = vmatprep.mubr.f32.mxu0 0.0
      %857 = vmatmul.mubr.f32.gmra.mrb[0].mxu0 %v543
      %v858 = vpop.f32.mrb[0].mxu0
      %v859 = vadd.f32 0.0, %v858
      %v860 = vpop.f32.mrb[0].mxu0
      %861 = vmatprep.mubr.f32.mxu0 0.0
      %862 = vmatmul.mubr.f32.gmra.mrb[0].mxu0 %v546
      %v863 = vpop.f32.mrb[0].mxu0
      %v864 = vadd.f32 0.0, %v863
      %v865 = vpop.f32.mrb[0].mxu0
      %866 = vmatprep.mubr.f32.mxu0 0.0
      %867 = vmatmul.mubr.f32.gmra.mrb[0].mxu0 %v549
      %v868 = vpop.f32.mrb[0].mxu0
      %v869 = vadd.f32 0.0, %v868
      %v870 = vpop.f32.mrb[0].mxu0
      %871 = vmatprep.mubr.f32.mxu0 0.0
      %872 = vmatmul.mubr.f32.gmra.mrb[0].mxu0 %v552
      %v873 = vpop.f32.mrb[0].mxu0
      %v874 = vadd.f32 0.0, %v873
      %v875 = vpop.f32.mrb[0].mxu0
      %876 = vmatprep.mubr.f32.mxu0 0.0
      %877 = vmatmul.mubr.f32.gmra.mrb[0].mxu0 %v555
      %v878 = vpop.f32.mrb[0].mxu0
      %v879 = vadd.f32 0.0, %v878
      %v880 = vpop.f32.mrb[0].mxu0
      %881 = vmatprep.mubr.f32.mxu0 0.0
      %882 = vmatmul.mubr.f32.gmra.mrb[0].mxu0 %v558
      %v883 = vpop.f32.mrb[0].mxu0
      %v884 = vadd.f32 0.0, %v883
      %v885 = vpop.f32.mrb[0].mxu0
      %886 = vmatprep.mubr.f32.mxu0 0.0
      %887 = vmatmul.mubr.f32.gmra.mrb[0].mxu0 %v561
      %v888 = vpop.f32.mrb[0].mxu0
      %v889 = vadd.f32 0.0, %v888
      %v890 = vpop.f32.mrb[0].mxu0
      %891 = vmatprep.mubr.f32.mxu0 0.0
      %892 = vmatmul.mubr.f32.gmra.mrb[0].mxu0 %v564
      %v893 = vpop.f32.mrb[0].mxu0
      %v894 = vadd.f32 0.0, %v893
      %v895 = vpop.f32.mrb[0].mxu0
      %896 = vmatprep.mubr.f32.mxu0 0.0
      %897 = vmatmul.mubr.f32.gmra.mrb[0].mxu0 %v567
      %v898 = vpop.f32.mrb[0].mxu0
      %v899 = vadd.f32 0.0, %v898
      %v900 = vpop.f32.mrb[0].mxu0
      %901 = vmatprep.mubr.f32.mxu0 0.0
      %902 = vmatmul.mubr.f32.gmra.mrb[0].mxu0 %v570
      %v903 = vpop.f32.mrb[0].mxu0
      %v904 = vadd.f32 0.0, %v903
      %v905 = vpop.f32.mrb[0].mxu0
      %906 = vmatprep.mubr.f32.mxu0 0.0
      %907 = vmatmul.mubr.f32.gmra.mrb[0].mxu0 %v573
      %v908 = vpop.f32.mrb[0].mxu0
      %v909 = vadd.f32 0.0, %v908
      %v910 = vpop.f32.mrb[0].mxu0
      %911 = vmatprep.mubr.f32.mxu0 0.0
      %912 = vmatmul.mubr.f32.gmra.mrb[0].mxu0 %v576
      %v913 = vpop.f32.mrb[0].mxu0
      %v914 = vadd.f32 0.0, %v913
      %v915 = vpop.f32.mrb[0].mxu0
      %916 = vdwg.mxu0
      %v917 = vld [vmem:[%s2] sm:$0x1]
      %v919 = vlaneseq
      %v920 = vshrl.u32 %v919, 7
      %v921 = vsub.s32 0, %v920
      %v922 = vrot.slane %v917, %v921
      %v924 = vmul.f32 %v649, %v922
      %v925 = vmul.f32 %v654, %v922
      %v926 = vmul.f32 %v659, %v922
      %v927 = vmul.f32 %v664, %v922
      %v928 = vmul.f32 %v669, %v922
      %v929 = vmul.f32 %v674, %v922
      %v930 = vmul.f32 %v679, %v922
      %v931 = vmul.f32 %v684, %v922
      %v932 = vmul.f32 %v689, %v922
      %v933 = vmul.f32 %v694, %v922
      %v934 = vmul.f32 %v699, %v922
      %v935 = vmul.f32 %v704, %v922
      %v936 = vmul.f32 %v709, %v922
      %v937 = vmul.f32 %v714, %v922
      %v938 = vmul.f32 %v719, %v922
      %v939 = vmul.f32 %v724, %v922
      %v940 = vmul.f32 %v729, %v922
      %v941 = vmul.f32 %v734, %v922
      %v942 = vmul.f32 %v739, %v922
      %v943 = vmul.f32 %v744, %v922
      %v944 = vmul.f32 %v749, %v922
      %v945 = vmul.f32 %v754, %v922
      %v946 = vmul.f32 %v759, %v922
      %v947 = vmul.f32 %v764, %v922
      %v948 = vmul.f32 %v769, %v922
      %v949 = vmul.f32 %v774, %v922
      %v950 = vmul.f32 %v779, %v922
      %v951 = vmul.f32 %v784, %v922
      %v952 = vmul.f32 %v789, %v922
      %v953 = vmul.f32 %v794, %v922
      %v954 = vmul.f32 %v799, %v922
      %v955 = vmul.f32 %v804, %v922
      %v956 = vmul.f32 %v809, %v922
      %v957 = vmul.f32 %v814, %v922
      %v958 = vmul.f32 %v819, %v922
      %v959 = vmul.f32 %v824, %v922
      %v960 = vmul.f32 %v829, %v922
      %v961 = vmul.f32 %v834, %v922
      %v962 = vmul.f32 %v839, %v922
      %v963 = vmul.f32 %v844, %v922
      %v964 = vmul.f32 %v849, %v922
      %v965 = vmul.f32 %v854, %v922
      %v966 = vmul.f32 %v859, %v922
      %v967 = vmul.f32 %v864, %v922
      %v968 = vmul.f32 %v869, %v922
      %v969 = vmul.f32 %v874, %v922
      %v970 = vmul.f32 %v879, %v922
      %v971 = vmul.f32 %v884, %v922
      %v972 = vmul.f32 %v889, %v922
      %v973 = vmul.f32 %v894, %v922
      %v974 = vmul.f32 %v899, %v922
      %v975 = vmul.f32 %v904, %v922
      %v976 = vmul.f32 %v909, %v922
      %v977 = vmul.f32 %v914, %v922
      %v978 = vld [vmem:[%s3] sm:$0x1]
      %v980 = vlaneseq
      %v981 = vshrl.u32 %v980, 7
      %v982 = vsub.s32 0, %v981
      %v983 = vrot.slane %v978, %v982
      %v985 = vadd.f32 %v924, %v983
      %v986 = vadd.f32 %v925, %v983
      %v987 = vadd.f32 %v926, %v983
      %v988 = vadd.f32 %v927, %v983
      %v989 = vadd.f32 %v928, %v983
      %v990 = vadd.f32 %v929, %v983
      %v991 = vadd.f32 %v930, %v983
      %v992 = vadd.f32 %v931, %v983
      %v993 = vadd.f32 %v932, %v983
      %v994 = vadd.f32 %v933, %v983
      %v995 = vadd.f32 %v934, %v983
      %v996 = vadd.f32 %v935, %v983
      %v997 = vadd.f32 %v936, %v983
      %v998 = vadd.f32 %v937, %v983
      %v999 = vadd.f32 %v938, %v983
      %v1000 = vadd.f32 %v939, %v983
      %v1001 = vadd.f32 %v940, %v983
      %v1002 = vadd.f32 %v941, %v983
      %v1003 = vadd.f32 %v942, %v983
      %v1004 = vadd.f32 %v943, %v983
      %v1005 = vadd.f32 %v944, %v983
      %v1006 = vadd.f32 %v945, %v983
      %v1007 = vadd.f32 %v946, %v983
      %v1008 = vadd.f32 %v947, %v983
      %v1009 = vadd.f32 %v948, %v983
      %v1010 = vadd.f32 %v949, %v983
      %v1011 = vadd.f32 %v950, %v983
      %v1012 = vadd.f32 %v951, %v983
      %v1013 = vadd.f32 %v952, %v983
      %v1014 = vadd.f32 %v953, %v983
      %v1015 = vadd.f32 %v954, %v983
      %v1016 = vadd.f32 %v955, %v983
      %v1017 = vadd.f32 %v956, %v983
      %v1018 = vadd.f32 %v957, %v983
      %v1019 = vadd.f32 %v958, %v983
      %v1020 = vadd.f32 %v959, %v983
      %v1021 = vadd.f32 %v960, %v983
      %v1022 = vadd.f32 %v961, %v983
      %v1023 = vadd.f32 %v962, %v983
      %v1024 = vadd.f32 %v963, %v983
      %v1025 = vadd.f32 %v964, %v983
      %v1026 = vadd.f32 %v965, %v983
      %v1027 = vadd.f32 %v966, %v983
      %v1028 = vadd.f32 %v967, %v983
      %v1029 = vadd.f32 %v968, %v983
      %v1030 = vadd.f32 %v969, %v983
      %v1031 = vadd.f32 %v970, %v983
      %v1032 = vadd.f32 %v971, %v983
      %v1033 = vadd.f32 %v972, %v983
      %v1034 = vadd.f32 %v973, %v983
      %v1035 = vadd.f32 %v974, %v983
      %v1036 = vadd.f32 %v975, %v983
      %v1037 = vadd.f32 %v976, %v983
      %v1038 = vadd.f32 %v977, %v983
      %v1039 = vmax.f32 %v985, 0.0
      %v1040 = vmax.f32 %v986, 0.0
      %v1041 = vmax.f32 %v987, 0.0
      %v1042 = vmax.f32 %v988, 0.0
      %v1043 = vmax.f32 %v989, 0.0
      %v1044 = vmax.f32 %v990, 0.0
      %v1045 = vmax.f32 %v991, 0.0
      %v1046 = vmax.f32 %v992, 0.0
      %v1047 = vmax.f32 %v993, 0.0
      %v1048 = vmax.f32 %v994, 0.0
      %v1049 = vmax.f32 %v995, 0.0
      %v1050 = vmax.f32 %v996, 0.0
      %v1051 = vmax.f32 %v997, 0.0
      %v1052 = vmax.f32 %v998, 0.0
      %v1053 = vmax.f32 %v999, 0.0
      %v1054 = vmax.f32 %v1000, 0.0
      %v1055 = vmax.f32 %v1001, 0.0
      %v1056 = vmax.f32 %v1002, 0.0
      %v1057 = vmax.f32 %v1003, 0.0
      %v1058 = vmax.f32 %v1004, 0.0
      %v1059 = vmax.f32 %v1005, 0.0
      %v1060 = vmax.f32 %v1006, 0.0
      %v1061 = vmax.f32 %v1007, 0.0
      %v1062 = vmax.f32 %v1008, 0.0
      %v1063 = vmax.f32 %v1009, 0.0
      %v1064 = vmax.f32 %v1010, 0.0
      %v1065 = vmax.f32 %v1011, 0.0
      %v1066 = vmax.f32 %v1012, 0.0
      %v1067 = vmax.f32 %v1013, 0.0
      %v1068 = vmax.f32 %v1014, 0.0
      %v1069 = vmax.f32 %v1015, 0.0
      %v1070 = vmax.f32 %v1016, 0.0
      %v1071 = vmax.f32 %v1017, 0.0
      %v1072 = vmax.f32 %v1018, 0.0
      %v1073 = vmax.f32 %v1019, 0.0
      %v1074 = vmax.f32 %v1020, 0.0
      %v1075 = vmax.f32 %v1021, 0.0
      %v1076 = vmax.f32 %v1022, 0.0
      %v1077 = vmax.f32 %v1023, 0.0
      %v1078 = vmax.f32 %v1024, 0.0
      %v1079 = vmax.f32 %v1025, 0.0
      %v1080 = vmax.f32 %v1026, 0.0
      %v1081 = vmax.f32 %v1027, 0.0
      %v1082 = vmax.f32 %v1028, 0.0
      %v1083 = vmax.f32 %v1029, 0.0
      %v1084 = vmax.f32 %v1030, 0.0
      %v1085 = vmax.f32 %v1031, 0.0
      %v1086 = vmax.f32 %v1032, 0.0
      %v1087 = vmax.f32 %v1033, 0.0
      %v1088 = vmax.f32 %v1034, 0.0
      %v1089 = vmax.f32 %v1035, 0.0
      %v1090 = vmax.f32 %v1036, 0.0
      %v1091 = vmax.f32 %v1037, 0.0
      %v1092 = vmax.f32 %v1038, 0.0
      %v1093 = vmin.f32 %v1039, 6.0
      %v1094 = vmin.f32 %v1040, 6.0
      %v1095 = vmin.f32 %v1041, 6.0
      %v1096 = vmin.f32 %v1042, 6.0
      %v1097 = vmin.f32 %v1043, 6.0
      %v1098 = vmin.f32 %v1044, 6.0
      %v1099 = vmin.f32 %v1045, 6.0
      %v1100 = vmin.f32 %v1046, 6.0
      %v1101 = vmin.f32 %v1047, 6.0
      %v1102 = vmin.f32 %v1048, 6.0
      %v1103 = vmin.f32 %v1049, 6.0
      %v1104 = vmin.f32 %v1050, 6.0
      %v1105 = vmin.f32 %v1051, 6.0
      %v1106 = vmin.f32 %v1052, 6.0
      %v1107 = vmin.f32 %v1053, 6.0
      %v1108 = vmin.f32 %v1054, 6.0
      %v1109 = vmin.f32 %v1055, 6.0
      %v1110 = vmin.f32 %v1056, 6.0
      %v1111 = vmin.f32 %v1057, 6.0
      %v1112 = vmin.f32 %v1058, 6.0
      %v1113 = vmin.f32 %v1059, 6.0
      %v1114 = vmin.f32 %v1060, 6.0
      %v1115 = vmin.f32 %v1061, 6.0
      %v1116 = vmin.f32 %v1062, 6.0
      %v1117 = vmin.f32 %v1063, 6.0
      %v1118 = vmin.f32 %v1064, 6.0
      %v1119 = vmin.f32 %v1065, 6.0
      %v1120 = vmin.f32 %v1066, 6.0
      %v1121 = vmin.f32 %v1067, 6.0
      %v1122 = vmin.f32 %v1068, 6.0
      %v1123 = vmin.f32 %v1069, 6.0
      %v1124 = vmin.f32 %v1070, 6.0
      %v1125 = vmin.f32 %v1071, 6.0
      %v1126 = vmin.f32 %v1072, 6.0
      %v1127 = vmin.f32 %v1073, 6.0
      %v1128 = vmin.f32 %v1074, 6.0
      %v1129 = vmin.f32 %v1075, 6.0
      %v1130 = vmin.f32 %v1076, 6.0
      %v1131 = vmin.f32 %v1077, 6.0
      %v1132 = vmin.f32 %v1078, 6.0
      %v1133 = vmin.f32 %v1079, 6.0
      %v1134 = vmin.f32 %v1080, 6.0
      %v1135 = vmin.f32 %v1081, 6.0
      %v1136 = vmin.f32 %v1082, 6.0
      %v1137 = vmin.f32 %v1083, 6.0
      %v1138 = vmin.f32 %v1084, 6.0
      %v1139 = vmin.f32 %v1085, 6.0
      %v1140 = vmin.f32 %v1086, 6.0
      %v1141 = vmin.f32 %v1087, 6.0
      %v1142 = vmin.f32 %v1088, 6.0
      %v1143 = vmin.f32 %v1089, 6.0
      %v1144 = vmin.f32 %v1090, 6.0
      %v1145 = vmin.f32 %v1091, 6.0
      %v1146 = vmin.f32 %v1092, 6.0
      %v1147 = vlaneseq
      %v1148 = vshrl.u32 %v1147, 7
      %v1149 = vadd.s32 %v1148, 8
      %v1150 = vadd.s32 %v1148, 16
      %vm1151 = vcmp.ge.s32.totalorder %v1148, 1
      %vm1152 = vcmp.ge.s32.totalorder %v1149, 1
      %vm1153 = vcmp.ge.s32.totalorder %v1150, 1
      %vm1154 = vmand 0, %vm1151
      %vm1155 = vmand 0, %vm1152
      %vm1156 = vmand 0, %vm1153
      %vm1157 = vmand 1, %vm1151
      %vm1158 = vmand 1, %vm1152
      %vm1159 = vmand 1, %vm1153
      %vm1160 = vcmp.le.s32.totalorder %v1148, 16
      %vm1161 = vcmp.le.s32.totalorder %v1149, 16
      %vm1162 = vcmp.le.s32.totalorder %v1150, 16
      %vm1163 = vmand %vm1154, %vm1160
      %vm1164 = vmand %vm1155, %vm1161
      %vm1165 = vmand %vm1156, %vm1162
      %vm1166 = vmand %vm1157, %vm1160
      %vm1167 = vmand %vm1158, %vm1161
      %vm1168 = vmand %vm1159, %vm1162
      %v1169 = vsel %vm1163, %v1093, 0.0
      %v1170 = vsel %vm1164, %v1094, 0.0
      %v1171 = vsel %vm1165, %v1095, 0.0
      %v1172 = vsel %vm1166, %v1096, 0.0
      %v1173 = vsel %vm1167, %v1097, 0.0
      %v1174 = vsel %vm1168, %v1098, 0.0
      %v1175 = vsel %vm1166, %v1099, 0.0
      %v1176 = vsel %vm1167, %v1100, 0.0
      %v1177 = vsel %vm1168, %v1101, 0.0
      %v1178 = vsel %vm1166, %v1102, 0.0
      %v1179 = vsel %vm1167, %v1103, 0.0
      %v1180 = vsel %vm1168, %v1104, 0.0
      %v1181 = vsel %vm1166, %v1105, 0.0
      %v1182 = vsel %vm1167, %v1106, 0.0
      %v1183 = vsel %vm1168, %v1107, 0.0
      %v1184 = vsel %vm1166, %v1108, 0.0
      %v1185 = vsel %vm1167, %v1109, 0.0
      %v1186 = vsel %vm1168, %v1110, 0.0
      %v1187 = vsel %vm1166, %v1111, 0.0
      %v1188 = vsel %vm1167, %v1112, 0.0
      %v1189 = vsel %vm1168, %v1113, 0.0
      %v1190 = vsel %vm1166, %v1114, 0.0
      %v1191 = vsel %vm1167, %v1115, 0.0
      %v1192 = vsel %vm1168, %v1116, 0.0
      %v1193 = vsel %vm1166, %v1117, 0.0
      %v1194 = vsel %vm1167, %v1118, 0.0
      %v1195 = vsel %vm1168, %v1119, 0.0
      %v1196 = vsel %vm1166, %v1120, 0.0
      %v1197 = vsel %vm1167, %v1121, 0.0
      %v1198 = vsel %vm1168, %v1122, 0.0
      %v1199 = vsel %vm1166, %v1123, 0.0
      %v1200 = vsel %vm1167, %v1124, 0.0
      %v1201 = vsel %vm1168, %v1125, 0.0
      %v1202 = vsel %vm1166, %v1126, 0.0
      %v1203 = vsel %vm1167, %v1127, 0.0
      %v1204 = vsel %vm1168, %v1128, 0.0
      %v1205 = vsel %vm1166, %v1129, 0.0
      %v1206 = vsel %vm1167, %v1130, 0.0
      %v1207 = vsel %vm1168, %v1131, 0.0
      %v1208 = vsel %vm1166, %v1132, 0.0
      %v1209 = vsel %vm1167, %v1133, 0.0
      %v1210 = vsel %vm1168, %v1134, 0.0
      %v1211 = vsel %vm1166, %v1135, 0.0
      %v1212 = vsel %vm1167, %v1136, 0.0
      %v1213 = vsel %vm1168, %v1137, 0.0
      %v1214 = vsel %vm1166, %v1138, 0.0
      %v1215 = vsel %vm1167, %v1139, 0.0
      %v1216 = vsel %vm1168, %v1140, 0.0
      %v1217 = vsel %vm1166, %v1141, 0.0
      %v1218 = vsel %vm1167, %v1142, 0.0
      %v1219 = vsel %vm1168, %v1143, 0.0
      %v1220 = vsel %vm1163, %v1144, 0.0
      %v1221 = vsel %vm1164, %v1145, 0.0
      %v1222 = vsel %vm1165, %v1146, 0.0
      %v1223 = vld [vmem:[%s4] sm:$0x7]
      %v1224 = vld [vmem:[%s4 + $0x4] sm:$0x7]
      %v1225 = vld [vmem:[%s4 + $0x8] sm:$0x7]
      %v1226 = vlaneseq
      %v1227 = vshrl.u32 %v1226, 7
      %v1228 = vsub.s32 0, %v1227
      %v1229 = vrot.slane %v1223, %v1228
      %v1230 = vmul.f32 %v1169, %v1229
      %v1231 = vmul.f32 %v1170, %v1229
      %v1232 = vmul.f32 %v1172, %v1229
      %v1233 = vmul.f32 %v1173, %v1229
      %v1234 = vmul.f32 %v1175, %v1229
      %v1235 = vmul.f32 %v1176, %v1229
      %v1236 = vmul.f32 %v1178, %v1229
      %v1237 = vmul.f32 %v1179, %v1229
      %v1238 = vmul.f32 %v1181, %v1229
      %v1239 = vmul.f32 %v1182, %v1229
      %v1240 = vmul.f32 %v1184, %v1229
      %v1241 = vmul.f32 %v1185, %v1229
      %v1242 = vmul.f32 %v1187, %v1229
      %v1243 = vmul.f32 %v1188, %v1229
      %v1244 = vmul.f32 %v1190, %v1229
      %v1245 = vmul.f32 %v1191, %v1229
      %v1246 = vmul.f32 %v1193, %v1229
      %v1247 = vmul.f32 %v1194, %v1229
      %v1248 = vmul.f32 %v1196, %v1229
      %v1249 = vmul.f32 %v1197, %v1229
      %v1250 = vmul.f32 %v1199, %v1229
      %v1251 = vmul.f32 %v1200, %v1229
      %v1252 = vmul.f32 %v1202, %v1229
      %v1253 = vmul.f32 %v1203, %v1229
      %v1254 = vmul.f32 %v1205, %v1229
      %v1255 = vmul.f32 %v1206, %v1229
      %v1256 = vmul.f32 %v1208, %v1229
      %v1257 = vmul.f32 %v1209, %v1229
      %v1258 = vmul.f32 %v1211, %v1229
      %v1259 = vmul.f32 %v1212, %v1229
      %v1260 = vmul.f32 %v1214, %v1229
      %v1261 = vmul.f32 %v1215, %v1229
      %v1262 = vadd.f32 %v1230, 0.0
      %v1263 = vadd.f32 %v1231, 0.0
      %v1264 = vadd.f32 %v1232, 0.0
      %v1265 = vadd.f32 %v1233, 0.0
      %v1266 = vadd.f32 %v1234, 0.0
      %v1267 = vadd.f32 %v1235, 0.0
      %v1268 = vadd.f32 %v1236, 0.0
      %v1269 = vadd.f32 %v1237, 0.0
      %v1270 = vadd.f32 %v1238, 0.0
      %v1271 = vadd.f32 %v1239, 0.0
      %v1272 = vadd.f32 %v1240, 0.0
      %v1273 = vadd.f32 %v1241, 0.0
      %v1274 = vadd.f32 %v1242, 0.0
      %v1275 = vadd.f32 %v1243, 0.0
      %v1276 = vadd.f32 %v1244, 0.0
      %v1277 = vadd.f32 %v1245, 0.0
      %v1278 = vadd.f32 %v1246, 0.0
      %v1279 = vadd.f32 %v1247, 0.0
      %v1280 = vadd.f32 %v1248, 0.0
      %v1281 = vadd.f32 %v1249, 0.0
      %v1282 = vadd.f32 %v1250, 0.0
      %v1283 = vadd.f32 %v1251, 0.0
      %v1284 = vadd.f32 %v1252, 0.0
      %v1285 = vadd.f32 %v1253, 0.0
      %v1286 = vadd.f32 %v1254, 0.0
      %v1287 = vadd.f32 %v1255, 0.0
      %v1288 = vadd.f32 %v1256, 0.0
      %v1289 = vadd.f32 %v1257, 0.0
      %v1290 = vadd.f32 %v1258, 0.0
      %v1291 = vadd.f32 %v1259, 0.0
      %v1292 = vadd.f32 %v1260, 0.0
      %v1293 = vadd.f32 %v1261, 0.0
      %v1294 = vlaneseq
      %v1295 = vshrl.u32 %v1294, 7
      %v1296 = vsub.s32 1, %v1295
      %v1297 = vrot.slane %v1223, %v1296
      %v1298 = vmul.f32 %v1169, %v1297
      %v1299 = vmul.f32 %v1170, %v1297
      %v1300 = vmul.f32 %v1171, %v1297
      %v1301 = vmul.f32 %v1172, %v1297
      %v1302 = vmul.f32 %v1173, %v1297
      %v1303 = vmul.f32 %v1174, %v1297
      %v1304 = vmul.f32 %v1175, %v1297
      %v1305 = vmul.f32 %v1176, %v1297
      %v1306 = vmul.f32 %v1177, %v1297
      %v1307 = vmul.f32 %v1178, %v1297
      %v1308 = vmul.f32 %v1179, %v1297
      %v1309 = vmul.f32 %v1180, %v1297
      %v1310 = vmul.f32 %v1181, %v1297
      %v1311 = vmul.f32 %v1182, %v1297
      %v1312 = vmul.f32 %v1183, %v1297
      %v1313 = vmul.f32 %v1184, %v1297
      %v1314 = vmul.f32 %v1185, %v1297
      %v1315 = vmul.f32 %v1186, %v1297
      %v1316 = vmul.f32 %v1187, %v1297
      %v1317 = vmul.f32 %v1188, %v1297
      %v1318 = vmul.f32 %v1189, %v1297
      %v1319 = vmul.f32 %v1190, %v1297
      %v1320 = vmul.f32 %v1191, %v1297
      %v1321 = vmul.f32 %v1192, %v1297
      %v1322 = vmul.f32 %v1193, %v1297
      %v1323 = vmul.f32 %v1194, %v1297
      %v1324 = vmul.f32 %v1195, %v1297
      %v1325 = vmul.f32 %v1196, %v1297
      %v1326 = vmul.f32 %v1197, %v1297
      %v1327 = vmul.f32 %v1198, %v1297
      %v1328 = vmul.f32 %v1199, %v1297
      %v1329 = vmul.f32 %v1200, %v1297
      %v1330 = vmul.f32 %v1201, %v1297
      %v1331 = vmul.f32 %v1202, %v1297
      %v1332 = vmul.f32 %v1203, %v1297
      %v1333 = vmul.f32 %v1204, %v1297
      %v1334 = vmul.f32 %v1205, %v1297
      %v1335 = vmul.f32 %v1206, %v1297
      %v1336 = vmul.f32 %v1207, %v1297
      %v1337 = vmul.f32 %v1208, %v1297
      %v1338 = vmul.f32 %v1209, %v1297
      %v1339 = vmul.f32 %v1210, %v1297
      %v1340 = vmul.f32 %v1211, %v1297
      %v1341 = vmul.f32 %v1212, %v1297
      %v1342 = vmul.f32 %v1213, %v1297
      %v1343 = vmul.f32 %v1214, %v1297
      %v1344 = vmul.f32 %v1215, %v1297
      %v1345 = vmul.f32 %v1216, %v1297
      %vm1394 = vcmask 1046528
      %v1395 = vrot.slane %v1298, 1
      %v1396 = vrot.slane %v1299, 1
      %v1397 = vsel %vm1394, %v1395, %v1396
      %v1398 = vrot.slane %v1300, 1
      %v1399 = vsel %vm1394, %v1396, %v1398
      %v1400 = vrot.slane %v1301, 1
      %v1401 = vrot.slane %v1302, 1
      %v1402 = vsel %vm1394, %v1400, %v1401
      %v1403 = vrot.slane %v1303, 1
      %v1404 = vsel %vm1394, %v1401, %v1403
      %v1405 = vrot.slane %v1304, 1
      %v1406 = vrot.slane %v1305, 1
      %v1407 = vsel %vm1394, %v1405, %v1406
      %v1408 = vrot.slane %v1306, 1
      %v1409 = vsel %vm1394, %v1406, %v1408
      %v1410 = vrot.slane %v1307, 1
      %v1411 = vrot.slane %v1308, 1
      %v1412 = vsel %vm1394, %v1410, %v1411
      %v1413 = vrot.slane %v1309, 1
      %v1414 = vsel %vm1394, %v1411, %v1413
      %v1415 = vrot.slane %v1310, 1
      %v1416 = vrot.slane %v1311, 1
      %v1417 = vsel %vm1394, %v1415, %v1416
      %v1418 = vrot.slane %v1312, 1
      %v1419 = vsel %vm1394, %v1416, %v1418
      %v1420 = vrot.slane %v1313, 1
      %v1421 = vrot.slane %v1314, 1
      %v1422 = vsel %vm1394, %v1420, %v1421
      %v1423 = vrot.slane %v1315, 1
      %v1424 = vsel %vm1394, %v1421, %v1423
      %v1425 = vrot.slane %v1316, 1
      %v1426 = vrot.slane %v1317, 1
      %v1427 = vsel %vm1394, %v1425, %v1426
      %v1428 = vrot.slane %v1318, 1
      %v1429 = vsel %vm1394, %v1426, %v1428
      %v1430 = vrot.slane %v1319, 1
      %v1431 = vrot.slane %v1320, 1
      %v1432 = vsel %vm1394, %v1430, %v1431
      %v1433 = vrot.slane %v1321, 1
      %v1434 = vsel %vm1394, %v1431, %v1433
      %v1435 = vrot.slane %v1322, 1
      %v1436 = vrot.slane %v1323, 1
      %v1437 = vsel %vm1394, %v1435, %v1436
      %v1438 = vrot.slane %v1324, 1
      %v1439 = vsel %vm1394, %v1436, %v1438
      %v1440 = vrot.slane %v1325, 1
      %v1441 = vrot.slane %v1326, 1
      %v1442 = vsel %vm1394, %v1440, %v1441
      %v1443 = vrot.slane %v1327, 1
      %v1444 = vsel %vm1394, %v1441, %v1443
      %v1445 = vrot.slane %v1328, 1
      %v1446 = vrot.slane %v1329, 1
      %v1447 = vsel %vm1394, %v1445, %v1446
      %v1448 = vrot.slane %v1330, 1
      %v1449 = vsel %vm1394, %v1446, %v1448
      %v1450 = vrot.slane %v1331, 1
      %v1451 = vrot.slane %v1332, 1
      %v1452 = vsel %vm1394, %v1450, %v1451
      %v1453 = vrot.slane %v1333, 1
      %v1454 = vsel %vm1394, %v1451, %v1453
      %v1455 = vrot.slane %v1334, 1
      %v1456 = vrot.slane %v1335, 1
      %v1457 = vsel %vm1394, %v1455, %v1456
      %v1458 = vrot.slane %v1336, 1
      %v1459 = vsel %vm1394, %v1456, %v1458
      %v1460 = vrot.slane %v1337, 1
      %v1461 = vrot.slane %v1338, 1
      %v1462 = vsel %vm1394, %v1460, %v1461
      %v1463 = vrot.slane %v1339, 1
      %v1464 = vsel %vm1394, %v1461, %v1463
      %v1465 = vrot.slane %v1340, 1
      %v1466 = vrot.slane %v1341, 1
      %v1467 = vsel %vm1394, %v1465, %v1466
      %v1468 = vrot.slane %v1342, 1
      %v1469 = vsel %vm1394, %v1466, %v1468
      %v1470 = vrot.slane %v1343, 1
      %v1471 = vrot.slane %v1344, 1
      %v1472 = vsel %vm1394, %v1470, %v1471
      %v1473 = vrot.slane %v1345, 1
      %v1474 = vsel %vm1394, %v1471, %v1473
      %v1507 = vadd.f32 %v1262, %v1397
      %v1508 = vadd.f32 %v1263, %v1399
      %v1509 = vadd.f32 %v1264, %v1402
      %v1510 = vadd.f32 %v1265, %v1404
      %v1511 = vadd.f32 %v1266, %v1407
      %v1512 = vadd.f32 %v1267, %v1409
      %v1513 = vadd.f32 %v1268, %v1412
      %v1514 = vadd.f32 %v1269, %v1414
      %v1515 = vadd.f32 %v1270, %v1417
      %v1516 = vadd.f32 %v1271, %v1419
      %v1517 = vadd.f32 %v1272, %v1422
      %v1518 = vadd.f32 %v1273, %v1424
      %v1519 = vadd.f32 %v1274, %v1427
      %v1520 = vadd.f32 %v1275, %v1429
      %v1521 = vadd.f32 %v1276, %v1432
      %v1522 = vadd.f32 %v1277, %v1434
      %v1523 = vadd.f32 %v1278, %v1437
      %v1524 = vadd.f32 %v1279, %v1439
      %v1525 = vadd.f32 %v1280, %v1442
      %v1526 = vadd.f32 %v1281, %v1444
      %v1527 = vadd.f32 %v1282, %v1447
      %v1528 = vadd.f32 %v1283, %v1449
      %v1529 = vadd.f32 %v1284, %v1452
      %v1530 = vadd.f32 %v1285, %v1454
      %v1531 = vadd.f32 %v1286, %v1457
      %v1532 = vadd.f32 %v1287, %v1459
      %v1533 = vadd.f32 %v1288, %v1462
      %v1534 = vadd.f32 %v1289, %v1464
      %v1535 = vadd.f32 %v1290, %v1467
      %v1536 = vadd.f32 %v1291, %v1469
      %v1537 = vadd.f32 %v1292, %v1472
      %v1538 = vadd.f32 %v1293, %v1474
      %v1539 = vlaneseq
      %v1540 = vshrl.u32 %v1539, 7
      %v1541 = vsub.s32 2, %v1540
      %v1542 = vrot.slane %v1223, %v1541
      %v1543 = vmul.f32 %v1169, %v1542
      %v1544 = vmul.f32 %v1170, %v1542
      %v1545 = vmul.f32 %v1171, %v1542
      %v1546 = vmul.f32 %v1172, %v1542
      %v1547 = vmul.f32 %v1173, %v1542
      %v1548 = vmul.f32 %v1174, %v1542
      %v1549 = vmul.f32 %v1175, %v1542
      %v1550 = vmul.f32 %v1176, %v1542
      %v1551 = vmul.f32 %v1177, %v1542
      %v1552 = vmul.f32 %v1178, %v1542
      %v1553 = vmul.f32 %v1179, %v1542
      %v1554 = vmul.f32 %v1180, %v1542
      %v1555 = vmul.f32 %v1181, %v1542
      %v1556 = vmul.f32 %v1182, %v1542
      %v1557 = vmul.f32 %v1183, %v1542
      %v1558 = vmul.f32 %v1184, %v1542
      %v1559 = vmul.f32 %v1185, %v1542
      %v1560 = vmul.f32 %v1186, %v1542
      %v1561 = vmul.f32 %v1187, %v1542
      %v1562 = vmul.f32 %v1188, %v1542
      %v1563 = vmul.f32 %v1189, %v1542
      %v1564 = vmul.f32 %v1190, %v1542
      %v1565 = vmul.f32 %v1191, %v1542
      %v1566 = vmul.f32 %v1192, %v1542
      %v1567 = vmul.f32 %v1193, %v1542
      %v1568 = vmul.f32 %v1194, %v1542
      %v1569 = vmul.f32 %v1195, %v1542
      %v1570 = vmul.f32 %v1196, %v1542
      %v1571 = vmul.f32 %v1197, %v1542
      %v1572 = vmul.f32 %v1198, %v1542
      %v1573 = vmul.f32 %v1199, %v1542
      %v1574 = vmul.f32 %v1200, %v1542
      %v1575 = vmul.f32 %v1201, %v1542
      %v1576 = vmul.f32 %v1202, %v1542
      %v1577 = vmul.f32 %v1203, %v1542
      %v1578 = vmul.f32 %v1204, %v1542
      %v1579 = vmul.f32 %v1205, %v1542
      %v1580 = vmul.f32 %v1206, %v1542
      %v1581 = vmul.f32 %v1207, %v1542
      %v1582 = vmul.f32 %v1208, %v1542
      %v1583 = vmul.f32 %v1209, %v1542
      %v1584 = vmul.f32 %v1210, %v1542
      %v1585 = vmul.f32 %v1211, %v1542
      %v1586 = vmul.f32 %v1212, %v1542
      %v1587 = vmul.f32 %v1213, %v1542
      %v1588 = vmul.f32 %v1214, %v1542
      %v1589 = vmul.f32 %v1215, %v1542
      %v1590 = vmul.f32 %v1216, %v1542
      %vm1639 = vcmask 1045504
      %v1640 = vrot.slane %v1543, 2
      %v1641 = vrot.slane %v1544, 2
      %v1642 = vsel %vm1639, %v1640, %v1641
      %v1643 = vrot.slane %v1545, 2
      %v1644 = vsel %vm1639, %v1641, %v1643
      %v1645 = vrot.slane %v1546, 2
      %v1646 = vrot.slane %v1547, 2
      %v1647 = vsel %vm1639, %v1645, %v1646
      %v1648 = vrot.slane %v1548, 2
      %v1649 = vsel %vm1639, %v1646, %v1648
      %v1650 = vrot.slane %v1549, 2
      %v1651 = vrot.slane %v1550, 2
      %v1652 = vsel %vm1639, %v1650, %v1651
      %v1653 = vrot.slane %v1551, 2
      %v1654 = vsel %vm1639, %v1651, %v1653
      %v1655 = vrot.slane %v1552, 2
      %v1656 = vrot.slane %v1553, 2
      %v1657 = vsel %vm1639, %v1655, %v1656
      %v1658 = vrot.slane %v1554, 2
      %v1659 = vsel %vm1639, %v1656, %v1658
      %v1660 = vrot.slane %v1555, 2
      %v1661 = vrot.slane %v1556, 2
      %v1662 = vsel %vm1639, %v1660, %v1661
      %v1663 = vrot.slane %v1557, 2
      %v1664 = vsel %vm1639, %v1661, %v1663
      %v1665 = vrot.slane %v1558, 2
      %v1666 = vrot.slane %v1559, 2
      %v1667 = vsel %vm1639, %v1665, %v1666
      %v1668 = vrot.slane %v1560, 2
      %v1669 = vsel %vm1639, %v1666, %v1668
      %v1670 = vrot.slane %v1561, 2
      %v1671 = vrot.slane %v1562, 2
      %v1672 = vsel %vm1639, %v1670, %v1671
      %v1673 = vrot.slane %v1563, 2
      %v1674 = vsel %vm1639, %v1671, %v1673
      %v1675 = vrot.slane %v1564, 2
      %v1676 = vrot.slane %v1565, 2
      %v1677 = vsel %vm1639, %v1675, %v1676
      %v1678 = vrot.slane %v1566, 2
      %v1679 = vsel %vm1639, %v1676, %v1678
      %v1680 = vrot.slane %v1567, 2
      %v1681 = vrot.slane %v1568, 2
      %v1682 = vsel %vm1639, %v1680, %v1681
      %v1683 = vrot.slane %v1569, 2
      %v1684 = vsel %vm1639, %v1681, %v1683
      %v1685 = vrot.slane %v1570, 2
      %v1686 = vrot.slane %v1571, 2
      %v1687 = vsel %vm1639, %v1685, %v1686
      %v1688 = vrot.slane %v1572, 2
      %v1689 = vsel %vm1639, %v1686, %v1688
      %v1690 = vrot.slane %v1573, 2
      %v1691 = vrot.slane %v1574, 2
      %v1692 = vsel %vm1639, %v1690, %v1691
      %v1693 = vrot.slane %v1575, 2
      %v1694 = vsel %vm1639, %v1691, %v1693
      %v1695 = vrot.slane %v1576, 2
      %v1696 = vrot.slane %v1577, 2
      %v1697 = vsel %vm1639, %v1695, %v1696
      %v1698 = vrot.slane %v1578, 2
      %v1699 = vsel %vm1639, %v1696, %v1698
      %v1700 = vrot.slane %v1579, 2
      %v1701 = vrot.slane %v1580, 2
      %v1702 = vsel %vm1639, %v1700, %v1701
      %v1703 = vrot.slane %v1581, 2
      %v1704 = vsel %vm1639, %v1701, %v1703
      %v1705 = vrot.slane %v1582, 2
      %v1706 = vrot.slane %v1583, 2
      %v1707 = vsel %vm1639, %v1705, %v1706
      %v1708 = vrot.slane %v1584, 2
      %v1709 = vsel %vm1639, %v1706, %v1708
      %v1710 = vrot.slane %v1585, 2
      %v1711 = vrot.slane %v1586, 2
      %v1712 = vsel %vm1639, %v1710, %v1711
      %v1713 = vrot.slane %v1587, 2
      %v1714 = vsel %vm1639, %v1711, %v1713
      %v1715 = vrot.slane %v1588, 2
      %v1716 = vrot.slane %v1589, 2
      %v1717 = vsel %vm1639, %v1715, %v1716
      %v1718 = vrot.slane %v1590, 2
      %v1719 = vsel %vm1639, %v1716, %v1718
      %v1752 = vadd.f32 %v1507, %v1642
      %v1753 = vadd.f32 %v1508, %v1644
      %v1754 = vadd.f32 %v1509, %v1647
      %v1755 = vadd.f32 %v1510, %v1649
      %v1756 = vadd.f32 %v1511, %v1652
      %v1757 = vadd.f32 %v1512, %v1654
      %v1758 = vadd.f32 %v1513, %v1657
      %v1759 = vadd.f32 %v1514, %v1659
      %v1760 = vadd.f32 %v1515, %v1662
      %v1761 = vadd.f32 %v1516, %v1664
      %v1762 = vadd.f32 %v1517, %v1667
      %v1763 = vadd.f32 %v1518, %v1669
      %v1764 = vadd.f32 %v1519, %v1672
      %v1765 = vadd.f32 %v1520, %v1674
      %v1766 = vadd.f32 %v1521, %v1677
      %v1767 = vadd.f32 %v1522, %v1679
      %v1768 = vadd.f32 %v1523, %v1682
      %v1769 = vadd.f32 %v1524, %v1684
      %v1770 = vadd.f32 %v1525, %v1687
      %v1771 = vadd.f32 %v1526, %v1689
      %v1772 = vadd.f32 %v1527, %v1692
      %v1773 = vadd.f32 %v1528, %v1694
      %v1774 = vadd.f32 %v1529, %v1697
      %v1775 = vadd.f32 %v1530, %v1699
      %v1776 = vadd.f32 %v1531, %v1702
      %v1777 = vadd.f32 %v1532, %v1704
      %v1778 = vadd.f32 %v1533, %v1707
      %v1779 = vadd.f32 %v1534, %v1709
      %v1780 = vadd.f32 %v1535, %v1712
      %v1781 = vadd.f32 %v1536, %v1714
      %v1782 = vadd.f32 %v1537, %v1717
      %v1783 = vadd.f32 %v1538, %v1719
      %v1784 = vlaneseq
      %v1785 = vshrl.u32 %v1784, 7
      %v1786 = vsub.s32 0, %v1785
      %v1787 = vrot.slane %v1224, %v1786
      %v1788 = vmul.f32 %v1172, %v1787
      %v1789 = vmul.f32 %v1173, %v1787
      %v1790 = vmul.f32 %v1175, %v1787
      %v1791 = vmul.f32 %v1176, %v1787
      %v1792 = vmul.f32 %v1178, %v1787
      %v1793 = vmul.f32 %v1179, %v1787
      %v1794 = vmul.f32 %v1181, %v1787
      %v1795 = vmul.f32 %v1182, %v1787
      %v1796 = vmul.f32 %v1184, %v1787
      %v1797 = vmul.f32 %v1185, %v1787
      %v1798 = vmul.f32 %v1187, %v1787
      %v1799 = vmul.f32 %v1188, %v1787
      %v1800 = vmul.f32 %v1190, %v1787
      %v1801 = vmul.f32 %v1191, %v1787
      %v1802 = vmul.f32 %v1193, %v1787
      %v1803 = vmul.f32 %v1194, %v1787
      %v1804 = vmul.f32 %v1196, %v1787
      %v1805 = vmul.f32 %v1197, %v1787
      %v1806 = vmul.f32 %v1199, %v1787
      %v1807 = vmul.f32 %v1200, %v1787
      %v1808 = vmul.f32 %v1202, %v1787
      %v1809 = vmul.f32 %v1203, %v1787
      %v1810 = vmul.f32 %v1205, %v1787
      %v1811 = vmul.f32 %v1206, %v1787
      %v1812 = vmul.f32 %v1208, %v1787
      %v1813 = vmul.f32 %v1209, %v1787
      %v1814 = vmul.f32 %v1211, %v1787
      %v1815 = vmul.f32 %v1212, %v1787
      %v1816 = vmul.f32 %v1214, %v1787
      %v1817 = vmul.f32 %v1215, %v1787
      %v1818 = vmul.f32 %v1217, %v1787
      %v1819 = vmul.f32 %v1218, %v1787
      %v1820 = vadd.f32 %v1752, %v1788
      %v1821 = vadd.f32 %v1753, %v1789
      %v1822 = vadd.f32 %v1754, %v1790
      %v1823 = vadd.f32 %v1755, %v1791
      %v1824 = vadd.f32 %v1756, %v1792
      %v1825 = vadd.f32 %v1757, %v1793
      %v1826 = vadd.f32 %v1758, %v1794
      %v1827 = vadd.f32 %v1759, %v1795
      %v1828 = vadd.f32 %v1760, %v1796
      %v1829 = vadd.f32 %v1761, %v1797
      %v1830 = vadd.f32 %v1762, %v1798
      %v1831 = vadd.f32 %v1763, %v1799
      %v1832 = vadd.f32 %v1764, %v1800
      %v1833 = vadd.f32 %v1765, %v1801
      %v1834 = vadd.f32 %v1766, %v1802
      %v1835 = vadd.f32 %v1767, %v1803
      %v1836 = vadd.f32 %v1768, %v1804
      %v1837 = vadd.f32 %v1769, %v1805
      %v1838 = vadd.f32 %v1770, %v1806
      %v1839 = vadd.f32 %v1771, %v1807
      %v1840 = vadd.f32 %v1772, %v1808
      %v1841 = vadd.f32 %v1773, %v1809
      %v1842 = vadd.f32 %v1774, %v1810
      %v1843 = vadd.f32 %v1775, %v1811
      %v1844 = vadd.f32 %v1776, %v1812
      %v1845 = vadd.f32 %v1777, %v1813
      %v1846 = vadd.f32 %v1778, %v1814
      %v1847 = vadd.f32 %v1779, %v1815
      %v1848 = vadd.f32 %v1780, %v1816
      %v1849 = vadd.f32 %v1781, %v1817
      %v1850 = vadd.f32 %v1782, %v1818
      %v1851 = vadd.f32 %v1783, %v1819
      %v1852 = vlaneseq
      %v1853 = vshrl.u32 %v1852, 7
      %v1854 = vsub.s32 1, %v1853
      %v1855 = vrot.slane %v1224, %v1854
      %v1856 = vmul.f32 %v1172, %v1855
      %v1857 = vmul.f32 %v1173, %v1855
      %v1858 = vmul.f32 %v1174, %v1855
      %v1859 = vmul.f32 %v1175, %v1855
      %v1860 = vmul.f32 %v1176, %v1855
      %v1861 = vmul.f32 %v1177, %v1855
      %v1862 = vmul.f32 %v1178, %v1855
      %v1863 = vmul.f32 %v1179, %v1855
      %v1864 = vmul.f32 %v1180, %v1855
      %v1865 = vmul.f32 %v1181, %v1855
      %v1866 = vmul.f32 %v1182, %v1855
      %v1867 = vmul.f32 %v1183, %v1855
      %v1868 = vmul.f32 %v1184, %v1855
      %v1869 = vmul.f32 %v1185, %v1855
      %v1870 = vmul.f32 %v1186, %v1855
      %v1871 = vmul.f32 %v1187, %v1855
      %v1872 = vmul.f32 %v1188, %v1855
      %v1873 = vmul.f32 %v1189, %v1855
      %v1874 = vmul.f32 %v1190, %v1855
      %v1875 = vmul.f32 %v1191, %v1855
      %v1876 = vmul.f32 %v1192, %v1855
      %v1877 = vmul.f32 %v1193, %v1855
      %v1878 = vmul.f32 %v1194, %v1855
      %v1879 = vmul.f32 %v1195, %v1855
      %v1880 = vmul.f32 %v1196, %v1855
      %v1881 = vmul.f32 %v1197, %v1855
      %v1882 = vmul.f32 %v1198, %v1855
      %v1883 = vmul.f32 %v1199, %v1855
      %v1884 = vmul.f32 %v1200, %v1855
      %v1885 = vmul.f32 %v1201, %v1855
      %v1886 = vmul.f32 %v1202, %v1855
      %v1887 = vmul.f32 %v1203, %v1855
      %v1888 = vmul.f32 %v1204, %v1855
      %v1889 = vmul.f32 %v1205, %v1855
      %v1890 = vmul.f32 %v1206, %v1855
      %v1891 = vmul.f32 %v1207, %v1855
      %v1892 = vmul.f32 %v1208, %v1855
      %v1893 = vmul.f32 %v1209, %v1855
      %v1894 = vmul.f32 %v1210, %v1855
      %v1895 = vmul.f32 %v1211, %v1855
      %v1896 = vmul.f32 %v1212, %v1855
      %v1897 = vmul.f32 %v1213, %v1855
      %v1898 = vmul.f32 %v1214, %v1855
      %v1899 = vmul.f32 %v1215, %v1855
      %v1900 = vmul.f32 %v1216, %v1855
      %v1901 = vmul.f32 %v1217, %v1855
      %v1902 = vmul.f32 %v1218, %v1855
      %v1903 = vmul.f32 %v1219, %v1855
      %v1952 = vrot.slane %v1856, 1
      %v1953 = vrot.slane %v1857, 1
      %v1954 = vsel %vm1394, %v1952, %v1953
      %v1955 = vrot.slane %v1858, 1
      %v1956 = vsel %vm1394, %v1953, %v1955
      %v1957 = vrot.slane %v1859, 1
      %v1958 = vrot.slane %v1860, 1
      %v1959 = vsel %vm1394, %v1957, %v1958
      %v1960 = vrot.slane %v1861, 1
      %v1961 = vsel %vm1394, %v1958, %v1960
      %v1962 = vrot.slane %v1862, 1
      %v1963 = vrot.slane %v1863, 1
      %v1964 = vsel %vm1394, %v1962, %v1963
      %v1965 = vrot.slane %v1864, 1
      %v1966 = vsel %vm1394, %v1963, %v1965
      %v1967 = vrot.slane %v1865, 1
      %v1968 = vrot.slane %v1866, 1
      %v1969 = vsel %vm1394, %v1967, %v1968
      %v1970 = vrot.slane %v1867, 1
      %v1971 = vsel %vm1394, %v1968, %v1970
      %v1972 = vrot.slane %v1868, 1
      %v1973 = vrot.slane %v1869, 1
      %v1974 = vsel %vm1394, %v1972, %v1973
      %v1975 = vrot.slane %v1870, 1
      %v1976 = vsel %vm1394, %v1973, %v1975
      %v1977 = vrot.slane %v1871, 1
      %v1978 = vrot.slane %v1872, 1
      %v1979 = vsel %vm1394, %v1977, %v1978
      %v1980 = vrot.slane %v1873, 1
      %v1981 = vsel %vm1394, %v1978, %v1980
      %v1982 = vrot.slane %v1874, 1
      %v1983 = vrot.slane %v1875, 1
      %v1984 = vsel %vm1394, %v1982, %v1983
      %v1985 = vrot.slane %v1876, 1
      %v1986 = vsel %vm1394, %v1983, %v1985
      %v1987 = vrot.slane %v1877, 1
      %v1988 = vrot.slane %v1878, 1
      %v1989 = vsel %vm1394, %v1987, %v1988
      %v1990 = vrot.slane %v1879, 1
      %v1991 = vsel %vm1394, %v1988, %v1990
      %v1992 = vrot.slane %v1880, 1
      %v1993 = vrot.slane %v1881, 1
      %v1994 = vsel %vm1394, %v1992, %v1993
      %v1995 = vrot.slane %v1882, 1
      %v1996 = vsel %vm1394, %v1993, %v1995
      %v1997 = vrot.slane %v1883, 1
      %v1998 = vrot.slane %v1884, 1
      %v1999 = vsel %vm1394, %v1997, %v1998
      %v2000 = vrot.slane %v1885, 1
      %v2001 = vsel %vm1394, %v1998, %v2000
      %v2002 = vrot.slane %v1886, 1
      %v2003 = vrot.slane %v1887, 1
      %v2004 = vsel %vm1394, %v2002, %v2003
      %v2005 = vrot.slane %v1888, 1
      %v2006 = vsel %vm1394, %v2003, %v2005
      %v2007 = vrot.slane %v1889, 1
      %v2008 = vrot.slane %v1890, 1
      %v2009 = vsel %vm1394, %v2007, %v2008
      %v2010 = vrot.slane %v1891, 1
      %v2011 = vsel %vm1394, %v2008, %v2010
      %v2012 = vrot.slane %v1892, 1
      %v2013 = vrot.slane %v1893, 1
      %v2014 = vsel %vm1394, %v2012, %v2013
      %v2015 = vrot.slane %v1894, 1
      %v2016 = vsel %vm1394, %v2013, %v2015
      %v2017 = vrot.slane %v1895, 1
      %v2018 = vrot.slane %v1896, 1
      %v2019 = vsel %vm1394, %v2017, %v2018
      %v2020 = vrot.slane %v1897, 1
      %v2021 = vsel %vm1394, %v2018, %v2020
      %v2022 = vrot.slane %v1898, 1
      %v2023 = vrot.slane %v1899, 1
      %v2024 = vsel %vm1394, %v2022, %v2023
      %v2025 = vrot.slane %v1900, 1
      %v2026 = vsel %vm1394, %v2023, %v2025
      %v2027 = vrot.slane %v1901, 1
      %v2028 = vrot.slane %v1902, 1
      %v2029 = vsel %vm1394, %v2027, %v2028
      %v2030 = vrot.slane %v1903, 1
      %v2031 = vsel %vm1394, %v2028, %v2030
      %v2064 = vadd.f32 %v1820, %v1954
      %v2065 = vadd.f32 %v1821, %v1956
      %v2066 = vadd.f32 %v1822, %v1959
      %v2067 = vadd.f32 %v1823, %v1961
      %v2068 = vadd.f32 %v1824, %v1964
      %v2069 = vadd.f32 %v1825, %v1966
      %v2070 = vadd.f32 %v1826, %v1969
      %v2071 = vadd.f32 %v1827, %v1971
      %v2072 = vadd.f32 %v1828, %v1974
      %v2073 = vadd.f32 %v1829, %v1976
      %v2074 = vadd.f32 %v1830, %v1979
      %v2075 = vadd.f32 %v1831, %v1981
      %v2076 = vadd.f32 %v1832, %v1984
      %v2077 = vadd.f32 %v1833, %v1986
      %v2078 = vadd.f32 %v1834, %v1989
      %v2079 = vadd.f32 %v1835, %v1991
      %v2080 = vadd.f32 %v1836, %v1994
      %v2081 = vadd.f32 %v1837, %v1996
      %v2082 = vadd.f32 %v1838, %v1999
      %v2083 = vadd.f32 %v1839, %v2001
      %v2084 = vadd.f32 %v1840, %v2004
      %v2085 = vadd.f32 %v1841, %v2006
      %v2086 = vadd.f32 %v1842, %v2009
      %v2087 = vadd.f32 %v1843, %v2011
      %v2088 = vadd.f32 %v1844, %v2014
      %v2089 = vadd.f32 %v1845, %v2016
      %v2090 = vadd.f32 %v1846, %v2019
      %v2091 = vadd.f32 %v1847, %v2021
      %v2092 = vadd.f32 %v1848, %v2024
      %v2093 = vadd.f32 %v1849, %v2026
      %v2094 = vadd.f32 %v1850, %v2029
      %v2095 = vadd.f32 %v1851, %v2031
      %v2096 = vlaneseq
      %v2097 = vshrl.u32 %v2096, 7
      %v2098 = vsub.s32 2, %v2097
      %v2099 = vrot.slane %v1224, %v2098
      %v2100 = vmul.f32 %v1172, %v2099
      %v2101 = vmul.f32 %v1173, %v2099
      %v2102 = vmul.f32 %v1174, %v2099
      %v2103 = vmul.f32 %v1175, %v2099
      %v2104 = vmul.f32 %v1176, %v2099
      %v2105 = vmul.f32 %v1177, %v2099
      %v2106 = vmul.f32 %v1178, %v2099
      %v2107 = vmul.f32 %v1179, %v2099
      %v2108 = vmul.f32 %v1180, %v2099
      %v2109 = vmul.f32 %v1181, %v2099
      %v2110 = vmul.f32 %v1182, %v2099
      %v2111 = vmul.f32 %v1183, %v2099
      %v2112 = vmul.f32 %v1184, %v2099
      %v2113 = vmul.f32 %v1185, %v2099
      %v2114 = vmul.f32 %v1186, %v2099
      %v2115 = vmul.f32 %v1187, %v2099
      %v2116 = vmul.f32 %v1188, %v2099
      %v2117 = vmul.f32 %v1189, %v2099
      %v2118 = vmul.f32 %v1190, %v2099
      %v2119 = vmul.f32 %v1191, %v2099
      %v2120 = vmul.f32 %v1192, %v2099
      %v2121 = vmul.f32 %v1193, %v2099
      %v2122 = vmul.f32 %v1194, %v2099
      %v2123 = vmul.f32 %v1195, %v2099
      %v2124 = vmul.f32 %v1196, %v2099
      %v2125 = vmul.f32 %v1197, %v2099
      %v2126 = vmul.f32 %v1198, %v2099
      %v2127 = vmul.f32 %v1199, %v2099
      %v2128 = vmul.f32 %v1200, %v2099
      %v2129 = vmul.f32 %v1201, %v2099
      %v2130 = vmul.f32 %v1202, %v2099
      %v2131 = vmul.f32 %v1203, %v2099
      %v2132 = vmul.f32 %v1204, %v2099
      %v2133 = vmul.f32 %v1205, %v2099
      %v2134 = vmul.f32 %v1206, %v2099
      %v2135 = vmul.f32 %v1207, %v2099
      %v2136 = vmul.f32 %v1208, %v2099
      %v2137 = vmul.f32 %v1209, %v2099
      %v2138 = vmul.f32 %v1210, %v2099
      %v2139 = vmul.f32 %v1211, %v2099
      %v2140 = vmul.f32 %v1212, %v2099
      %v2141 = vmul.f32 %v1213, %v2099
      %v2142 = vmul.f32 %v1214, %v2099
      %v2143 = vmul.f32 %v1215, %v2099
      %v2144 = vmul.f32 %v1216, %v2099
      %v2145 = vmul.f32 %v1217, %v2099
      %v2146 = vmul.f32 %v1218, %v2099
      %v2147 = vmul.f32 %v1219, %v2099
      %v2196 = vrot.slane %v2100, 2
      %v2197 = vrot.slane %v2101, 2
      %v2198 = vsel %vm1639, %v2196, %v2197
      %v2199 = vrot.slane %v2102, 2
      %v2200 = vsel %vm1639, %v2197, %v2199
      %v2201 = vrot.slane %v2103, 2
      %v2202 = vrot.slane %v2104, 2
      %v2203 = vsel %vm1639, %v2201, %v2202
      %v2204 = vrot.slane %v2105, 2
      %v2205 = vsel %vm1639, %v2202, %v2204
      %v2206 = vrot.slane %v2106, 2
      %v2207 = vrot.slane %v2107, 2
      %v2208 = vsel %vm1639, %v2206, %v2207
      %v2209 = vrot.slane %v2108, 2
      %v2210 = vsel %vm1639, %v2207, %v2209
      %v2211 = vrot.slane %v2109, 2
      %v2212 = vrot.slane %v2110, 2
      %v2213 = vsel %vm1639, %v2211, %v2212
      %v2214 = vrot.slane %v2111, 2
      %v2215 = vsel %vm1639, %v2212, %v2214
      %v2216 = vrot.slane %v2112, 2
      %v2217 = vrot.slane %v2113, 2
      %v2218 = vsel %vm1639, %v2216, %v2217
      %v2219 = vrot.slane %v2114, 2
      %v2220 = vsel %vm1639, %v2217, %v2219
      %v2221 = vrot.slane %v2115, 2
      %v2222 = vrot.slane %v2116, 2
      %v2223 = vsel %vm1639, %v2221, %v2222
      %v2224 = vrot.slane %v2117, 2
      %v2225 = vsel %vm1639, %v2222, %v2224
      %v2226 = vrot.slane %v2118, 2
      %v2227 = vrot.slane %v2119, 2
      %v2228 = vsel %vm1639, %v2226, %v2227
      %v2229 = vrot.slane %v2120, 2
      %v2230 = vsel %vm1639, %v2227, %v2229
      %v2231 = vrot.slane %v2121, 2
      %v2232 = vrot.slane %v2122, 2
      %v2233 = vsel %vm1639, %v2231, %v2232
      %v2234 = vrot.slane %v2123, 2
      %v2235 = vsel %vm1639, %v2232, %v2234
      %v2236 = vrot.slane %v2124, 2
      %v2237 = vrot.slane %v2125, 2
      %v2238 = vsel %vm1639, %v2236, %v2237
      %v2239 = vrot.slane %v2126, 2
      %v2240 = vsel %vm1639, %v2237, %v2239
      %v2241 = vrot.slane %v2127, 2
      %v2242 = vrot.slane %v2128, 2
      %v2243 = vsel %vm1639, %v2241, %v2242
      %v2244 = vrot.slane %v2129, 2
      %v2245 = vsel %vm1639, %v2242, %v2244
      %v2246 = vrot.slane %v2130, 2
      %v2247 = vrot.slane %v2131, 2
      %v2248 = vsel %vm1639, %v2246, %v2247
      %v2249 = vrot.slane %v2132, 2
      %v2250 = vsel %vm1639, %v2247, %v2249
      %v2251 = vrot.slane %v2133, 2
      %v2252 = vrot.slane %v2134, 2
      %v2253 = vsel %vm1639, %v2251, %v2252
      %v2254 = vrot.slane %v2135, 2
      %v2255 = vsel %vm1639, %v2252, %v2254
      %v2256 = vrot.slane %v2136, 2
      %v2257 = vrot.slane %v2137, 2
      %v2258 = vsel %vm1639, %v2256, %v2257
      %v2259 = vrot.slane %v2138, 2
      %v2260 = vsel %vm1639, %v2257, %v2259
      %v2261 = vrot.slane %v2139, 2
      %v2262 = vrot.slane %v2140, 2
      %v2263 = vsel %vm1639, %v2261, %v2262
      %v2264 = vrot.slane %v2141, 2
      %v2265 = vsel %vm1639, %v2262, %v2264
      %v2266 = vrot.slane %v2142, 2
      %v2267 = vrot.slane %v2143, 2
      %v2268 = vsel %vm1639, %v2266, %v2267
      %v2269 = vrot.slane %v2144, 2
      %v2270 = vsel %vm1639, %v2267, %v2269
      %v2271 = vrot.slane %v2145, 2
      %v2272 = vrot.slane %v2146, 2
      %v2273 = vsel %vm1639, %v2271, %v2272
      %v2274 = vrot.slane %v2147, 2
      %v2275 = vsel %vm1639, %v2272, %v2274
      %v2308 = vadd.f32 %v2064, %v2198
      %v2309 = vadd.f32 %v2065, %v2200
      %v2310 = vadd.f32 %v2066, %v2203
      %v2311 = vadd.f32 %v2067, %v2205
      %v2312 = vadd.f32 %v2068, %v2208
      %v2313 = vadd.f32 %v2069, %v2210
      %v2314 = vadd.f32 %v2070, %v2213
      %v2315 = vadd.f32 %v2071, %v2215
      %v2316 = vadd.f32 %v2072, %v2218
      %v2317 = vadd.f32 %v2073, %v2220
      %v2318 = vadd.f32 %v2074, %v2223
      %v2319 = vadd.f32 %v2075, %v2225
      %v2320 = vadd.f32 %v2076, %v2228
      %v2321 = vadd.f32 %v2077, %v2230
      %v2322 = vadd.f32 %v2078, %v2233
      %v2323 = vadd.f32 %v2079, %v2235
      %v2324 = vadd.f32 %v2080, %v2238
      %v2325 = vadd.f32 %v2081, %v2240
      %v2326 = vadd.f32 %v2082, %v2243
      %v2327 = vadd.f32 %v2083, %v2245
      %v2328 = vadd.f32 %v2084, %v2248
      %v2329 = vadd.f32 %v2085, %v2250
      %v2330 = vadd.f32 %v2086, %v2253
      %v2331 = vadd.f32 %v2087, %v2255
      %v2332 = vadd.f32 %v2088, %v2258
      %v2333 = vadd.f32 %v2089, %v2260
      %v2334 = vadd.f32 %v2090, %v2263
      %v2335 = vadd.f32 %v2091, %v2265
      %v2336 = vadd.f32 %v2092, %v2268
      %v2337 = vadd.f32 %v2093, %v2270
      %v2338 = vadd.f32 %v2094, %v2273
      %v2339 = vadd.f32 %v2095, %v2275
      %v2340 = vlaneseq
      %v2341 = vshrl.u32 %v2340, 7
      %v2342 = vsub.s32 0, %v2341
      %v2343 = vrot.slane %v1225, %v2342
      %v2344 = vmul.f32 %v1175, %v2343
      %v2345 = vmul.f32 %v1176, %v2343
      %v2346 = vmul.f32 %v1178, %v2343
      %v2347 = vmul.f32 %v1179, %v2343
      %v2348 = vmul.f32 %v1181, %v2343
      %v2349 = vmul.f32 %v1182, %v2343
      %v2350 = vmul.f32 %v1184, %v2343
      %v2351 = vmul.f32 %v1185, %v2343
      %v2352 = vmul.f32 %v1187, %v2343
      %v2353 = vmul.f32 %v1188, %v2343
      %v2354 = vmul.f32 %v1190, %v2343
      %v2355 = vmul.f32 %v1191, %v2343
      %v2356 = vmul.f32 %v1193, %v2343
      %v2357 = vmul.f32 %v1194, %v2343
      %v2358 = vmul.f32 %v1196, %v2343
      %v2359 = vmul.f32 %v1197, %v2343
      %v2360 = vmul.f32 %v1199, %v2343
      %v2361 = vmul.f32 %v1200, %v2343
      %v2362 = vmul.f32 %v1202, %v2343
      %v2363 = vmul.f32 %v1203, %v2343
      %v2364 = vmul.f32 %v1205, %v2343
      %v2365 = vmul.f32 %v1206, %v2343
      %v2366 = vmul.f32 %v1208, %v2343
      %v2367 = vmul.f32 %v1209, %v2343
      %v2368 = vmul.f32 %v1211, %v2343
      %v2369 = vmul.f32 %v1212, %v2343
      %v2370 = vmul.f32 %v1214, %v2343
      %v2371 = vmul.f32 %v1215, %v2343
      %v2372 = vmul.f32 %v1217, %v2343
      %v2373 = vmul.f32 %v1218, %v2343
      %v2374 = vmul.f32 %v1220, %v2343
      %v2375 = vmul.f32 %v1221, %v2343
      %v2376 = vadd.f32 %v2308, %v2344
      %v2377 = vadd.f32 %v2309, %v2345
      %v2378 = vadd.f32 %v2310, %v2346
      %v2379 = vadd.f32 %v2311, %v2347
      %v2380 = vadd.f32 %v2312, %v2348
      %v2381 = vadd.f32 %v2313, %v2349
      %v2382 = vadd.f32 %v2314, %v2350
      %v2383 = vadd.f32 %v2315, %v2351
      %v2384 = vadd.f32 %v2316, %v2352
      %v2385 = vadd.f32 %v2317, %v2353
      %v2386 = vadd.f32 %v2318, %v2354
      %v2387 = vadd.f32 %v2319, %v2355
      %v2388 = vadd.f32 %v2320, %v2356
      %v2389 = vadd.f32 %v2321, %v2357
      %v2390 = vadd.f32 %v2322, %v2358
      %v2391 = vadd.f32 %v2323, %v2359
      %v2392 = vadd.f32 %v2324, %v2360
      %v2393 = vadd.f32 %v2325, %v2361
      %v2394 = vadd.f32 %v2326, %v2362
      %v2395 = vadd.f32 %v2327, %v2363
      %v2396 = vadd.f32 %v2328, %v2364
      %v2397 = vadd.f32 %v2329, %v2365
      %v2398 = vadd.f32 %v2330, %v2366
      %v2399 = vadd.f32 %v2331, %v2367
      %v2400 = vadd.f32 %v2332, %v2368
      %v2401 = vadd.f32 %v2333, %v2369
      %v2402 = vadd.f32 %v2334, %v2370
      %v2403 = vadd.f32 %v2335, %v2371
      %v2404 = vadd.f32 %v2336, %v2372
      %v2405 = vadd.f32 %v2337, %v2373
      %v2406 = vadd.f32 %v2338, %v2374
      %v2407 = vadd.f32 %v2339, %v2375
      %v2408 = vlaneseq
      %v2409 = vshrl.u32 %v2408, 7
      %v2410 = vsub.s32 1, %v2409
      %v2411 = vrot.slane %v1225, %v2410
      %v2412 = vmul.f32 %v1175, %v2411
      %v2413 = vmul.f32 %v1176, %v2411
      %v2414 = vmul.f32 %v1177, %v2411
      %v2415 = vmul.f32 %v1178, %v2411
      %v2416 = vmul.f32 %v1179, %v2411
      %v2417 = vmul.f32 %v1180, %v2411
      %v2418 = vmul.f32 %v1181, %v2411
      %v2419 = vmul.f32 %v1182, %v2411
      %v2420 = vmul.f32 %v1183, %v2411
      %v2421 = vmul.f32 %v1184, %v2411
      %v2422 = vmul.f32 %v1185, %v2411
      %v2423 = vmul.f32 %v1186, %v2411
      %v2424 = vmul.f32 %v1187, %v2411
      %v2425 = vmul.f32 %v1188, %v2411
      %v2426 = vmul.f32 %v1189, %v2411
      %v2427 = vmul.f32 %v1190, %v2411
      %v2428 = vmul.f32 %v1191, %v2411
      %v2429 = vmul.f32 %v1192, %v2411
      %v2430 = vmul.f32 %v1193, %v2411
      %v2431 = vmul.f32 %v1194, %v2411
      %v2432 = vmul.f32 %v1195, %v2411
      %v2433 = vmul.f32 %v1196, %v2411
      %v2434 = vmul.f32 %v1197, %v2411
      %v2435 = vmul.f32 %v1198, %v2411
      %v2436 = vmul.f32 %v1199, %v2411
      %v2437 = vmul.f32 %v1200, %v2411
      %v2438 = vmul.f32 %v1201, %v2411
      %v2439 = vmul.f32 %v1202, %v2411
      %v2440 = vmul.f32 %v1203, %v2411
      %v2441 = vmul.f32 %v1204, %v2411
      %v2442 = vmul.f32 %v1205, %v2411
      %v2443 = vmul.f32 %v1206, %v2411
      %v2444 = vmul.f32 %v1207, %v2411
      %v2445 = vmul.f32 %v1208, %v2411
      %v2446 = vmul.f32 %v1209, %v2411
      %v2447 = vmul.f32 %v1210, %v2411
      %v2448 = vmul.f32 %v1211, %v2411
      %v2449 = vmul.f32 %v1212, %v2411
      %v2450 = vmul.f32 %v1213, %v2411
      %v2451 = vmul.f32 %v1214, %v2411
      %v2452 = vmul.f32 %v1215, %v2411
      %v2453 = vmul.f32 %v1216, %v2411
      %v2454 = vmul.f32 %v1217, %v2411
      %v2455 = vmul.f32 %v1218, %v2411
      %v2456 = vmul.f32 %v1219, %v2411
      %v2457 = vmul.f32 %v1220, %v2411
      %v2458 = vmul.f32 %v1221, %v2411
      %v2459 = vmul.f32 %v1222, %v2411
      %v2508 = vrot.slane %v2412, 1
      %v2509 = vrot.slane %v2413, 1
      %v2510 = vsel %vm1394, %v2508, %v2509
      %v2511 = vrot.slane %v2414, 1
      %v2512 = vsel %vm1394, %v2509, %v2511
      %v2513 = vrot.slane %v2415, 1
      %v2514 = vrot.slane %v2416, 1
      %v2515 = vsel %vm1394, %v2513, %v2514
      %v2516 = vrot.slane %v2417, 1
      %v2517 = vsel %vm1394, %v2514, %v2516
      %v2518 = vrot.slane %v2418, 1
      %v2519 = vrot.slane %v2419, 1
      %v2520 = vsel %vm1394, %v2518, %v2519
      %v2521 = vrot.slane %v2420, 1
      %v2522 = vsel %vm1394, %v2519, %v2521
      %v2523 = vrot.slane %v2421, 1
      %v2524 = vrot.slane %v2422, 1
      %v2525 = vsel %vm1394, %v2523, %v2524
      %v2526 = vrot.slane %v2423, 1
      %v2527 = vsel %vm1394, %v2524, %v2526
      %v2528 = vrot.slane %v2424, 1
      %v2529 = vrot.slane %v2425, 1
      %v2530 = vsel %vm1394, %v2528, %v2529
      %v2531 = vrot.slane %v2426, 1
      %v2532 = vsel %vm1394, %v2529, %v2531
      %v2533 = vrot.slane %v2427, 1
      %v2534 = vrot.slane %v2428, 1
      %v2535 = vsel %vm1394, %v2533, %v2534
      %v2536 = vrot.slane %v2429, 1
      %v2537 = vsel %vm1394, %v2534, %v2536
      %v2538 = vrot.slane %v2430, 1
      %v2539 = vrot.slane %v2431, 1
      %v2540 = vsel %vm1394, %v2538, %v2539
      %v2541 = vrot.slane %v2432, 1
      %v2542 = vsel %vm1394, %v2539, %v2541
      %v2543 = vrot.slane %v2433, 1
      %v2544 = vrot.slane %v2434, 1
      %v2545 = vsel %vm1394, %v2543, %v2544
      %v2546 = vrot.slane %v2435, 1
      %v2547 = vsel %vm1394, %v2544, %v2546
      %v2548 = vrot.slane %v2436, 1
      %v2549 = vrot.slane %v2437, 1
      %v2550 = vsel %vm1394, %v2548, %v2549
      %v2551 = vrot.slane %v2438, 1
      %v2552 = vsel %vm1394, %v2549, %v2551
      %v2553 = vrot.slane %v2439, 1
      %v2554 = vrot.slane %v2440, 1
      %v2555 = vsel %vm1394, %v2553, %v2554
      %v2556 = vrot.slane %v2441, 1
      %v2557 = vsel %vm1394, %v2554, %v2556
      %v2558 = vrot.slane %v2442, 1
      %v2559 = vrot.slane %v2443, 1
      %v2560 = vsel %vm1394, %v2558, %v2559
      %v2561 = vrot.slane %v2444, 1
      %v2562 = vsel %vm1394, %v2559, %v2561
      %v2563 = vrot.slane %v2445, 1
      %v2564 = vrot.slane %v2446, 1
      %v2565 = vsel %vm1394, %v2563, %v2564
      %v2566 = vrot.slane %v2447, 1
      %v2567 = vsel %vm1394, %v2564, %v2566
      %v2568 = vrot.slane %v2448, 1
      %v2569 = vrot.slane %v2449, 1
      %v2570 = vsel %vm1394, %v2568, %v2569
      %v2571 = vrot.slane %v2450, 1
      %v2572 = vsel %vm1394, %v2569, %v2571
      %v2573 = vrot.slane %v2451, 1
      %v2574 = vrot.slane %v2452, 1
      %v2575 = vsel %vm1394, %v2573, %v2574
      %v2576 = vrot.slane %v2453, 1
      %v2577 = vsel %vm1394, %v2574, %v2576
      %v2578 = vrot.slane %v2454, 1
      %v2579 = vrot.slane %v2455, 1
      %v2580 = vsel %vm1394, %v2578, %v2579
      %v2581 = vrot.slane %v2456, 1
      %v2582 = vsel %vm1394, %v2579, %v2581
      %v2583 = vrot.slane %v2457, 1
      %v2584 = vrot.slane %v2458, 1
      %v2585 = vsel %vm1394, %v2583, %v2584
      %v2586 = vrot.slane %v2459, 1
      %v2587 = vsel %vm1394, %v2584, %v2586
      %v2620 = vadd.f32 %v2376, %v2510
      %v2621 = vadd.f32 %v2377, %v2512
      %v2622 = vadd.f32 %v2378, %v2515
      %v2623 = vadd.f32 %v2379, %v2517
      %v2624 = vadd.f32 %v2380, %v2520
      %v2625 = vadd.f32 %v2381, %v2522
      %v2626 = vadd.f32 %v2382, %v2525
      %v2627 = vadd.f32 %v2383, %v2527
      %v2628 = vadd.f32 %v2384, %v2530
      %v2629 = vadd.f32 %v2385, %v2532
      %v2630 = vadd.f32 %v2386, %v2535
      %v2631 = vadd.f32 %v2387, %v2537
      %v2632 = vadd.f32 %v2388, %v2540
      %v2633 = vadd.f32 %v2389, %v2542
      %v2634 = vadd.f32 %v2390, %v2545
      %v2635 = vadd.f32 %v2391, %v2547
      %v2636 = vadd.f32 %v2392, %v2550
      %v2637 = vadd.f32 %v2393, %v2552
      %v2638 = vadd.f32 %v2394, %v2555
      %v2639 = vadd.f32 %v2395, %v2557
      %v2640 = vadd.f32 %v2396, %v2560
      %v2641 = vadd.f32 %v2397, %v2562
      %v2642 = vadd.f32 %v2398, %v2565
      %v2643 = vadd.f32 %v2399, %v2567
      %v2644 = vadd.f32 %v2400, %v2570
      %v2645 = vadd.f32 %v2401, %v2572
      %v2646 = vadd.f32 %v2402, %v2575
      %v2647 = vadd.f32 %v2403, %v2577
      %v2648 = vadd.f32 %v2404, %v2580
      %v2649 = vadd.f32 %v2405, %v2582
      %v2650 = vadd.f32 %v2406, %v2585
      %v2651 = vadd.f32 %v2407, %v2587
      %v2652 = vlaneseq
      %v2653 = vshrl.u32 %v2652, 7
      %v2654 = vsub.s32 2, %v2653
      %v2655 = vrot.slane %v1225, %v2654
      %v2656 = vmul.f32 %v1175, %v2655
      %v2657 = vmul.f32 %v1176, %v2655
      %v2658 = vmul.f32 %v1177, %v2655
      %v2659 = vmul.f32 %v1178, %v2655
      %v2660 = vmul.f32 %v1179, %v2655
      %v2661 = vmul.f32 %v1180, %v2655
      %v2662 = vmul.f32 %v1181, %v2655
      %v2663 = vmul.f32 %v1182, %v2655
      %v2664 = vmul.f32 %v1183, %v2655
      %v2665 = vmul.f32 %v1184, %v2655
      %v2666 = vmul.f32 %v1185, %v2655
      %v2667 = vmul.f32 %v1186, %v2655
      %v2668 = vmul.f32 %v1187, %v2655
      %v2669 = vmul.f32 %v1188, %v2655
      %v2670 = vmul.f32 %v1189, %v2655
      %v2671 = vmul.f32 %v1190, %v2655
      %v2672 = vmul.f32 %v1191, %v2655
      %v2673 = vmul.f32 %v1192, %v2655
      %v2674 = vmul.f32 %v1193, %v2655
      %v2675 = vmul.f32 %v1194, %v2655
      %v2676 = vmul.f32 %v1195, %v2655
      %v2677 = vmul.f32 %v1196, %v2655
      %v2678 = vmul.f32 %v1197, %v2655
      %v2679 = vmul.f32 %v1198, %v2655
      %v2680 = vmul.f32 %v1199, %v2655
      %v2681 = vmul.f32 %v1200, %v2655
      %v2682 = vmul.f32 %v1201, %v2655
      %v2683 = vmul.f32 %v1202, %v2655
      %v2684 = vmul.f32 %v1203, %v2655
      %v2685 = vmul.f32 %v1204, %v2655
      %v2686 = vmul.f32 %v1205, %v2655
      %v2687 = vmul.f32 %v1206, %v2655
      %v2688 = vmul.f32 %v1207, %v2655
      %v2689 = vmul.f32 %v1208, %v2655
      %v2690 = vmul.f32 %v1209, %v2655
      %v2691 = vmul.f32 %v1210, %v2655
      %v2692 = vmul.f32 %v1211, %v2655
      %v2693 = vmul.f32 %v1212, %v2655
      %v2694 = vmul.f32 %v1213, %v2655
      %v2695 = vmul.f32 %v1214, %v2655
      %v2696 = vmul.f32 %v1215, %v2655
      %v2697 = vmul.f32 %v1216, %v2655
      %v2698 = vmul.f32 %v1217, %v2655
      %v2699 = vmul.f32 %v1218, %v2655
      %v2700 = vmul.f32 %v1219, %v2655
      %v2701 = vmul.f32 %v1220, %v2655
      %v2702 = vmul.f32 %v1221, %v2655
      %v2703 = vmul.f32 %v1222, %v2655
      %v2752 = vrot.slane %v2656, 2
      %v2753 = vrot.slane %v2657, 2
      %v2754 = vsel %vm1639, %v2752, %v2753
      %v2755 = vrot.slane %v2658, 2
      %v2756 = vsel %vm1639, %v2753, %v2755
      %v2757 = vrot.slane %v2659, 2
      %v2758 = vrot.slane %v2660, 2
      %v2759 = vsel %vm1639, %v2757, %v2758
      %v2760 = vrot.slane %v2661, 2
      %v2761 = vsel %vm1639, %v2758, %v2760
      %v2762 = vrot.slane %v2662, 2
      %v2763 = vrot.slane %v2663, 2
      %v2764 = vsel %vm1639, %v2762, %v2763
      %v2765 = vrot.slane %v2664, 2
      %v2766 = vsel %vm1639, %v2763, %v2765
      %v2767 = vrot.slane %v2665, 2
      %v2768 = vrot.slane %v2666, 2
      %v2769 = vsel %vm1639, %v2767, %v2768
      %v2770 = vrot.slane %v2667, 2
      %v2771 = vsel %vm1639, %v2768, %v2770
      %v2772 = vrot.slane %v2668, 2
      %v2773 = vrot.slane %v2669, 2
      %v2774 = vsel %vm1639, %v2772, %v2773
      %v2775 = vrot.slane %v2670, 2
      %v2776 = vsel %vm1639, %v2773, %v2775
      %v2777 = vrot.slane %v2671, 2
      %v2778 = vrot.slane %v2672, 2
      %v2779 = vsel %vm1639, %v2777, %v2778
      %v2780 = vrot.slane %v2673, 2
      %v2781 = vsel %vm1639, %v2778, %v2780
      %v2782 = vrot.slane %v2674, 2
      %v2783 = vrot.slane %v2675, 2
      %v2784 = vsel %vm1639, %v2782, %v2783
      %v2785 = vrot.slane %v2676, 2
      %v2786 = vsel %vm1639, %v2783, %v2785
      %v2787 = vrot.slane %v2677, 2
      %v2788 = vrot.slane %v2678, 2
      %v2789 = vsel %vm1639, %v2787, %v2788
      %v2790 = vrot.slane %v2679, 2
      %v2791 = vsel %vm1639, %v2788, %v2790
      %v2792 = vrot.slane %v2680, 2
      %v2793 = vrot.slane %v2681, 2
      %v2794 = vsel %vm1639, %v2792, %v2793
      %v2795 = vrot.slane %v2682, 2
      %v2796 = vsel %vm1639, %v2793, %v2795
      %v2797 = vrot.slane %v2683, 2
      %v2798 = vrot.slane %v2684, 2
      %v2799 = vsel %vm1639, %v2797, %v2798
      %v2800 = vrot.slane %v2685, 2
      %v2801 = vsel %vm1639, %v2798, %v2800
      %v2802 = vrot.slane %v2686, 2
      %v2803 = vrot.slane %v2687, 2
      %v2804 = vsel %vm1639, %v2802, %v2803
      %v2805 = vrot.slane %v2688, 2
      %v2806 = vsel %vm1639, %v2803, %v2805
      %v2807 = vrot.slane %v2689, 2
      %v2808 = vrot.slane %v2690, 2
      %v2809 = vsel %vm1639, %v2807, %v2808
      %v2810 = vrot.slane %v2691, 2
      %v2811 = vsel %vm1639, %v2808, %v2810
      %v2812 = vrot.slane %v2692, 2
      %v2813 = vrot.slane %v2693, 2
      %v2814 = vsel %vm1639, %v2812, %v2813
      %v2815 = vrot.slane %v2694, 2
      %v2816 = vsel %vm1639, %v2813, %v2815
      %v2817 = vrot.slane %v2695, 2
      %v2818 = vrot.slane %v2696, 2
      %v2819 = vsel %vm1639, %v2817, %v2818
      %v2820 = vrot.slane %v2697, 2
      %v2821 = vsel %vm1639, %v2818, %v2820
      %v2822 = vrot.slane %v2698, 2
      %v2823 = vrot.slane %v2699, 2
      %v2824 = vsel %vm1639, %v2822, %v2823
      %v2825 = vrot.slane %v2700, 2
      %v2826 = vsel %vm1639, %v2823, %v2825
      %v2827 = vrot.slane %v2701, 2
      %v2828 = vrot.slane %v2702, 2
      %v2829 = vsel %vm1639, %v2827, %v2828
      %v2830 = vrot.slane %v2703, 2
      %v2831 = vsel %vm1639, %v2828, %v2830
      %v2864 = vadd.f32 %v2620, %v2754
      %v2865 = vadd.f32 %v2621, %v2756
      %v2866 = vadd.f32 %v2622, %v2759
      %v2867 = vadd.f32 %v2623, %v2761
      %v2868 = vadd.f32 %v2624, %v2764
      %v2869 = vadd.f32 %v2625, %v2766
      %v2870 = vadd.f32 %v2626, %v2769
      %v2871 = vadd.f32 %v2627, %v2771
      %v2872 = vadd.f32 %v2628, %v2774
      %v2873 = vadd.f32 %v2629, %v2776
      %v2874 = vadd.f32 %v2630, %v2779
      %v2875 = vadd.f32 %v2631, %v2781
      %v2876 = vadd.f32 %v2632, %v2784
      %v2877 = vadd.f32 %v2633, %v2786
      %v2878 = vadd.f32 %v2634, %v2789
      %v2879 = vadd.f32 %v2635, %v2791
      %v2880 = vadd.f32 %v2636, %v2794
      %v2881 = vadd.f32 %v2637, %v2796
      %v2882 = vadd.f32 %v2638, %v2799
      %v2883 = vadd.f32 %v2639, %v2801
      %v2884 = vadd.f32 %v2640, %v2804
      %v2885 = vadd.f32 %v2641, %v2806
      %v2886 = vadd.f32 %v2642, %v2809
      %v2887 = vadd.f32 %v2643, %v2811
      %v2888 = vadd.f32 %v2644, %v2814
      %v2889 = vadd.f32 %v2645, %v2816
      %v2890 = vadd.f32 %v2646, %v2819
      %v2891 = vadd.f32 %v2647, %v2821
      %v2892 = vadd.f32 %v2648, %v2824
      %v2893 = vadd.f32 %v2649, %v2826
      %v2894 = vadd.f32 %v2650, %v2829
      %v2895 = vadd.f32 %v2651, %v2831
      %v2896 = vld [vmem:[%s5] sm:$0x1]
      %v2898 = vlaneseq
      %v2899 = vshrl.u32 %v2898, 7
      %v2900 = vsub.s32 0, %v2899
      %v2901 = vrot.slane %v2896, %v2900
      %v2903 = vmul.f32 %v2864, %v2901
      %v2904 = vmul.f32 %v2865, %v2901
      %v2905 = vmul.f32 %v2866, %v2901
      %v2906 = vmul.f32 %v2867, %v2901
      %v2907 = vmul.f32 %v2868, %v2901
      %v2908 = vmul.f32 %v2869, %v2901
      %v2909 = vmul.f32 %v2870, %v2901
      %v2910 = vmul.f32 %v2871, %v2901
      %v2911 = vmul.f32 %v2872, %v2901
      %v2912 = vmul.f32 %v2873, %v2901
      %v2913 = vmul.f32 %v2874, %v2901
      %v2914 = vmul.f32 %v2875, %v2901
      %v2915 = vmul.f32 %v2876, %v2901
      %v2916 = vmul.f32 %v2877, %v2901
      %v2917 = vmul.f32 %v2878, %v2901
      %v2918 = vmul.f32 %v2879, %v2901
      %v2919 = vmul.f32 %v2880, %v2901
      %v2920 = vmul.f32 %v2881, %v2901
      %v2921 = vmul.f32 %v2882, %v2901
      %v2922 = vmul.f32 %v2883, %v2901
      %v2923 = vmul.f32 %v2884, %v2901
      %v2924 = vmul.f32 %v2885, %v2901
      %v2925 = vmul.f32 %v2886, %v2901
      %v2926 = vmul.f32 %v2887, %v2901
      %v2927 = vmul.f32 %v2888, %v2901
      %v2928 = vmul.f32 %v2889, %v2901
      %v2929 = vmul.f32 %v2890, %v2901
      %v2930 = vmul.f32 %v2891, %v2901
      %v2931 = vmul.f32 %v2892, %v2901
      %v2932 = vmul.f32 %v2893, %v2901
      %v2933 = vmul.f32 %v2894, %v2901
      %v2934 = vmul.f32 %v2895, %v2901
      %v2935 = vld [vmem:[%s6] sm:$0x1]
      %v2937 = vlaneseq
      %v2938 = vshrl.u32 %v2937, 7
      %v2939 = vsub.s32 0, %v2938
      %v2940 = vrot.slane %v2935, %v2939
      %v2942 = vadd.f32 %v2903, %v2940
      %v2943 = vadd.f32 %v2904, %v2940
      %v2944 = vadd.f32 %v2905, %v2940
      %v2945 = vadd.f32 %v2906, %v2940
      %v2946 = vadd.f32 %v2907, %v2940
      %v2947 = vadd.f32 %v2908, %v2940
      %v2948 = vadd.f32 %v2909, %v2940
      %v2949 = vadd.f32 %v2910, %v2940
      %v2950 = vadd.f32 %v2911, %v2940
      %v2951 = vadd.f32 %v2912, %v2940
      %v2952 = vadd.f32 %v2913, %v2940
      %v2953 = vadd.f32 %v2914, %v2940
      %v2954 = vadd.f32 %v2915, %v2940
      %v2955 = vadd.f32 %v2916, %v2940
      %v2956 = vadd.f32 %v2917, %v2940
      %v2957 = vadd.f32 %v2918, %v2940
      %v2958 = vadd.f32 %v2919, %v2940
      %v2959 = vadd.f32 %v2920, %v2940
      %v2960 = vadd.f32 %v2921, %v2940
      %v2961 = vadd.f32 %v2922, %v2940
      %v2962 = vadd.f32 %v2923, %v2940
      %v2963 = vadd.f32 %v2924, %v2940
      %v2964 = vadd.f32 %v2925, %v2940
      %v2965 = vadd.f32 %v2926, %v2940
      %v2966 = vadd.f32 %v2927, %v2940
      %v2967 = vadd.f32 %v2928, %v2940
      %v2968 = vadd.f32 %v2929, %v2940
      %v2969 = vadd.f32 %v2930, %v2940
      %v2970 = vadd.f32 %v2931, %v2940
      %v2971 = vadd.f32 %v2932, %v2940
      %v2972 = vadd.f32 %v2933, %v2940
      %v2973 = vadd.f32 %v2934, %v2940
      %v2974 = vmax.f32 %v2942, 0.0
      %v2975 = vmax.f32 %v2943, 0.0
      %v2976 = vmax.f32 %v2944, 0.0
      %v2977 = vmax.f32 %v2945, 0.0
      %v2978 = vmax.f32 %v2946, 0.0
      %v2979 = vmax.f32 %v2947, 0.0
      %v2980 = vmax.f32 %v2948, 0.0
      %v2981 = vmax.f32 %v2949, 0.0
      %v2982 = vmax.f32 %v2950, 0.0
      %v2983 = vmax.f32 %v2951, 0.0
      %v2984 = vmax.f32 %v2952, 0.0
      %v2985 = vmax.f32 %v2953, 0.0
      %v2986 = vmax.f32 %v2954, 0.0
      %v2987 = vmax.f32 %v2955, 0.0
      %v2988 = vmax.f32 %v2956, 0.0
      %v2989 = vmax.f32 %v2957, 0.0
      %v2990 = vmax.f32 %v2958, 0.0
      %v2991 = vmax.f32 %v2959, 0.0
      %v2992 = vmax.f32 %v2960, 0.0
      %v2993 = vmax.f32 %v2961, 0.0
      %v2994 = vmax.f32 %v2962, 0.0
      %v2995 = vmax.f32 %v2963, 0.0
      %v2996 = vmax.f32 %v2964, 0.0
      %v2997 = vmax.f32 %v2965, 0.0
      %v2998 = vmax.f32 %v2966, 0.0
      %v2999 = vmax.f32 %v2967, 0.0
      %v3000 = vmax.f32 %v2968, 0.0
      %v3001 = vmax.f32 %v2969, 0.0
      %v3002 = vmax.f32 %v2970, 0.0
      %v3003 = vmax.f32 %v2971, 0.0
      %v3004 = vmax.f32 %v2972, 0.0
      %v3005 = vmax.f32 %v2973, 0.0
      %v3006 = vmin.f32 %v2974, 6.0
      %v3007 = vmin.f32 %v2975, 6.0
      %v3008 = vmin.f32 %v2976, 6.0
      %v3009 = vmin.f32 %v2977, 6.0
      %v3010 = vmin.f32 %v2978, 6.0
      %v3011 = vmin.f32 %v2979, 6.0
      %v3012 = vmin.f32 %v2980, 6.0
      %v3013 = vmin.f32 %v2981, 6.0
      %v3014 = vmin.f32 %v2982, 6.0
      %v3015 = vmin.f32 %v2983, 6.0
      %v3016 = vmin.f32 %v2984, 6.0
      %v3017 = vmin.f32 %v2985, 6.0
      %v3018 = vmin.f32 %v2986, 6.0
      %v3019 = vmin.f32 %v2987, 6.0
      %v3020 = vmin.f32 %v2988, 6.0
      %v3021 = vmin.f32 %v2989, 6.0
      %v3022 = vmin.f32 %v2990, 6.0
      %v3023 = vmin.f32 %v2991, 6.0
      %v3024 = vmin.f32 %v2992, 6.0
      %v3025 = vmin.f32 %v2993, 6.0
      %v3026 = vmin.f32 %v2994, 6.0
      %v3027 = vmin.f32 %v2995, 6.0
      %v3028 = vmin.f32 %v2996, 6.0
      %v3029 = vmin.f32 %v2997, 6.0
      %v3030 = vmin.f32 %v2998, 6.0
      %v3031 = vmin.f32 %v2999, 6.0
      %v3032 = vmin.f32 %v3000, 6.0
      %v3033 = vmin.f32 %v3001, 6.0
      %v3034 = vmin.f32 %v3002, 6.0
      %v3035 = vmin.f32 %v3003, 6.0
      %v3036 = vmin.f32 %v3004, 6.0
      %v3037 = vmin.f32 %v3005, 6.0
      %v3038 = vld [vmem:[%s7] sm:$0xff]
      %vm3039 = vcmask 64512
      %v3041 = vsel %vm3039, %v3006, 0
      %v3044 = vsel %vm3039, %v3007, 0
      %v3047 = vsel %vm3039, %v3008, 0
      %v3050 = vsel %vm3039, %v3009, 0
      %v3053 = vsel %vm3039, %v3010, 0
      %v3056 = vsel %vm3039, %v3011, 0
      %v3059 = vsel %vm3039, %v3012, 0
      %v3062 = vsel %vm3039, %v3013, 0
      %v3065 = vsel %vm3039, %v3014, 0
      %v3068 = vsel %vm3039, %v3015, 0
      %v3071 = vsel %vm3039, %v3016, 0
      %v3074 = vsel %vm3039, %v3017, 0
      %v3077 = vsel %vm3039, %v3018, 0
      %v3080 = vsel %vm3039, %v3019, 0
      %v3083 = vsel %vm3039, %v3020, 0
      %v3086 = vsel %vm3039, %v3021, 0
      %v3089 = vsel %vm3039, %v3022, 0
      %v3092 = vsel %vm3039, %v3023, 0
      %v3095 = vsel %vm3039, %v3024, 0
      %v3098 = vsel %vm3039, %v3025, 0
      %v3101 = vsel %vm3039, %v3026, 0
      %v3104 = vsel %vm3039, %v3027, 0
      %v3107 = vsel %vm3039, %v3028, 0
      %v3110 = vsel %vm3039, %v3029, 0
      %v3113 = vsel %vm3039, %v3030, 0
      %v3116 = vsel %vm3039, %v3031, 0
      %v3119 = vsel %vm3039, %v3032, 0
      %v3122 = vsel %vm3039, %v3033, 0
      %v3125 = vsel %vm3039, %v3034, 0
      %v3128 = vsel %vm3039, %v3035, 0
      %v3131 = vsel %vm3039, %v3036, 0
      %v3134 = vsel %vm3039, %v3037, 0
      %3136 = vmatprep.subr.mxu0 0.0
      %3137 = vmatpush1.msra.mxu0 %v3038
      %3138 = vmatprep.subr.mxu0 0.0
      %3139 = vmatpush1.msra.mxu0 0.0
      %3140 = vmatprep.subr.mxu0 0.0
      %3141 = vmatpush1.msra.mxu0 0.0
      %3142 = vmatprep.subr.mxu0 0.0
      %3143 = vmatpush1.msra.mxu0 0.0
      %3144 = vmatprep.subr.mxu0 0.0
      %3145 = vmatpush1.msra.mxu0 0.0
      %3146 = vmatprep.subr.mxu0 0.0
      %3147 = vmatpush1.msra.mxu0 0.0
      %3148 = vmatprep.subr.mxu0 0.0
      %3149 = vmatpush1.msra.mxu0 0.0
      %3150 = vmatprep.subr.mxu0 0.0
      %3151 = vmatpush1.msra.mxu0 0.0
      %3152 = vmatprep.subr.mxu0 0.0
      %3153 = vmatpush1.msra.mxu0 0.0
      %3154 = vmatprep.subr.mxu0 0.0
      %3155 = vmatpush1.msra.mxu0 0.0
      %3156 = vmatprep.subr.mxu0 0.0
      %3157 = vmatpush1.msra.mxu0 0.0
      %3158 = vmatprep.subr.mxu0 0.0
      %3159 = vmatpush1.msra.mxu0 0.0
      %3160 = vmatprep.subr.mxu0 0.0
      %3161 = vmatpush1.msra.mxu0 0.0
      %3162 = vmatprep.subr.mxu0 0.0
      %3163 = vmatpush1.msra.mxu0 0.0
      %3164 = vmatprep.subr.mxu0 0.0
      %3165 = vmatpush1.msra.mxu0 0.0
      %3166 = vmatprep.subr.mxu0 0.0
      %3167 = vmatpush1.msra.mxu0 0.0
      %3168 = vmatprep.subr.mxu0 0.0
      %3169 = vmatpush1.msra.mxu0 0.0
      %3170 = vmatprep.subr.mxu0 0.0
      %3171 = vmatpush1.msra.mxu0 0.0
      %3172 = vmatprep.subr.mxu0 0.0
      %3173 = vmatpush1.msra.mxu0 0.0
      %3174 = vmatprep.subr.mxu0 0.0
      %3175 = vmatpush1.msra.mxu0 0.0
      %3176 = vmatprep.subr.mxu0 0.0
      %3177 = vmatpush1.msra.mxu0 0.0
      %3178 = vmatprep.subr.mxu0 0.0
      %3179 = vmatpush1.msra.mxu0 0.0
      %3180 = vmatprep.subr.mxu0 0.0
      %3181 = vmatpush1.msra.mxu0 0.0
      %3182 = vmatprep.subr.mxu0 0.0
      %3183 = vmatpush1.msra.mxu0 0.0
      %3184 = vmatprep.subr.mxu0 0.0
      %3185 = vmatpush1.msra.mxu0 0.0
      %3186 = vmatprep.subr.mxu0 0.0
      %3187 = vmatpush1.msra.mxu0 0.0
      %3188 = vmatprep.subr.mxu0 0.0
      %3189 = vmatpush1.msra.mxu0 0.0
      %3190 = vmatprep.subr.mxu0 0.0
      %3191 = vmatpush1.msra.mxu0 0.0
      %3192 = vmatprep.subr.mxu0 0.0
      %3193 = vmatpush1.msra.mxu0 0.0
      %3194 = vmatprep.subr.mxu0 0.0
      %3195 = vmatpush1.msra.mxu0 0.0
      %3196 = vmatprep.subr.mxu0 0.0
      %3197 = vmatpush1.msra.mxu0 0.0
      %3198 = vmatprep.subr.mxu0 0.0
      %3199 = vmatpush1.msra.mxu0 0.0
      %3200 = vmatprep.mubr.f32.mxu0 0.0
      %3201 = vmatmul.mubr.f32.gmra.mrb[0].mxu0 %v3041
      %v3202 = vpop.f32.mrb[0].mxu0
      %v3203 = vadd.f32 0.0, %v3202
      %v3204 = vpop.f32.mrb[0].mxu0
      %3205 = vmatprep.mubr.f32.mxu0 0.0
      %3206 = vmatmul.mubr.f32.gmra.mrb[0].mxu0 %v3044
      %v3207 = vpop.f32.mrb[0].mxu0
      %v3208 = vadd.f32 0.0, %v3207
      %v3209 = vpop.f32.mrb[0].mxu0
      %3210 = vmatprep.mubr.f32.mxu0 0.0
      %3211 = vmatmul.mubr.f32.gmra.mrb[0].mxu0 %v3047
      %v3212 = vpop.f32.mrb[0].mxu0
      %v3213 = vadd.f32 0.0, %v3212
      %v3214 = vpop.f32.mrb[0].mxu0
      %3215 = vmatprep.mubr.f32.mxu0 0.0
      %3216 = vmatmul.mubr.f32.gmra.mrb[0].mxu0 %v3050
      %v3217 = vpop.f32.mrb[0].mxu0
      %v3218 = vadd.f32 0.0, %v3217
      %v3219 = vpop.f32.mrb[0].mxu0
      %3220 = vmatprep.mubr.f32.mxu0 0.0
      %3221 = vmatmul.mubr.f32.gmra.mrb[0].mxu0 %v3053
      %v3222 = vpop.f32.mrb[0].mxu0
      %v3223 = vadd.f32 0.0, %v3222
      %v3224 = vpop.f32.mrb[0].mxu0
      %3225 = vmatprep.mubr.f32.mxu0 0.0
      %3226 = vmatmul.mubr.f32.gmra.mrb[0].mxu0 %v3056
      %v3227 = vpop.f32.mrb[0].mxu0
      %v3228 = vadd.f32 0.0, %v3227
      %v3229 = vpop.f32.mrb[0].mxu0
      %3230 = vmatprep.mubr.f32.mxu0 0.0
      %3231 = vmatmul.mubr.f32.gmra.mrb[0].mxu0 %v3059
      %v3232 = vpop.f32.mrb[0].mxu0
      %v3233 = vadd.f32 0.0, %v3232
      %v3234 = vpop.f32.mrb[0].mxu0
      %3235 = vmatprep.mubr.f32.mxu0 0.0
      %3236 = vmatmul.mubr.f32.gmra.mrb[0].mxu0 %v3062
      %v3237 = vpop.f32.mrb[0].mxu0
      %v3238 = vadd.f32 0.0, %v3237
      %v3239 = vpop.f32.mrb[0].mxu0
      %3240 = vmatprep.mubr.f32.mxu0 0.0
      %3241 = vmatmul.mubr.f32.gmra.mrb[0].mxu0 %v3065
      %v3242 = vpop.f32.mrb[0].mxu0
      %v3243 = vadd.f32 0.0, %v3242
      %v3244 = vpop.f32.mrb[0].mxu0
      %3245 = vmatprep.mubr.f32.mxu0 0.0
      %3246 = vmatmul.mubr.f32.gmra.mrb[0].mxu0 %v3068
      %v3247 = vpop.f32.mrb[0].mxu0
      %v3248 = vadd.f32 0.0, %v3247
      %v3249 = vpop.f32.mrb[0].mxu0
      %3250 = vmatprep.mubr.f32.mxu0 0.0
      %3251 = vmatmul.mubr.f32.gmra.mrb[0].mxu0 %v3071
      %v3252 = vpop.f32.mrb[0].mxu0
      %v3253 = vadd.f32 0.0, %v3252
      %v3254 = vpop.f32.mrb[0].mxu0
      %3255 = vmatprep.mubr.f32.mxu0 0.0
      %3256 = vmatmul.mubr.f32.gmra.mrb[0].mxu0 %v3074
      %v3257 = vpop.f32.mrb[0].mxu0
      %v3258 = vadd.f32 0.0, %v3257
      %v3259 = vpop.f32.mrb[0].mxu0
      %3260 = vmatprep.mubr.f32.mxu0 0.0
      %3261 = vmatmul.mubr.f32.gmra.mrb[0].mxu0 %v3077
      %v3262 = vpop.f32.mrb[0].mxu0
      %v3263 = vadd.f32 0.0, %v3262
      %v3264 = vpop.f32.mrb[0].mxu0
      %3265 = vmatprep.mubr.f32.mxu0 0.0
      %3266 = vmatmul.mubr.f32.gmra.mrb[0].mxu0 %v3080
      %v3267 = vpop.f32.mrb[0].mxu0
      %v3268 = vadd.f32 0.0, %v3267
      %v3269 = vpop.f32.mrb[0].mxu0
      %3270 = vmatprep.mubr.f32.mxu0 0.0
      %3271 = vmatmul.mubr.f32.gmra.mrb[0].mxu0 %v3083
      %v3272 = vpop.f32.mrb[0].mxu0
      %v3273 = vadd.f32 0.0, %v3272
      %v3274 = vpop.f32.mrb[0].mxu0
      %3275 = vmatprep.mubr.f32.mxu0 0.0
      %3276 = vmatmul.mubr.f32.gmra.mrb[0].mxu0 %v3086
      %v3277 = vpop.f32.mrb[0].mxu0
      %v3278 = vadd.f32 0.0, %v3277
      %v3279 = vpop.f32.mrb[0].mxu0
      %3280 = vmatprep.mubr.f32.mxu0 0.0
      %3281 = vmatmul.mubr.f32.gmra.mrb[0].mxu0 %v3089
      %v3282 = vpop.f32.mrb[0].mxu0
      %v3283 = vadd.f32 0.0, %v3282
      %v3284 = vpop.f32.mrb[0].mxu0
      %3285 = vmatprep.mubr.f32.mxu0 0.0
      %3286 = vmatmul.mubr.f32.gmra.mrb[0].mxu0 %v3092
      %v3287 = vpop.f32.mrb[0].mxu0
      %v3288 = vadd.f32 0.0, %v3287
      %v3289 = vpop.f32.mrb[0].mxu0
      %3290 = vmatprep.mubr.f32.mxu0 0.0
      %3291 = vmatmul.mubr.f32.gmra.mrb[0].mxu0 %v3095
      %v3292 = vpop.f32.mrb[0].mxu0
      %v3293 = vadd.f32 0.0, %v3292
      %v3294 = vpop.f32.mrb[0].mxu0
      %3295 = vmatprep.mubr.f32.mxu0 0.0
      %3296 = vmatmul.mubr.f32.gmra.mrb[0].mxu0 %v3098
      %v3297 = vpop.f32.mrb[0].mxu0
      %v3298 = vadd.f32 0.0, %v3297
      %v3299 = vpop.f32.mrb[0].mxu0
      %3300 = vmatprep.mubr.f32.mxu0 0.0
      %3301 = vmatmul.mubr.f32.gmra.mrb[0].mxu0 %v3101
      %v3302 = vpop.f32.mrb[0].mxu0
      %v3303 = vadd.f32 0.0, %v3302
      %v3304 = vpop.f32.mrb[0].mxu0
      %3305 = vmatprep.mubr.f32.mxu0 0.0
      %3306 = vmatmul.mubr.f32.gmra.mrb[0].mxu0 %v3104
      %v3307 = vpop.f32.mrb[0].mxu0
      %v3308 = vadd.f32 0.0, %v3307
      %v3309 = vpop.f32.mrb[0].mxu0
      %3310 = vmatprep.mubr.f32.mxu0 0.0
      %3311 = vmatmul.mubr.f32.gmra.mrb[0].mxu0 %v3107
      %v3312 = vpop.f32.mrb[0].mxu0
      %v3313 = vadd.f32 0.0, %v3312
      %v3314 = vpop.f32.mrb[0].mxu0
      %3315 = vmatprep.mubr.f32.mxu0 0.0
      %3316 = vmatmul.mubr.f32.gmra.mrb[0].mxu0 %v3110
      %v3317 = vpop.f32.mrb[0].mxu0
      %v3318 = vadd.f32 0.0, %v3317
      %v3319 = vpop.f32.mrb[0].mxu0
      %3320 = vmatprep.mubr.f32.mxu0 0.0
      %3321 = vmatmul.mubr.f32.gmra.mrb[0].mxu0 %v3113
      %v3322 = vpop.f32.mrb[0].mxu0
      %v3323 = vadd.f32 0.0, %v3322
      %v3324 = vpop.f32.mrb[0].mxu0
      %3325 = vmatprep.mubr.f32.mxu0 0.0
      %3326 = vmatmul.mubr.f32.gmra.mrb[0].mxu0 %v3116
      %v3327 = vpop.f32.mrb[0].mxu0
      %v3328 = vadd.f32 0.0, %v3327
      %v3329 = vpop.f32.mrb[0].mxu0
      %3330 = vmatprep.mubr.f32.mxu0 0.0
      %3331 = vmatmul.mubr.f32.gmra.mrb[0].mxu0 %v3119
      %v3332 = vpop.f32.mrb[0].mxu0
      %v3333 = vadd.f32 0.0, %v3332
      %v3334 = vpop.f32.mrb[0].mxu0
      %3335 = vmatprep.mubr.f32.mxu0 0.0
      %3336 = vmatmul.mubr.f32.gmra.mrb[0].mxu0 %v3122
      %v3337 = vpop.f32.mrb[0].mxu0
      %v3338 = vadd.f32 0.0, %v3337
      %v3339 = vpop.f32.mrb[0].mxu0
      %3340 = vmatprep.mubr.f32.mxu0 0.0
      %3341 = vmatmul.mubr.f32.gmra.mrb[0].mxu0 %v3125
      %v3342 = vpop.f32.mrb[0].mxu0
      %v3343 = vadd.f32 0.0, %v3342
      %v3344 = vpop.f32.mrb[0].mxu0
      %3345 = vmatprep.mubr.f32.mxu0 0.0
      %3346 = vmatmul.mubr.f32.gmra.mrb[0].mxu0 %v3128
      %v3347 = vpop.f32.mrb[0].mxu0
      %v3348 = vadd.f32 0.0, %v3347
      %v3349 = vpop.f32.mrb[0].mxu0
      %3350 = vmatprep.mubr.f32.mxu0 0.0
      %3351 = vmatmul.mubr.f32.gmra.mrb[0].mxu0 %v3131
      %v3352 = vpop.f32.mrb[0].mxu0
      %v3353 = vadd.f32 0.0, %v3352
      %v3354 = vpop.f32.mrb[0].mxu0
      %3355 = vmatprep.mubr.f32.mxu0 0.0
      %3356 = vmatmul.mubr.f32.gmra.mrb[0].mxu0 %v3134
      %v3357 = vpop.f32.mrb[0].mxu0
      %v3358 = vadd.f32 0.0, %v3357
      %v3359 = vpop.f32.mrb[0].mxu0
      %3360 = vdwg.mxu0
      %v3361 = vld [vmem:[%s8] sm:$0x1]
      %v3363 = vlaneseq
      %v3364 = vshrl.u32 %v3363, 7
      %v3365 = vsub.s32 0, %v3364
      %v3366 = vrot.slane %v3361, %v3365
      %v3368 = vmul.f32 %v3203, %v3366
      %v3369 = vmul.f32 %v3208, %v3366
      %v3370 = vmul.f32 %v3213, %v3366
      %v3371 = vmul.f32 %v3218, %v3366
      %v3372 = vmul.f32 %v3223, %v3366
      %v3373 = vmul.f32 %v3228, %v3366
      %v3374 = vmul.f32 %v3233, %v3366
      %v3375 = vmul.f32 %v3238, %v3366
      %v3376 = vmul.f32 %v3243, %v3366
      %v3377 = vmul.f32 %v3248, %v3366
      %v3378 = vmul.f32 %v3253, %v3366
      %v3379 = vmul.f32 %v3258, %v3366
      %v3380 = vmul.f32 %v3263, %v3366
      %v3381 = vmul.f32 %v3268, %v3366
      %v3382 = vmul.f32 %v3273, %v3366
      %v3383 = vmul.f32 %v3278, %v3366
      %v3384 = vmul.f32 %v3283, %v3366
      %v3385 = vmul.f32 %v3288, %v3366
      %v3386 = vmul.f32 %v3293, %v3366
      %v3387 = vmul.f32 %v3298, %v3366
      %v3388 = vmul.f32 %v3303, %v3366
      %v3389 = vmul.f32 %v3308, %v3366
      %v3390 = vmul.f32 %v3313, %v3366
      %v3391 = vmul.f32 %v3318, %v3366
      %v3392 = vmul.f32 %v3323, %v3366
      %v3393 = vmul.f32 %v3328, %v3366
      %v3394 = vmul.f32 %v3333, %v3366
      %v3395 = vmul.f32 %v3338, %v3366
      %v3396 = vmul.f32 %v3343, %v3366
      %v3397 = vmul.f32 %v3348, %v3366
      %v3398 = vmul.f32 %v3353, %v3366
      %v3399 = vmul.f32 %v3358, %v3366
      %v3400 = vld [vmem:[%s9] sm:$0x1]
      %v3402 = vlaneseq
      %v3403 = vshrl.u32 %v3402, 7
      %v3404 = vsub.s32 0, %v3403
      %v3405 = vrot.slane %v3400, %v3404
      %v3407 = vadd.f32 %v3368, %v3405
      %v3408 = vadd.f32 %v3369, %v3405
      %v3409 = vadd.f32 %v3370, %v3405
      %v3410 = vadd.f32 %v3371, %v3405
      %v3411 = vadd.f32 %v3372, %v3405
      %v3412 = vadd.f32 %v3373, %v3405
      %v3413 = vadd.f32 %v3374, %v3405
      %v3414 = vadd.f32 %v3375, %v3405
      %v3415 = vadd.f32 %v3376, %v3405
      %v3416 = vadd.f32 %v3377, %v3405
      %v3417 = vadd.f32 %v3378, %v3405
      %v3418 = vadd.f32 %v3379, %v3405
      %v3419 = vadd.f32 %v3380, %v3405
      %v3420 = vadd.f32 %v3381, %v3405
      %v3421 = vadd.f32 %v3382, %v3405
      %v3422 = vadd.f32 %v3383, %v3405
      %v3423 = vadd.f32 %v3384, %v3405
      %v3424 = vadd.f32 %v3385, %v3405
      %v3425 = vadd.f32 %v3386, %v3405
      %v3426 = vadd.f32 %v3387, %v3405
      %v3427 = vadd.f32 %v3388, %v3405
      %v3428 = vadd.f32 %v3389, %v3405
      %v3429 = vadd.f32 %v3390, %v3405
      %v3430 = vadd.f32 %v3391, %v3405
      %v3431 = vadd.f32 %v3392, %v3405
      %v3432 = vadd.f32 %v3393, %v3405
      %v3433 = vadd.f32 %v3394, %v3405
      %v3434 = vadd.f32 %v3395, %v3405
      %v3435 = vadd.f32 %v3396, %v3405
      %v3436 = vadd.f32 %v3397, %v3405
      %v3437 = vadd.f32 %v3398, %v3405
      %v3438 = vadd.f32 %v3399, %v3405
      %v3439 = vrot.slane %v363, 1
      %v3440 = vrot.slane %v364, 1
      %v3441 = vsel %vm1394, %v3439, %v3440
      %v3442 = vrot.slane %v365, 1
      %v3443 = vsel %vm1394, %v3440, %v3442
      %v3444 = vrot.slane %v366, 1
      %v3445 = vrot.slane %v367, 1
      %v3446 = vsel %vm1394, %v3444, %v3445
      %v3447 = vrot.slane %v368, 1
      %v3448 = vsel %vm1394, %v3445, %v3447
      %v3449 = vrot.slane %v369, 1
      %v3450 = vrot.slane %v370, 1
      %v3451 = vsel %vm1394, %v3449, %v3450
      %v3452 = vrot.slane %v371, 1
      %v3453 = vsel %vm1394, %v3450, %v3452
      %v3454 = vrot.slane %v372, 1
      %v3455 = vrot.slane %v373, 1
      %v3456 = vsel %vm1394, %v3454, %v3455
      %v3457 = vrot.slane %v374, 1
      %v3458 = vsel %vm1394, %v3455, %v3457
      %v3459 = vrot.slane %v375, 1
      %v3460 = vrot.slane %v376, 1
      %v3461 = vsel %vm1394, %v3459, %v3460
      %v3462 = vrot.slane %v377, 1
      %v3463 = vsel %vm1394, %v3460, %v3462
      %v3464 = vrot.slane %v378, 1
      %v3465 = vrot.slane %v379, 1
      %v3466 = vsel %vm1394, %v3464, %v3465
      %v3467 = vrot.slane %v380, 1
      %v3468 = vsel %vm1394, %v3465, %v3467
      %v3469 = vrot.slane %v381, 1
      %v3470 = vrot.slane %v382, 1
      %v3471 = vsel %vm1394, %v3469, %v3470
      %v3472 = vrot.slane %v383, 1
      %v3473 = vsel %vm1394, %v3470, %v3472
      %v3474 = vrot.slane %v384, 1
      %v3475 = vrot.slane %v385, 1
      %v3476 = vsel %vm1394, %v3474, %v3475
      %v3477 = vrot.slane %v386, 1
      %v3478 = vsel %vm1394, %v3475, %v3477
      %v3479 = vrot.slane %v387, 1
      %v3480 = vrot.slane %v388, 1
      %v3481 = vsel %vm1394, %v3479, %v3480
      %v3482 = vrot.slane %v389, 1
      %v3483 = vsel %vm1394, %v3480, %v3482
      %v3484 = vrot.slane %v390, 1
      %v3485 = vrot.slane %v391, 1
      %v3486 = vsel %vm1394, %v3484, %v3485
      %v3487 = vrot.slane %v392, 1
      %v3488 = vsel %vm1394, %v3485, %v3487
      %v3489 = vrot.slane %v393, 1
      %v3490 = vrot.slane %v394, 1
      %v3491 = vsel %vm1394, %v3489, %v3490
      %v3492 = vrot.slane %v395, 1
      %v3493 = vsel %vm1394, %v3490, %v3492
      %v3494 = vrot.slane %v396, 1
      %v3495 = vrot.slane %v397, 1
      %v3496 = vsel %vm1394, %v3494, %v3495
      %v3497 = vrot.slane %v398, 1
      %v3498 = vsel %vm1394, %v3495, %v3497
      %v3499 = vrot.slane %v399, 1
      %v3500 = vrot.slane %v400, 1
      %v3501 = vsel %vm1394, %v3499, %v3500
      %v3502 = vrot.slane %v401, 1
      %v3503 = vsel %vm1394, %v3500, %v3502
      %v3504 = vrot.slane %v402, 1
      %v3505 = vrot.slane %v403, 1
      %v3506 = vsel %vm1394, %v3504, %v3505
      %v3507 = vrot.slane %v404, 1
      %v3508 = vsel %vm1394, %v3505, %v3507
      %v3509 = vrot.slane %v405, 1
      %v3510 = vrot.slane %v406, 1
      %v3511 = vsel %vm1394, %v3509, %v3510
      %v3512 = vrot.slane %v407, 1
      %v3513 = vsel %vm1394, %v3510, %v3512
      %v3514 = vrot.slane %v408, 1
      %v3515 = vrot.slane %v409, 1
      %v3516 = vsel %vm1394, %v3514, %v3515
      %v3517 = vrot.slane %v410, 1
      %v3518 = vsel %vm1394, %v3515, %v3517
      %v3551 = vadd.f32 %v3407, %v3441
      %v3552 = vadd.f32 %v3408, %v3443
      %v3553 = vadd.f32 %v3409, %v3446
      %v3554 = vadd.f32 %v3410, %v3448
      %v3555 = vadd.f32 %v3411, %v3451
      %v3556 = vadd.f32 %v3412, %v3453
      %v3557 = vadd.f32 %v3413, %v3456
      %v3558 = vadd.f32 %v3414, %v3458
      %v3559 = vadd.f32 %v3415, %v3461
      %v3560 = vadd.f32 %v3416, %v3463
      %v3561 = vadd.f32 %v3417, %v3466
      %v3562 = vadd.f32 %v3418, %v3468
      %v3563 = vadd.f32 %v3419, %v3471
      %v3564 = vadd.f32 %v3420, %v3473
      %v3565 = vadd.f32 %v3421, %v3476
      %v3566 = vadd.f32 %v3422, %v3478
      %v3567 = vadd.f32 %v3423, %v3481
      %v3568 = vadd.f32 %v3424, %v3483
      %v3569 = vadd.f32 %v3425, %v3486
      %v3570 = vadd.f32 %v3426, %v3488
      %v3571 = vadd.f32 %v3427, %v3491
      %v3572 = vadd.f32 %v3428, %v3493
      %v3573 = vadd.f32 %v3429, %v3496
      %v3574 = vadd.f32 %v3430, %v3498
      %v3575 = vadd.f32 %v3431, %v3501
      %v3576 = vadd.f32 %v3432, %v3503
      %v3577 = vadd.f32 %v3433, %v3506
      %v3578 = vadd.f32 %v3434, %v3508
      %v3579 = vadd.f32 %v3435, %v3511
      %v3580 = vadd.f32 %v3436, %v3513
      %v3581 = vadd.f32 %v3437, %v3516
      %v3582 = vadd.f32 %v3438, %v3518
      %3583 = vst.msk [vmem:[%s359] sm:$0xff] %vm415, %v3551
      %3584 = vst.msk [vmem:[%s359 + $0x8] sm:$0xff] %vm415, %v3552
      %3585 = vst.msk [vmem:[%s359 + $0x10] sm:$0xff] %vm415, %v3553
      %3586 = vst.msk [vmem:[%s359 + $0x18] sm:$0xff] %vm415, %v3554
      %3587 = vst.msk [vmem:[%s359 + $0x20] sm:$0xff] %vm415, %v3555
      %3588 = vst.msk [vmem:[%s359 + $0x28] sm:$0xff] %vm415, %v3556
      %3589 = vst.msk [vmem:[%s359 + $0x30] sm:$0xff] %vm415, %v3557
      %3590 = vst.msk [vmem:[%s359 + $0x38] sm:$0xff] %vm415, %v3558
      %3591 = vst.msk [vmem:[%s359 + $0x40] sm:$0xff] %vm415, %v3559
      %3592 = vst.msk [vmem:[%s359 + $0x48] sm:$0xff] %vm415, %v3560
      %3593 = vst.msk [vmem:[%s359 + $0x50] sm:$0xff] %vm415, %v3561
      %3594 = vst.msk [vmem:[%s359 + $0x58] sm:$0xff] %vm415, %v3562
      %3595 = vst.msk [vmem:[%s359 + $0x60] sm:$0xff] %vm415, %v3563
      %3596 = vst.msk [vmem:[%s359 + $0x68] sm:$0xff] %vm415, %v3564
      %3597 = vst.msk [vmem:[%s359 + $0x70] sm:$0xff] %vm415, %v3565
      %3598 = vst.msk [vmem:[%s359 + $0x78] sm:$0xff] %vm415, %v3566
      %3599 = vst.msk [vmem:[%s359 + $0x80] sm:$0xff] %vm415, %v3567
      %3600 = vst.msk [vmem:[%s359 + $0x88] sm:$0xff] %vm415, %v3568
      %3601 = vst.msk [vmem:[%s359 + $0x90] sm:$0xff] %vm415, %v3569
      %3602 = vst.msk [vmem:[%s359 + $0x98] sm:$0xff] %vm415, %v3570
      %3603 = vst.msk [vmem:[%s359 + $0xa0] sm:$0xff] %vm415, %v3571
      %3604 = vst.msk [vmem:[%s359 + $0xa8] sm:$0xff] %vm415, %v3572
      %3605 = vst.msk [vmem:[%s359 + $0xb0] sm:$0xff] %vm415, %v3573
      %3606 = vst.msk [vmem:[%s359 + $0xb8] sm:$0xff] %vm415, %v3574
      %3607 = vst.msk [vmem:[%s359 + $0xc0] sm:$0xff] %vm415, %v3575
      %3608 = vst.msk [vmem:[%s359 + $0xc8] sm:$0xff] %vm415, %v3576
      %3609 = vst.msk [vmem:[%s359 + $0xd0] sm:$0xff] %vm415, %v3577
      %3610 = vst.msk [vmem:[%s359 + $0xd8] sm:$0xff] %vm415, %v3578
      %3611 = vst.msk [vmem:[%s359 + $0xe0] sm:$0xff] %vm415, %v3579
      %3612 = vst.msk [vmem:[%s359 + $0xe8] sm:$0xff] %vm415, %v3580
      %3613 = vst.msk [vmem:[%s359 + $0xf0] sm:$0xff] %vm415, %v3581
      %3614 = vst.msk [vmem:[%s359 + $0xf8] sm:$0xff] %vm415, %v3582
      %p3615 = scmp.lt.s32.totalorder %s21, 1
      %s3616 = scalar_select %p3615, %s21, 1
      %s3617 = smul.addr %s3616, 32
      %s3618 = smul.addr %s3617, 8
      %s3619 = scalar_lea.vmem %s10, %s3618
      // Predicated region
      $region61: #{tpu_custom_call.1} parent=59 // pred_check
        %p3620 = pneg %p254
      $region62: #{tpu_custom_call.1} parent=59 // pred_check_branch
        %3622 = sbr.rel (%p3620) target = $region64
      $region63: #{tpu_custom_call.1} parent=59 // pred_region
        _
      $region64: #{tpu_custom_call.1} parent=59 // pred_fallthru
        _
    $region60: #{tpu_custom_call.1} parent=5 // pred_fallthru
      _
    %p3623 = scmp.le.s32.totalorder 2, %s16
    // Predicated region
    $region65: #{tpu_custom_call.1} parent=5 // pred_check
      %p3624 = pneg %p3623
    $region66: #{tpu_custom_call.1} parent=5 // pred_check_branch
      %3626 = sbr.rel (%p3624) target = $region68
    $region67: #{tpu_custom_call.1} parent=5 // pred_region
      %s3627 = ssub.s32 %s16, 2
      // Predicated region
      $region69: #{tpu_custom_call.1} parent=67 // pred_check
        %p3628 = pneg %p260
      $region70: #{tpu_custom_call.1} parent=67 // pred_check_branch
        %3630 = sbr.rel (%p3628) target = $region72
      $region71: #{tpu_custom_call.1} parent=67 // pred_region
        %p3631 = scmp.lt.s32.totalorder %s22, 1
        %s3632 = scalar_select %p3631, %s22, 1
        %s3633 = smul.addr %s3632, 32
        %s3634 = smul.addr %s3633, 8
        %s3635 = scalar_lea.vmem %s10, %s3634
      $region72: #{tpu_custom_call.1} parent=67 // pred_fallthru
        _
    $region68: #{tpu_custom_call.1} parent=5 // pred_fallthru
      _
  $region6: #{tpu_custom_call.1} parent=0 // loop_footer
    %s20 = sadd.s32 1, %s16
  $region7: #{tpu_custom_call.1} parent=0 // loop_footer_branch
    %15 = sbr.rel target = $region3
  $region8: #{tpu_custom_call.1} parent=0 // loop_exit
    _

</llo_original>
